<compile_context>
chip_gen: v6e
topology: v6e:2x2x1
jax: 0.10.0
libtpu: 0.0.40
codegen_flags: <defaults>
</compile_context>

<pallas_src>
import math

import jax
import jax.numpy as jnp
from jax import lax
from jax.experimental import pallas as pl
from jax.experimental.pallas import tpu as pltpu


# ------------------------------ helpers ------------------------------------ #

def _round_up(x: int, m: int) -> int:
    return ((x + m - 1) // m) * m


def _pick_row_tile(R: int, max_shift: int, C: int, K_pad: int, O_pad: int) -> int:
    """Row-tile size: as large as useful, multiple of 16 (bf16 sublane packing),
    strictly larger than the halo shift (in-kernel slicing assumes s < tm),
    >= 2 tiles when R allows (v7x megacore), worst-case VMEM ~<= 22 MiB."""
    lo = _round_up(max(max_shift + 1, 16), 16)
    tm = max(lo, min(1024, _round_up(max((R + 1) // 2, 16), 16)))

    hh = _round_up(max(max_shift, 8), 8)

    def vmem_bytes(t: int) -> int:
        return (2 * t * C * 2            # x row tile   (double-buffered, bf16)
                + 2 * hh * C * 2         # halo tile    (double-buffered, bf16)
                + 2 * K_pad * O_pad * 2  # resident weights (2 slots, bf16)
                + 2 * t * O_pad * 4      # output tile  (double-buffered, f32)
                + t * K_pad * 2)         # in-VMEM im2col scratch (bf16)

    while tm // 2 >= max(lo, 64) and vmem_bytes(tm) > 22 * 2**20:
        tm //= 2
    return max(lo, _round_up(tm, 16))


# --------------------------- Pallas fused conv ------------------------------ #

def _fused_conv_rows(x_rows, halo, w2d, bias_row, *, k, W, C, K, tm, Hh, n_tiles):
    """y_rows[m, o] = sum_{ki,kj,c} x_rows[m + ki*W + kj, c] * w2d[(ki*k+kj)*C + c, o] + b[o]."""
    K_pad, O_pad = w2d.shape
    Mp = n_tiles * tm
    k2 = k * k

    def kernel(x_ref, halo_ref, w_ref, b_ref, o_ref, xcol_ref):
        # Assemble the im2col tile in VMEM: column block kk holds the x rows shifted
        # by s = ki*W + kj, split across the current row tile and its halo.
        if K_pad > K:  # zero the padded contraction columns (scratch is uninitialized)
            xcol_ref[:, K:] = jnp.zeros((tm, K_pad - K), dtype=xcol_ref.dtype)
        for kk in range(k2):                       # static unroll, k2 is small
            s = (kk // k) * W + (kk % k)
            if s == 0:
                xcol_ref[:, 0:C] = x_ref[...]
            else:
                xcol_ref[0:tm - s, kk * C:(kk + 1) * C] = x_ref[s:, :]
                xcol_ref[tm - s:tm, kk * C:(kk + 1) * C] = halo_ref[0, :s, :]
        # One MXU pass over the whole contraction; bias fused into the epilogue.
        o_ref[...] = (jnp.dot(xcol_ref[...], w_ref[...],
                              preferred_element_type=jnp.float32)
                      + b_ref[...])

    cost = pl.CostEstimate(
        flops=2 * Mp * K_pad * O_pad,
        transcendentals=0,
        bytes_accessed=(x_rows.size * 2 + halo.size * 2 + w2d.size * 2
                        + bias_row.size * 4 + Mp * O_pad * 4))

    return pl.pallas_call(
        kernel,
        out_shape=jax.ShapeDtypeStruct((Mp, O_pad), jnp.float32),
        grid_spec=pltpu.PrefetchScalarGridSpec(
            num_scalar_prefetch=0,
            grid=(n_tiles,),
            in_specs=[
                pl.BlockSpec((tm, C), lambda i: (i, 0)),         # x rows (read once)
                pl.BlockSpec((1, Hh, C), lambda i: (i, 0, 0)),   # halo rows per tile
                pl.BlockSpec((K_pad, O_pad), lambda i: (0, 0)),  # weights, VMEM-resident
                pl.BlockSpec((1, O_pad), lambda i: (0, 0)),      # bias, VMEM-resident
            ],
            out_specs=pl.BlockSpec((tm, O_pad), lambda i: (i, 0)),
            scratch_shapes=[pltpu.VMEM((tm, K_pad), jnp.bfloat16)],
        ),
        compiler_params=pltpu.CompilerParams(
            dimension_semantics=("parallel",),   # row tiles shard across v7x's 2 TCs
            vmem_limit_bytes=32 * 1024 * 1024,
        ),
        cost_estimate=cost,
    )(x_rows, halo, w2d, bias_row)


# ------------------------------ glue (JAX) ---------------------------------- #

def conv_lora_forward(x, conv_weight, conv_bias, lora_A, lora_B, scaling):
    """ConvLoRA.forward for r > 0, not merged (stride 1, padding 0, groups 1)."""
    O, C, k, _ = conv_weight.shape
    N, _, H, W = x.shape
    OH, OW = H - k + 1, W - k + 1

    # LoRA merge (micro-matmul) in plain XLA, fused into the weight preparation.
    w_eff = conv_weight + (lora_B @ lora_A).reshape(conv_weight.shape) * scaling

    # (O, C, k, k) -> (K, O) with rows ordered (ki, kj, c) to match the in-kernel
    # im2col column order.  Pad K/O to 128 multiples (aligned MXU, lane-dense stores);
    # weights are tiny so this padding costs nothing in HBM traffic.
    K = k * k * C
    K_pad, O_pad = _round_up(K, 128), _round_up(O, 128)
    w2d = w_eff.transpose(2, 3, 1, 0).reshape(K, O).astype(jnp.bfloat16)
    w2d = jnp.pad(w2d, ((0, K_pad - K), (0, O_pad - O)))
    bias_row = jnp.pad(conv_bias.astype(jnp.float32), (0, O_pad - O)).reshape(1, O_pad)

    # x as flattened, *uncropped* NHWC rows; each kernel offset (ki, kj) is then a
    # uniform shift of ki*W + kj rows.  Invalid border rows are cropped afterwards.
    R = N * H * W
    max_shift = (k - 1) * W + (k - 1)
    tm = _pick_row_tile(R, max_shift, C, K_pad, O_pad)
    Mp = _round_up(R, tm)
    n_tiles = Mp // tm
    Hh = _round_up(max(max_shift, 8), 8)

    rows_total = _round_up(Mp + Hh, tm)
    x_rows = x.astype(jnp.bfloat16).transpose(0, 2, 3, 1).reshape(R, C)
    x_rows = jnp.pad(x_rows, ((0, rows_total - R), (0, 0)))
    # Per-tile halo = the Hh rows following each tile (tiny gather, ~Hh/tm of |x|).
    halo_idx = (jnp.arange(n_tiles)[:, None] + 1) * tm + jnp.arange(Hh)[None, :]
    halo = x_rows[halo_idx]                                    # (n_tiles, Hh, C) bf16

    out = _fused_conv_rows(x_rows, halo, w2d, bias_row,
                           k=k, W=W, C=C, K=K, tm=tm, Hh=Hh, n_tiles=n_tiles)

    # Drop row/O padding, crop invalid border rows, back to NCHW (module contract).
    out = out[:R, :O].reshape(N, H, W, O)[:, :OH, :OW, :].transpose(0, 3, 1, 2)
    return out


# --------------------------------- Demo ------------------------------------- #

if __name__ == "__main__":
    # Module config (Conv2d: groups=1, stride=1, padding=0, bias=True)
    N, C, H, W = 2, 4, 16, 16
    O, k = 8, 3
    r, lora_alpha = 4, 8
    scaling = lora_alpha / r

    key = jax.random.PRNGKey(0)
    k1, k2, k3, k4, k5 = jax.random.split(key, 5)

    # Deterministic synthetic parameters (shapes from ConvLoRA.__init__).
    fan_in = C * k * k
    bound = 1.0 / math.sqrt(fan_in)
    conv_weight = jax.random.uniform(k1, (O, C, k, k), jnp.float32, -bound, bound)
    conv_bias = jax.random.uniform(k2, (O,), jnp.float32, -bound, bound)
    lora_A = jax.random.uniform(k3, (r * k, C * k), jnp.float32, -1.0, 1.0)
    # reset_parameters() zeros lora_B; use small nonzero values so the LoRA branch
    # is numerically exercised by the kernel.
    lora_B = 0.1 * jax.random.normal(k4, (O * k, r * k), jnp.float32)

    x = jax.random.normal(k5, (N, C, H, W), jnp.float32)

    fwd = jax.jit(conv_lora_forward)
    y = jax.block_until_ready(fwd(x, conv_weight, conv_bias, lora_A, lora_B, scaling))

    # Reference: XLA conv with the same bf16-rounded operands, f32 accumulation.
    delta = (lora_B @ lora_A).reshape(conv_weight.shape) * scaling
    w_eff_bf = (conv_weight + delta).astype(jnp.bfloat16).astype(jnp.float32)
    x_bf = x.astype(jnp.bfloat16).astype(jnp.float32)
    y_ref = lax.conv_general_dilated(
        x_bf, w_eff_bf, window_strides=(1, 1), padding="VALID",
        dimension_numbers=("NCHW", "OIHW", "NCHW"),
        precision=lax.Precision.HIGHEST,
    ) + conv_bias.reshape(1, O, 1, 1)

    assert y.shape == (N, O, H - k + 1, W - k + 1)
    assert jnp.allclose(y, y_ref, atol=2e-3, rtol=2e-3), \
        float(jnp.max(jnp.abs(y - y_ref)))
    print("KERNEL_OK")
</pallas_src>

<mosaic_0001>
module attributes {stable_mosaic.version = 11 : i64} {
  func.func @kernel(%arg0: i32, %arg1: memref<256x4xbf16, #tpu.memory_space<vmem>>, %arg2: memref<1x40x4xbf16, #tpu.memory_space<vmem>>, %arg3: memref<128x128xbf16, #tpu.memory_space<vmem>>, %arg4: memref<1x128xf32, #tpu.memory_space<vmem>>, %arg5: memref<256x128xf32, #tpu.memory_space<vmem>>, %arg6: memref<256x128xbf16, #tpu.memory_space<vmem>>) attributes {dimension_semantics = [#tpu.dimension_semantics<parallel>], iteration_bounds = array<i64: 2>, scalar_prefetch = 0 : i64, scratch_operands = 1 : i64, tpu.core_type = #tpu.core_type<tc>, window_params = [{transform_indices = @transform_0, window_bounds = array<i64: 256, 4>}, {transform_indices = @transform_1, window_bounds = array<i64: 1, 40, 4>}, {pipeline_mode = #tpu.pipeline_mode<synchronous>, transform_indices = @transform_2, window_bounds = array<i64: 128, 128>}, {pipeline_mode = #tpu.pipeline_mode<synchronous>, transform_indices = @transform_3, window_bounds = array<i64: 1, 128>}, {transform_indices = @transform_4, window_bounds = array<i64: 256, 128>}]} {
    %cst = arith.constant 0.000000e+00 : bf16
    %0 = vector.broadcast %cst : bf16 to vector<256x92xbf16>
    %c0 = arith.constant 0 : index
    %c36 = arith.constant 36 : index
    %1 = vector.load %arg6[%c0, %c36] : memref<256x128xbf16, #tpu.memory_space<vmem>>, vector<256x92xbf16>
    tpu.vector_store %arg6[%c0, %c36], %0 {strides = array<i32>} : memref<256x128xbf16, #tpu.memory_space<vmem>>, vector<256x92xbf16>,
    %c0_0 = arith.constant 0 : index
    %c0_1 = arith.constant 0 : index
    %2 = vector.load %arg1[%c0_0, %c0_1] : memref<256x4xbf16, #tpu.memory_space<vmem>>, vector<256x4xbf16>
    %c0_2 = arith.constant 0 : index
    %c0_3 = arith.constant 0 : index
    %3 = vector.load %arg6[%c0_2, %c0_3] : memref<256x128xbf16, #tpu.memory_space<vmem>>, vector<256x4xbf16>
    tpu.vector_store %arg6[%c0_2, %c0_3], %2 {strides = array<i32>} : memref<256x128xbf16, #tpu.memory_space<vmem>>, vector<256x4xbf16>,
    %c1 = arith.constant 1 : index
    %c0_4 = arith.constant 0 : index
    %4 = vector.load %arg1[%c1, %c0_4] : memref<256x4xbf16, #tpu.memory_space<vmem>>, vector<255x4xbf16>
    %c0_5 = arith.constant 0 : index
    %c4 = arith.constant 4 : index
    %5 = vector.load %arg6[%c0_5, %c4] : memref<256x128xbf16, #tpu.memory_space<vmem>>, vector<255x4xbf16>
    tpu.vector_store %arg6[%c0_5, %c4], %4 {strides = array<i32>} : memref<256x128xbf16, #tpu.memory_space<vmem>>, vector<255x4xbf16>,
    %c0_6 = arith.constant 0 : index
    %c0_7 = arith.constant 0 : index
    %c0_8 = arith.constant 0 : index
    %6 = vector.load %arg2[%c0_6, %c0_7, %c0_8] : memref<1x40x4xbf16, #tpu.memory_space<vmem>>, vector<1x1x4xbf16>
    %7 = vector.shape_cast %6 : vector<1x1x4xbf16> to vector<1x4xbf16>
    %c255 = arith.constant 255 : index
    %c4_9 = arith.constant 4 : index
    %8 = vector.load %arg6[%c255, %c4_9] : memref<256x128xbf16, #tpu.memory_space<vmem>>, vector<1x4xbf16>
    tpu.vector_store %arg6[%c255, %c4_9], %7 {strides = array<i32>} : memref<256x128xbf16, #tpu.memory_space<vmem>>, vector<1x4xbf16>,
    %c2 = arith.constant 2 : index
    %c0_10 = arith.constant 0 : index
    %9 = vector.load %arg1[%c2, %c0_10] : memref<256x4xbf16, #tpu.memory_space<vmem>>, vector<254x4xbf16>
    %c0_11 = arith.constant 0 : index
    %c8 = arith.constant 8 : index
    %10 = vector.load %arg6[%c0_11, %c8] : memref<256x128xbf16, #tpu.memory_space<vmem>>, vector<254x4xbf16>
    tpu.vector_store %arg6[%c0_11, %c8], %9 {strides = array<i32>} : memref<256x128xbf16, #tpu.memory_space<vmem>>, vector<254x4xbf16>,
    %c0_12 = arith.constant 0 : index
    %c0_13 = arith.constant 0 : index
    %c0_14 = arith.constant 0 : index
    %11 = vector.load %arg2[%c0_12, %c0_13, %c0_14] : memref<1x40x4xbf16, #tpu.memory_space<vmem>>, vector<1x2x4xbf16>
    %12 = vector.shape_cast %11 : vector<1x2x4xbf16> to vector<2x4xbf16>
    %c254 = arith.constant 254 : index
    %c8_15 = arith.constant 8 : index
    %13 = vector.load %arg6[%c254, %c8_15] : memref<256x128xbf16, #tpu.memory_space<vmem>>, vector<2x4xbf16>
    tpu.vector_store %arg6[%c254, %c8_15], %12 {strides = array<i32>} : memref<256x128xbf16, #tpu.memory_space<vmem>>, vector<2x4xbf16>,
    %c16 = arith.constant 16 : index
    %c0_16 = arith.constant 0 : index
    %14 = vector.load %arg1[%c16, %c0_16] : memref<256x4xbf16, #tpu.memory_space<vmem>>, vector<240x4xbf16>
    %c0_17 = arith.constant 0 : index
    %c12 = arith.constant 12 : index
    %15 = vector.load %arg6[%c0_17, %c12] : memref<256x128xbf16, #tpu.memory_space<vmem>>, vector<240x4xbf16>
    tpu.vector_store %arg6[%c0_17, %c12], %14 {strides = array<i32>} : memref<256x128xbf16, #tpu.memory_space<vmem>>, vector<240x4xbf16>,
    %c0_18 = arith.constant 0 : index
    %c0_19 = arith.constant 0 : index
    %c0_20 = arith.constant 0 : index
    %16 = vector.load %arg2[%c0_18, %c0_19, %c0_20] : memref<1x40x4xbf16, #tpu.memory_space<vmem>>, vector<1x16x4xbf16>
    %17 = vector.shape_cast %16 : vector<1x16x4xbf16> to vector<16x4xbf16>
    %c240 = arith.constant 240 : index
    %c12_21 = arith.constant 12 : index
    %18 = vector.load %arg6[%c240, %c12_21] : memref<256x128xbf16, #tpu.memory_space<vmem>>, vector<16x4xbf16>
    tpu.vector_store %arg6[%c240, %c12_21], %17 {strides = array<i32>} : memref<256x128xbf16, #tpu.memory_space<vmem>>, vector<16x4xbf16>,
    %c17 = arith.constant 17 : index
    %c0_22 = arith.constant 0 : index
    %19 = vector.load %arg1[%c17, %c0_22] : memref<256x4xbf16, #tpu.memory_space<vmem>>, vector<239x4xbf16>
    %c0_23 = arith.constant 0 : index
    %c16_24 = arith.constant 16 : index
    %20 = vector.load %arg6[%c0_23, %c16_24] : memref<256x128xbf16, #tpu.memory_space<vmem>>, vector<239x4xbf16>
    tpu.vector_store %arg6[%c0_23, %c16_24], %19 {strides = array<i32>} : memref<256x128xbf16, #tpu.memory_space<vmem>>, vector<239x4xbf16>,
    %c0_25 = arith.constant 0 : index
    %c0_26 = arith.constant 0 : index
    %c0_27 = arith.constant 0 : index
    %21 = vector.load %arg2[%c0_25, %c0_26, %c0_27] : memref<1x40x4xbf16, #tpu.memory_space<vmem>>, vector<1x17x4xbf16>
    %22 = vector.shape_cast %21 : vector<1x17x4xbf16> to vector<17x4xbf16>
    %c239 = arith.constant 239 : index
    %c16_28 = arith.constant 16 : index
    %23 = vector.load %arg6[%c239, %c16_28] : memref<256x128xbf16, #tpu.memory_space<vmem>>, vector<17x4xbf16>
    tpu.vector_store %arg6[%c239, %c16_28], %22 {strides = array<i32>} : memref<256x128xbf16, #tpu.memory_space<vmem>>, vector<17x4xbf16>,
    %c18 = arith.constant 18 : index
    %c0_29 = arith.constant 0 : index
    %24 = vector.load %arg1[%c18, %c0_29] : memref<256x4xbf16, #tpu.memory_space<vmem>>, vector<238x4xbf16>
    %c0_30 = arith.constant 0 : index
    %c20 = arith.constant 20 : index
    %25 = vector.load %arg6[%c0_30, %c20] : memref<256x128xbf16, #tpu.memory_space<vmem>>, vector<238x4xbf16>
    tpu.vector_store %arg6[%c0_30, %c20], %24 {strides = array<i32>} : memref<256x128xbf16, #tpu.memory_space<vmem>>, vector<238x4xbf16>,
    %c0_31 = arith.constant 0 : index
    %c0_32 = arith.constant 0 : index
    %c0_33 = arith.constant 0 : index
    %26 = vector.load %arg2[%c0_31, %c0_32, %c0_33] : memref<1x40x4xbf16, #tpu.memory_space<vmem>>, vector<1x18x4xbf16>
    %27 = vector.shape_cast %26 : vector<1x18x4xbf16> to vector<18x4xbf16>
    %c238 = arith.constant 238 : index
    %c20_34 = arith.constant 20 : index
    %28 = vector.load %arg6[%c238, %c20_34] : memref<256x128xbf16, #tpu.memory_space<vmem>>, vector<18x4xbf16>
    tpu.vector_store %arg6[%c238, %c20_34], %27 {strides = array<i32>} : memref<256x128xbf16, #tpu.memory_space<vmem>>, vector<18x4xbf16>,
    %c32 = arith.constant 32 : index
    %c0_35 = arith.constant 0 : index
    %29 = vector.load %arg1[%c32, %c0_35] : memref<256x4xbf16, #tpu.memory_space<vmem>>, vector<224x4xbf16>
    %c0_36 = arith.constant 0 : index
    %c24 = arith.constant 24 : index
    %30 = vector.load %arg6[%c0_36, %c24] : memref<256x128xbf16, #tpu.memory_space<vmem>>, vector<224x4xbf16>
    tpu.vector_store %arg6[%c0_36, %c24], %29 {strides = array<i32>} : memref<256x128xbf16, #tpu.memory_space<vmem>>, vector<224x4xbf16>,
    %c0_37 = arith.constant 0 : index
    %c0_38 = arith.constant 0 : index
    %c0_39 = arith.constant 0 : index
    %31 = vector.load %arg2[%c0_37, %c0_38, %c0_39] : memref<1x40x4xbf16, #tpu.memory_space<vmem>>, vector<1x32x4xbf16>
    %32 = vector.shape_cast %31 : vector<1x32x4xbf16> to vector<32x4xbf16>
    %c224 = arith.constant 224 : index
    %c24_40 = arith.constant 24 : index
    %33 = vector.load %arg6[%c224, %c24_40] : memref<256x128xbf16, #tpu.memory_space<vmem>>, vector<32x4xbf16>
    tpu.vector_store %arg6[%c224, %c24_40], %32 {strides = array<i32>} : memref<256x128xbf16, #tpu.memory_space<vmem>>, vector<32x4xbf16>,
    %c33 = arith.constant 33 : index
    %c0_41 = arith.constant 0 : index
    %34 = vector.load %arg1[%c33, %c0_41] : memref<256x4xbf16, #tpu.memory_space<vmem>>, vector<223x4xbf16>
    %c0_42 = arith.constant 0 : index
    %c28 = arith.constant 28 : index
    %35 = vector.load %arg6[%c0_42, %c28] : memref<256x128xbf16, #tpu.memory_space<vmem>>, vector<223x4xbf16>
    tpu.vector_store %arg6[%c0_42, %c28], %34 {strides = array<i32>} : memref<256x128xbf16, #tpu.memory_space<vmem>>, vector<223x4xbf16>,
    %c0_43 = arith.constant 0 : index
    %c0_44 = arith.constant 0 : index
    %c0_45 = arith.constant 0 : index
    %36 = vector.load %arg2[%c0_43, %c0_44, %c0_45] : memref<1x40x4xbf16, #tpu.memory_space<vmem>>, vector<1x33x4xbf16>
    %37 = vector.shape_cast %36 : vector<1x33x4xbf16> to vector<33x4xbf16>
    %c223 = arith.constant 223 : index
    %c28_46 = arith.constant 28 : index
    %38 = vector.load %arg6[%c223, %c28_46] : memref<256x128xbf16, #tpu.memory_space<vmem>>, vector<33x4xbf16>
    tpu.vector_store %arg6[%c223, %c28_46], %37 {strides = array<i32>} : memref<256x128xbf16, #tpu.memory_space<vmem>>, vector<33x4xbf16>,
    %c34 = arith.constant 34 : index
    %c0_47 = arith.constant 0 : index
    %39 = vector.load %arg1[%c34, %c0_47] : memref<256x4xbf16, #tpu.memory_space<vmem>>, vector<222x4xbf16>
    %c0_48 = arith.constant 0 : index
    %c32_49 = arith.constant 32 : index
    %40 = vector.load %arg6[%c0_48, %c32_49] : memref<256x128xbf16, #tpu.memory_space<vmem>>, vector<222x4xbf16>
    tpu.vector_store %arg6[%c0_48, %c32_49], %39 {strides = array<i32>} : memref<256x128xbf16, #tpu.memory_space<vmem>>, vector<222x4xbf16>,
    %c0_50 = arith.constant 0 : index
    %c0_51 = arith.constant 0 : index
    %c0_52 = arith.constant 0 : index
    %41 = vector.load %arg2[%c0_50, %c0_51, %c0_52] : memref<1x40x4xbf16, #tpu.memory_space<vmem>>, vector<1x34x4xbf16>
    %42 = vector.shape_cast %41 : vector<1x34x4xbf16> to vector<34x4xbf16>
    %c222 = arith.constant 222 : index
    %c32_53 = arith.constant 32 : index
    %43 = vector.load %arg6[%c222, %c32_53] : memref<256x128xbf16, #tpu.memory_space<vmem>>, vector<34x4xbf16>
    tpu.vector_store %arg6[%c222, %c32_53], %42 {strides = array<i32>} : memref<256x128xbf16, #tpu.memory_space<vmem>>, vector<34x4xbf16>,
    %c0_54 = arith.constant 0 : index
    %c0_55 = arith.constant 0 : index
    %44 = vector.load %arg6[%c0_54, %c0_55] : memref<256x128xbf16, #tpu.memory_space<vmem>>, vector<256x128xbf16>
    %c0_56 = arith.constant 0 : index
    %c0_57 = arith.constant 0 : index
    %45 = vector.load %arg3[%c0_56, %c0_57] : memref<128x128xbf16, #tpu.memory_space<vmem>>, vector<128x128xbf16>
    %cst_58 = arith.constant dense<0.000000e+00> : vector<256x128xf32>
    %46 = tpu.matmul %44, %45, %cst_58 {dimension_numbers = #tpu.dot_dimension_numbers<[1], [0], [0], [1], [0, 0, 1, 1], [], []>} : vector<256x128xbf16>, vector<128x128xbf16>, vector<256x128xf32> -> vector<256x128xf32>
    %c0_59 = arith.constant 0 : index
    %c0_60 = arith.constant 0 : index
    %47 = vector.load %arg4[%c0_59, %c0_60] : memref<1x128xf32, #tpu.memory_space<vmem>>, vector<1x128xf32>
    %48 = vector.broadcast %47 : vector<1x128xf32> to vector<256x128xf32>
    %49 = arith.addf %46, %48 : vector<256x128xf32>
    %c0_61 = arith.constant 0 : index
    %c0_62 = arith.constant 0 : index
    %50 = vector.load %arg5[%c0_61, %c0_62] : memref<256x128xf32, #tpu.memory_space<vmem>>, vector<256x128xf32>
    tpu.vector_store %arg5[%c0_61, %c0_62], %49 {strides = array<i32>} : memref<256x128xf32, #tpu.memory_space<vmem>>, vector<256x128xf32>,
    return
  }
  func.func @transform_0(%arg0: i32) -> (i32, i32) {
    %c0_i32 = arith.constant 0 : i32
    %c0_i32_0 = arith.constant 0 : i32
    return %arg0, %c0_i32 : i32, i32
  }
  func.func @transform_1(%arg0: i32) -> (i32, i32, i32) {
    %c0_i32 = arith.constant 0 : i32
    %c0_i32_0 = arith.constant 0 : i32
    %c0_i32_1 = arith.constant 0 : i32
    return %arg0, %c0_i32, %c0_i32_0 : i32, i32, i32
  }
  func.func @transform_2(%arg0: i32) -> (i32, i32) {
    %c0_i32 = arith.constant 0 : i32
    %c0_i32_0 = arith.constant 0 : i32
    %c0_i32_1 = arith.constant 0 : i32
    return %c0_i32, %c0_i32_0 : i32, i32
  }
  func.func @transform_3(%arg0: i32) -> (i32, i32) {
    %c0_i32 = arith.constant 0 : i32
    %c0_i32_0 = arith.constant 0 : i32
    %c0_i32_1 = arith.constant 0 : i32
    return %c0_i32, %c0_i32_0 : i32, i32
  }
  func.func @transform_4(%arg0: i32) -> (i32, i32) {
    %c0_i32 = arith.constant 0 : i32
    %c0_i32_0 = arith.constant 0 : i32
    return %arg0, %c0_i32 : i32, i32
  }
}

</mosaic_0001>

<llo_original>
// kernel: conv_lora_forward.1
$region0: #{conv_lora_forward.1}
  #allocation0 [shape = 'u32[]', space=smem, size = 0x4, offset = 0x4, fixed_abs, tag = 'smem constant byte address 0x4 - core index']
  #allocation1 [shape = 'u32[144,128]{1,0:T(1,128)}', space=vmem, size = 0x12000, scoped, tag = 'internal scratch']
  #allocation2 [shape = 'bf16[256,128]{1,0:T(8,128)(2,1)}', space=vmem, size = 0x10000, scoped, tag = 'scratch operand']
  %s0 = inlined_call_operand.vmem [shape: bf16[768,4], index: 0, kind: input, shape index: {}]
  %s1 = inlined_call_operand.vmem [shape: bf16[2,40,4], index: 1, kind: input, shape index: {}]
  %s2 = inlined_call_operand.vmem [shape: bf16[128,128], index: 2, kind: input, shape index: {}]
  %s3 = inlined_call_operand.vmem [shape: f32[1,128], index: 3, kind: input, shape index: {}]
  %s4 = inlined_call_operand.vmem [shape: f32[512,128], index: 4, kind: output, shape index: {}]
  %s5 = sld [smem:[#allocation0]]
  $region49: #{conv_lora_forward.1} parent=0
    _
  %s7 = ssub.s32 1, %s5
  %s8 = scalar_select 0, %s7, %s5
  loop: start=0, step=1, limit=4
  $region2: #{conv_lora_forward.1} parent=0 // loop_pre_header
    _
  $region3: #{conv_lora_forward.1} parent=0 // loop_header
    %s10 = sphi 0, %s14
    %p11 = scmp.ge.s32.totalorder %s10, 4
    %s20 = sphi 0, %s22
    %s23 = sphi 0, %s20
    %s24 = sphi 0, %s23
    %s40 = sphi 0, %s24
    %s46 = sphi 0, %s48
    %s49 = sphi 0, %s46
    %s50 = sphi 0, %s49
    %s66 = sphi 0, %s50
    %s70 = sphi 0, %s70
    %s72 = sphi 0, %s70
    %s73 = sphi 0, %s72
    %s87 = sphi 0, %s73
    %s91 = sphi 0, %s91
    %s93 = sphi 0, %s91
    %s94 = sphi 0, %s93
    %s108 = sphi 0, %s94
    %s114 = sphi 0, %s116
    %s117 = sphi 0, %s114
    %s118 = sphi 0, %s117
    %s134 = sphi 0, %s118
  $region4: #{conv_lora_forward.1} parent=0 // loop_header_branch
    %13 = sbr.rel (%p11) target = $region8
  $region5: #{conv_lora_forward.1} parent=0 // loop_body
    %s15 = ssub.s32 %s10, 1
    %s16 = ssub.s32 %s10, 2
    %s17 = sadd.s32 %s10, 1
    %s18 = ssub.s32 %s10, %s17
    %p19 = scmp.eq.s32.totalorder %s18, 0
    %s21 = sadd.s32 %s20, 1
    %s22 = scalar_select %p19, %s20, %s21
    %p25 = pneg %p19
    %p26 = scmp.eq.s32.totalorder %s10, 1
    %p27 = por %p25, %p26
    %p28 = scmp.ne.s32.totalorder %s20, %s23
    %p29 = scmp.eq.s32.totalorder %s10, 0
    %p30 = por %p28, %p29
    %p31 = scmp.ne.s32.totalorder %s20, %s23
    %p32 = scmp.eq.s32.totalorder %s15, 1
    %p33 = por %p31, %p32
    %p34 = scmp.ne.s32.totalorder %s23, %s24
    %p35 = scmp.eq.s32.totalorder %s15, 0
    %p36 = por %p34, %p35
    %p37 = scmp.ne.s32.totalorder %s23, %s24
    %p38 = scmp.eq.s32.totalorder %s16, 1
    %p39 = por %p37, %p38
    %p41 = scmp.ne.s32.totalorder %s24, %s40
    %p42 = scmp.eq.s32.totalorder %s16, 0
    %p43 = por %p41, %p42
    %s44 = ssub.s32 %s10, %s17
    %p45 = scmp.eq.s32.totalorder %s44, 0
    %s47 = sadd.s32 %s46, 1
    %s48 = scalar_select %p45, %s46, %s47
    %p51 = pneg %p45
    %p52 = scmp.eq.s32.totalorder %s10, 1
    %p53 = por %p51, %p52
    %p54 = scmp.ne.s32.totalorder %s46, %s49
    %p55 = scmp.eq.s32.totalorder %s10, 0
    %p56 = por %p54, %p55
    %p57 = scmp.ne.s32.totalorder %s46, %s49
    %p58 = scmp.eq.s32.totalorder %s15, 1
    %p59 = por %p57, %p58
    %p60 = scmp.ne.s32.totalorder %s49, %s50
    %p61 = scmp.eq.s32.totalorder %s15, 0
    %p62 = por %p60, %p61
    %p63 = scmp.ne.s32.totalorder %s49, %s50
    %p64 = scmp.eq.s32.totalorder %s16, 1
    %p65 = por %p63, %p64
    %p67 = scmp.ne.s32.totalorder %s50, %s66
    %p68 = scmp.eq.s32.totalorder %s16, 0
    %p69 = por %p67, %p68
    %s71 = sadd.s32 %s70, 1
    %p74 = scmp.eq.s32.totalorder %s10, 1
    %p75 = scmp.ne.s32.totalorder %s70, %s72
    %p76 = scmp.eq.s32.totalorder %s10, 0
    %p77 = por %p75, %p76
    %p78 = scmp.ne.s32.totalorder %s70, %s72
    %p79 = scmp.eq.s32.totalorder %s15, 1
    %p80 = por %p78, %p79
    %p81 = scmp.ne.s32.totalorder %s72, %s73
    %p82 = scmp.eq.s32.totalorder %s15, 0
    %p83 = por %p81, %p82
    %p84 = scmp.ne.s32.totalorder %s72, %s73
    %p85 = scmp.eq.s32.totalorder %s16, 1
    %p86 = por %p84, %p85
    %p88 = scmp.ne.s32.totalorder %s73, %s87
    %p89 = scmp.eq.s32.totalorder %s16, 0
    %p90 = por %p88, %p89
    %s92 = sadd.s32 %s91, 1
    %p95 = scmp.eq.s32.totalorder %s10, 1
    %p96 = scmp.ne.s32.totalorder %s91, %s93
    %p97 = scmp.eq.s32.totalorder %s10, 0
    %p98 = por %p96, %p97
    %p99 = scmp.ne.s32.totalorder %s91, %s93
    %p100 = scmp.eq.s32.totalorder %s15, 1
    %p101 = por %p99, %p100
    %p102 = scmp.ne.s32.totalorder %s93, %s94
    %p103 = scmp.eq.s32.totalorder %s15, 0
    %p104 = por %p102, %p103
    %p105 = scmp.ne.s32.totalorder %s93, %s94
    %p106 = scmp.eq.s32.totalorder %s16, 1
    %p107 = por %p105, %p106
    %p109 = scmp.ne.s32.totalorder %s94, %s108
    %p110 = scmp.eq.s32.totalorder %s16, 0
    %p111 = por %p109, %p110
    %s112 = ssub.s32 %s10, %s17
    %p113 = scmp.eq.s32.totalorder %s112, 0
    %s115 = sadd.s32 %s114, 1
    %s116 = scalar_select %p113, %s114, %s115
    %p119 = pneg %p113
    %p120 = scmp.eq.s32.totalorder %s10, 1
    %p121 = por %p119, %p120
    %p122 = scmp.ne.s32.totalorder %s114, %s117
    %p123 = scmp.eq.s32.totalorder %s10, 0
    %p124 = por %p122, %p123
    %p125 = scmp.ne.s32.totalorder %s114, %s117
    %p126 = scmp.eq.s32.totalorder %s15, 1
    %p127 = por %p125, %p126
    %p128 = scmp.ne.s32.totalorder %s117, %s118
    %p129 = scmp.eq.s32.totalorder %s15, 0
    %p130 = por %p128, %p129
    %p131 = scmp.ne.s32.totalorder %s117, %s118
    %p132 = scmp.eq.s32.totalorder %s16, 1
    %p133 = por %p131, %p132
    %p135 = scmp.ne.s32.totalorder %s118, %s134
    %p136 = scmp.eq.s32.totalorder %s16, 0
    %p137 = por %p135, %p136
    %p138 = scmp.le.s32.totalorder 1, %s10
    %p139 = scmp.lt.s32.totalorder %s10, 3
    %p140 = pnand %p138, %p139
    %p141 = pneg %p140
    // Predicated region
    $region9: #{conv_lora_forward.1} parent=5 // pred_check
      _
    $region10: #{conv_lora_forward.1} parent=5 // pred_check_branch
      %143 = sbr.rel (%p140) target = $region12
    $region11: #{conv_lora_forward.1} parent=5 // pred_region
      %s144 = ssub.s32 %s10, 1
      // Predicated region
      $region13: #{conv_lora_forward.1} parent=11 // pred_check
        %p145 = pneg %p83
      $region14: #{conv_lora_forward.1} parent=11 // pred_check_branch
        %147 = sbr.rel (%p145) target = $region16
      $region15: #{conv_lora_forward.1} parent=11 // pred_region
        _
      $region16: #{conv_lora_forward.1} parent=11 // pred_fallthru
        _
      // Predicated region
      $region17: #{conv_lora_forward.1} parent=11 // pred_check
        %p148 = pneg %p104
      $region18: #{conv_lora_forward.1} parent=11 // pred_check_branch
        %150 = sbr.rel (%p148) target = $region20
      $region19: #{conv_lora_forward.1} parent=11 // pred_region
        _
      $region20: #{conv_lora_forward.1} parent=11 // pred_fallthru
        _
    $region12: #{conv_lora_forward.1} parent=5 // pred_fallthru
      _
    %p151 = scmp.lt.s32.totalorder %s10, 2
    // Predicated region
    $region21: #{conv_lora_forward.1} parent=5 // pred_check
      %p152 = pneg %p151
    $region22: #{conv_lora_forward.1} parent=5 // pred_check_branch
      %154 = sbr.rel (%p152) target = $region24
    $region23: #{conv_lora_forward.1} parent=5 // pred_region
      // Predicated region
      $region25: #{conv_lora_forward.1} parent=23 // pred_check
        %p155 = pneg %p30
      $region26: #{conv_lora_forward.1} parent=23 // pred_check_branch
        %157 = sbr.rel (%p155) target = $region28
      $region27: #{conv_lora_forward.1} parent=23 // pred_region
        %s158 = smul.u32 32, %s10
        %p159 = scmp.lt.s32.totalorder %s158, 95
        %s160 = scalar_select %p159, %s158, 95
        %s161 = smul.addr %s160, 4
        %s162 = scalar_lea.vmem %s0, %s161
        %s163 = smul.u32 32, %s10
      $region28: #{conv_lora_forward.1} parent=23 // pred_fallthru
        _
      // Predicated region
      $region29: #{conv_lora_forward.1} parent=23 // pred_check
        %p164 = pneg %p56
      $region30: #{conv_lora_forward.1} parent=23 // pred_check_branch
        %166 = sbr.rel (%p164) target = $region32
      $region31: #{conv_lora_forward.1} parent=23 // pred_region
        %p167 = scmp.lt.s32.totalorder %s10, 1
        %s168 = scalar_select %p167, %s10, 1
        %s169 = smul.addr %s168, 5
        %s170 = smul.addr %s169, 4
        %s171 = scalar_lea.vmem %s1, %s170
      $region32: #{conv_lora_forward.1} parent=23 // pred_fallthru
        _
    $region24: #{conv_lora_forward.1} parent=5 // pred_fallthru
      _
    %p172 = scmp.le.s32.totalorder 1, %s10
    %p173 = scmp.lt.s32.totalorder %s10, 3
    %p174 = pnand %p172, %p173
    %p175 = pneg %p174
    // Predicated region
    $region33: #{conv_lora_forward.1} parent=5 // pred_check
      _
    $region34: #{conv_lora_forward.1} parent=5 // pred_check_branch
      %177 = sbr.rel (%p174) target = $region36
    $region35: #{conv_lora_forward.1} parent=5 // pred_region
      %s178 = ssub.s32 %s10, 1
      %s179 = smul.u32 32, %s15
      %p180 = scmp.lt.s32.totalorder %s179, 95
      %s181 = scalar_select %p180, %s179, 95
      %s182 = smul.addr %s181, 4
      %s183 = scalar_lea.vmem %s0, %s182
      %p184 = pneg %p36
      %p185 = pneg %p33
      %p186 = scmp.lt.s32.totalorder %s15, 1
      %s187 = scalar_select %p186, %s15, 1
      %s188 = smul.addr %s187, 5
      %s189 = smul.addr %s188, 4
      %s190 = scalar_lea.vmem %s1, %s189
      %p191 = pneg %p62
      %p192 = pneg %p59
      %p193 = pneg %p83
      %p194 = pneg %p80
      %p195 = pneg %p104
      %p196 = pneg %p101
      %p197 = pneg %p130
      %p198 = pneg %p127
      %s199 = smul.u32 32, %s15
      %p200 = scmp.lt.s32.totalorder %s199, 63
      %s201 = scalar_select %p200, %s199, 63
      %s202 = smul.addr %s201, 8
      %s203 = scalar_lea.vmem %s4, %s202
      %s204 = smul.u32 32, %s15
      %p205 = scmp.lt.s32.totalorder %s204, 95
      %s206 = scalar_select %p205, %s204, 95
      %s207 = smul.addr %s206, 4
      %s208 = scalar_lea.vmem %s0, %s207
      %s209 = smul.u32 32, %s15
      %p210 = scmp.lt.s32.totalorder %s15, 1
      %s211 = scalar_select %p210, %s15, 1
      %s212 = smul.addr %s211, 5
      %s213 = smul.addr %s212, 4
      %s214 = scalar_lea.vmem %s1, %s213
      %s215 = smul.u32 32, %s15
      %p216 = scmp.lt.s32.totalorder %s215, 63
      %s217 = scalar_select %p216, %s215, 63
      %s218 = smul.addr %s217, 8
      %s219 = scalar_lea.vmem %s4, %s218
      %s220 = smul.u32 32, %s15
      %vm222 = vcmask 1043744
      %223 = vst.msk [vmem:[#allocation2] sm:$0xf] %vm222, 0
      %224 = vst.msk [vmem:[#allocation2 + $0x4] sm:$0xf] %vm222, 0
      %225 = vst.msk [vmem:[#allocation2 + $0x8] sm:$0xf] %vm222, 0
      %226 = vst.msk [vmem:[#allocation2 + $0xc] sm:$0xf] %vm222, 0
      %227 = vst.msk [vmem:[#allocation2 + $0x10] sm:$0xf] %vm222, 0
      %228 = vst.msk [vmem:[#allocation2 + $0x14] sm:$0xf] %vm222, 0
      %229 = vst.msk [vmem:[#allocation2 + $0x18] sm:$0xf] %vm222, 0
      %230 = vst.msk [vmem:[#allocation2 + $0x1c] sm:$0xf] %vm222, 0
      %231 = vst.msk [vmem:[#allocation2 + $0x20] sm:$0xf] %vm222, 0
      %232 = vst.msk [vmem:[#allocation2 + $0x24] sm:$0xf] %vm222, 0
      %233 = vst.msk [vmem:[#allocation2 + $0x28] sm:$0xf] %vm222, 0
      %234 = vst.msk [vmem:[#allocation2 + $0x2c] sm:$0xf] %vm222, 0
      %235 = vst.msk [vmem:[#allocation2 + $0x30] sm:$0xf] %vm222, 0
      %236 = vst.msk [vmem:[#allocation2 + $0x34] sm:$0xf] %vm222, 0
      %237 = vst.msk [vmem:[#allocation2 + $0x38] sm:$0xf] %vm222, 0
      %238 = vst.msk [vmem:[#allocation2 + $0x3c] sm:$0xf] %vm222, 0
      %239 = vst.msk [vmem:[#allocation2 + $0x40] sm:$0xf] %vm222, 0
      %240 = vst.msk [vmem:[#allocation2 + $0x44] sm:$0xf] %vm222, 0
      %241 = vst.msk [vmem:[#allocation2 + $0x48] sm:$0xf] %vm222, 0
      %242 = vst.msk [vmem:[#allocation2 + $0x4c] sm:$0xf] %vm222, 0
      %243 = vst.msk [vmem:[#allocation2 + $0x50] sm:$0xf] %vm222, 0
      %244 = vst.msk [vmem:[#allocation2 + $0x54] sm:$0xf] %vm222, 0
      %245 = vst.msk [vmem:[#allocation2 + $0x58] sm:$0xf] %vm222, 0
      %246 = vst.msk [vmem:[#allocation2 + $0x5c] sm:$0xf] %vm222, 0
      %247 = vst.msk [vmem:[#allocation2 + $0x60] sm:$0xf] %vm222, 0
      %248 = vst.msk [vmem:[#allocation2 + $0x64] sm:$0xf] %vm222, 0
      %249 = vst.msk [vmem:[#allocation2 + $0x68] sm:$0xf] %vm222, 0
      %250 = vst.msk [vmem:[#allocation2 + $0x6c] sm:$0xf] %vm222, 0
      %251 = vst.msk [vmem:[#allocation2 + $0x70] sm:$0xf] %vm222, 0
      %252 = vst.msk [vmem:[#allocation2 + $0x74] sm:$0xf] %vm222, 0
      %253 = vst.msk [vmem:[#allocation2 + $0x78] sm:$0xf] %vm222, 0
      %254 = vst.msk [vmem:[#allocation2 + $0x7c] sm:$0xf] %vm222, 0
      %v255 = vld [vmem:[%s208] sm:$0xf]
      %v256 = vld [vmem:[%s208 + $0x4] sm:$0xf]
      %v257 = vld [vmem:[%s208 + $0x8] sm:$0xf]
      %v258 = vld [vmem:[%s208 + $0xc] sm:$0xf]
      %v259 = vld [vmem:[%s208 + $0x10] sm:$0xf]
      %v260 = vld [vmem:[%s208 + $0x14] sm:$0xf]
      %v261 = vld [vmem:[%s208 + $0x18] sm:$0xf]
      %v262 = vld [vmem:[%s208 + $0x1c] sm:$0xf]
      %v263 = vld [vmem:[%s208 + $0x20] sm:$0xf]
      %v264 = vld [vmem:[%s208 + $0x24] sm:$0xf]
      %v265 = vld [vmem:[%s208 + $0x28] sm:$0xf]
      %v266 = vld [vmem:[%s208 + $0x2c] sm:$0xf]
      %v267 = vld [vmem:[%s208 + $0x30] sm:$0xf]
      %v268 = vld [vmem:[%s208 + $0x34] sm:$0xf]
      %v269 = vld [vmem:[%s208 + $0x38] sm:$0xf]
      %v270 = vld [vmem:[%s208 + $0x3c] sm:$0xf]
      %v271 = vld [vmem:[%s208 + $0x40] sm:$0xf]
      %v272 = vld [vmem:[%s208 + $0x44] sm:$0xf]
      %v273 = vld [vmem:[%s208 + $0x48] sm:$0xf]
      %v274 = vld [vmem:[%s208 + $0x4c] sm:$0xf]
      %v275 = vld [vmem:[%s208 + $0x50] sm:$0xf]
      %v276 = vld [vmem:[%s208 + $0x54] sm:$0xf]
      %v277 = vld [vmem:[%s208 + $0x58] sm:$0xf]
      %v278 = vld [vmem:[%s208 + $0x5c] sm:$0xf]
      %v279 = vld [vmem:[%s208 + $0x60] sm:$0xf]
      %v280 = vld [vmem:[%s208 + $0x64] sm:$0xf]
      %v281 = vld [vmem:[%s208 + $0x68] sm:$0xf]
      %v282 = vld [vmem:[%s208 + $0x6c] sm:$0xf]
      %v283 = vld [vmem:[%s208 + $0x70] sm:$0xf]
      %v284 = vld [vmem:[%s208 + $0x74] sm:$0xf]
      %v285 = vld [vmem:[%s208 + $0x78] sm:$0xf]
      %v286 = vld [vmem:[%s208 + $0x7c] sm:$0xf]
      %vm287 = vcmask 27648
      %288 = vst.msk [vmem:[#allocation2] sm:$0xf] %vm287, %v255
      %289 = vst.msk [vmem:[#allocation2 + $0x4] sm:$0xf] %vm287, %v256
      %290 = vst.msk [vmem:[#allocation2 + $0x8] sm:$0xf] %vm287, %v257
      %291 = vst.msk [vmem:[#allocation2 + $0xc] sm:$0xf] %vm287, %v258
      %292 = vst.msk [vmem:[#allocation2 + $0x10] sm:$0xf] %vm287, %v259
      %293 = vst.msk [vmem:[#allocation2 + $0x14] sm:$0xf] %vm287, %v260
      %294 = vst.msk [vmem:[#allocation2 + $0x18] sm:$0xf] %vm287, %v261
      %295 = vst.msk [vmem:[#allocation2 + $0x1c] sm:$0xf] %vm287, %v262
      %296 = vst.msk [vmem:[#allocation2 + $0x20] sm:$0xf] %vm287, %v263
      %297 = vst.msk [vmem:[#allocation2 + $0x24] sm:$0xf] %vm287, %v264
      %298 = vst.msk [vmem:[#allocation2 + $0x28] sm:$0xf] %vm287, %v265
      %299 = vst.msk [vmem:[#allocation2 + $0x2c] sm:$0xf] %vm287, %v266
      %300 = vst.msk [vmem:[#allocation2 + $0x30] sm:$0xf] %vm287, %v267
      %301 = vst.msk [vmem:[#allocation2 + $0x34] sm:$0xf] %vm287, %v268
      %302 = vst.msk [vmem:[#allocation2 + $0x38] sm:$0xf] %vm287, %v269
      %303 = vst.msk [vmem:[#allocation2 + $0x3c] sm:$0xf] %vm287, %v270
      %304 = vst.msk [vmem:[#allocation2 + $0x40] sm:$0xf] %vm287, %v271
      %305 = vst.msk [vmem:[#allocation2 + $0x44] sm:$0xf] %vm287, %v272
      %306 = vst.msk [vmem:[#allocation2 + $0x48] sm:$0xf] %vm287, %v273
      %307 = vst.msk [vmem:[#allocation2 + $0x4c] sm:$0xf] %vm287, %v274
      %308 = vst.msk [vmem:[#allocation2 + $0x50] sm:$0xf] %vm287, %v275
      %309 = vst.msk [vmem:[#allocation2 + $0x54] sm:$0xf] %vm287, %v276
      %310 = vst.msk [vmem:[#allocation2 + $0x58] sm:$0xf] %vm287, %v277
      %311 = vst.msk [vmem:[#allocation2 + $0x5c] sm:$0xf] %vm287, %v278
      %312 = vst.msk [vmem:[#allocation2 + $0x60] sm:$0xf] %vm287, %v279
      %313 = vst.msk [vmem:[#allocation2 + $0x64] sm:$0xf] %vm287, %v280
      %314 = vst.msk [vmem:[#allocation2 + $0x68] sm:$0xf] %vm287, %v281
      %315 = vst.msk [vmem:[#allocation2 + $0x6c] sm:$0xf] %vm287, %v282
      %316 = vst.msk [vmem:[#allocation2 + $0x70] sm:$0xf] %vm287, %v283
      %317 = vst.msk [vmem:[#allocation2 + $0x74] sm:$0xf] %vm287, %v284
      %318 = vst.msk [vmem:[#allocation2 + $0x78] sm:$0xf] %vm287, %v285
      %319 = vst.msk [vmem:[#allocation2 + $0x7c] sm:$0xf] %vm287, %v286
      %v320 = vld [vmem:[%s208] sm:$0xf]
      %v321 = vld [vmem:[%s208 + $0x4] sm:$0xf]
      %v322 = vld [vmem:[%s208 + $0x8] sm:$0xf]
      %v323 = vld [vmem:[%s208 + $0xc] sm:$0xf]
      %v324 = vld [vmem:[%s208 + $0x10] sm:$0xf]
      %v325 = vld [vmem:[%s208 + $0x14] sm:$0xf]
      %v326 = vld [vmem:[%s208 + $0x18] sm:$0xf]
      %v327 = vld [vmem:[%s208 + $0x1c] sm:$0xf]
      %v328 = vld [vmem:[%s208 + $0x20] sm:$0xf]
      %v329 = vld [vmem:[%s208 + $0x24] sm:$0xf]
      %v330 = vld [vmem:[%s208 + $0x28] sm:$0xf]
      %v331 = vld [vmem:[%s208 + $0x2c] sm:$0xf]
      %v332 = vld [vmem:[%s208 + $0x30] sm:$0xf]
      %v333 = vld [vmem:[%s208 + $0x34] sm:$0xf]
      %v334 = vld [vmem:[%s208 + $0x38] sm:$0xf]
      %v335 = vld [vmem:[%s208 + $0x3c] sm:$0xf]
      %v336 = vld [vmem:[%s208 + $0x40] sm:$0xf]
      %v337 = vld [vmem:[%s208 + $0x44] sm:$0xf]
      %v338 = vld [vmem:[%s208 + $0x48] sm:$0xf]
      %v339 = vld [vmem:[%s208 + $0x4c] sm:$0xf]
      %v340 = vld [vmem:[%s208 + $0x50] sm:$0xf]
      %v341 = vld [vmem:[%s208 + $0x54] sm:$0xf]
      %v342 = vld [vmem:[%s208 + $0x58] sm:$0xf]
      %v343 = vld [vmem:[%s208 + $0x5c] sm:$0xf]
      %v344 = vld [vmem:[%s208 + $0x60] sm:$0xf]
      %v345 = vld [vmem:[%s208 + $0x64] sm:$0xf]
      %v346 = vld [vmem:[%s208 + $0x68] sm:$0xf]
      %v347 = vld [vmem:[%s208 + $0x6c] sm:$0xf]
      %v348 = vld [vmem:[%s208 + $0x70] sm:$0xf]
      %v349 = vld [vmem:[%s208 + $0x74] sm:$0xf]
      %v350 = vld [vmem:[%s208 + $0x78] sm:$0xf]
      %v351 = vld [vmem:[%s208 + $0x7c] sm:$0xf]
      %vm352 = vsmask.f32 3328
      %vm353 = vsmask.f32 7440
      %vm354 = vmor %vm352, %vm353
      %v356 = vshrl.u32 %v320, 16
      %v358 = vrot.slane %v356, 4
      %v359 = vshll.u32 %v320, 16
      %v361 = vrot.slane %v359, 5
      %v362 = vor.u32 %v358, %v361
      %v363 = vrot.slane %v362, 4
      %v365 = vshll.u32 %v321, 16
      %v367 = vrot.slane %v365, 5
      %v368 = vsel %vm354, %v363, %v367
      %v369 = vshrl.u32 %v321, 16
      %v371 = vrot.slane %v369, 4
      %v372 = vor.u32 %v371, %v367
      %v373 = vrot.slane %v372, 4
      %v375 = vshll.u32 %v322, 16
      %v377 = vrot.slane %v375, 5
      %v378 = vsel %vm354, %v373, %v377
      %v379 = vshrl.u32 %v322, 16
      %v381 = vrot.slane %v379, 4
      %v382 = vor.u32 %v381, %v377
      %v383 = vrot.slane %v382, 4
      %v385 = vshll.u32 %v323, 16
      %v387 = vrot.slane %v385, 5
      %v388 = vsel %vm354, %v383, %v387
      %v389 = vshrl.u32 %v323, 16
      %v391 = vrot.slane %v389, 4
      %v392 = vor.u32 %v391, %v387
      %v393 = vrot.slane %v392, 4
      %v395 = vshll.u32 %v324, 16
      %v397 = vrot.slane %v395, 5
      %v398 = vsel %vm354, %v393, %v397
      %v399 = vshrl.u32 %v324, 16
      %v401 = vrot.slane %v399, 4
      %v402 = vor.u32 %v401, %v397
      %v403 = vrot.slane %v402, 4
      %v405 = vshll.u32 %v325, 16
      %v407 = vrot.slane %v405, 5
      %v408 = vsel %vm354, %v403, %v407
      %v409 = vshrl.u32 %v325, 16
      %v411 = vrot.slane %v409, 4
      %v412 = vor.u32 %v411, %v407
      %v413 = vrot.slane %v412, 4
      %v415 = vshll.u32 %v326, 16
      %v417 = vrot.slane %v415, 5
      %v418 = vsel %vm354, %v413, %v417
      %v419 = vshrl.u32 %v326, 16
      %v421 = vrot.slane %v419, 4
      %v422 = vor.u32 %v421, %v417
      %v423 = vrot.slane %v422, 4
      %v425 = vshll.u32 %v327, 16
      %v427 = vrot.slane %v425, 5
      %v428 = vsel %vm354, %v423, %v427
      %v429 = vshrl.u32 %v327, 16
      %v431 = vrot.slane %v429, 4
      %v432 = vor.u32 %v431, %v427
      %v433 = vrot.slane %v432, 4
      %v435 = vshll.u32 %v328, 16
      %v437 = vrot.slane %v435, 5
      %v438 = vsel %vm354, %v433, %v437
      %v439 = vshrl.u32 %v328, 16
      %v441 = vrot.slane %v439, 4
      %v442 = vor.u32 %v441, %v437
      %v443 = vrot.slane %v442, 4
      %v445 = vshll.u32 %v329, 16
      %v447 = vrot.slane %v445, 5
      %v448 = vsel %vm354, %v443, %v447
      %v449 = vshrl.u32 %v329, 16
      %v451 = vrot.slane %v449, 4
      %v452 = vor.u32 %v451, %v447
      %v453 = vrot.slane %v452, 4
      %v455 = vshll.u32 %v330, 16
      %v457 = vrot.slane %v455, 5
      %v458 = vsel %vm354, %v453, %v457
      %v459 = vshrl.u32 %v330, 16
      %v461 = vrot.slane %v459, 4
      %v462 = vor.u32 %v461, %v457
      %v463 = vrot.slane %v462, 4
      %v465 = vshll.u32 %v331, 16
      %v467 = vrot.slane %v465, 5
      %v468 = vsel %vm354, %v463, %v467
      %v469 = vshrl.u32 %v331, 16
      %v471 = vrot.slane %v469, 4
      %v472 = vor.u32 %v471, %v467
      %v473 = vrot.slane %v472, 4
      %v475 = vshll.u32 %v332, 16
      %v477 = vrot.slane %v475, 5
      %v478 = vsel %vm354, %v473, %v477
      %v479 = vshrl.u32 %v332, 16
      %v481 = vrot.slane %v479, 4
      %v482 = vor.u32 %v481, %v477
      %v483 = vrot.slane %v482, 4
      %v485 = vshll.u32 %v333, 16
      %v487 = vrot.slane %v485, 5
      %v488 = vsel %vm354, %v483, %v487
      %v489 = vshrl.u32 %v333, 16
      %v491 = vrot.slane %v489, 4
      %v492 = vor.u32 %v491, %v487
      %v493 = vrot.slane %v492, 4
      %v495 = vshll.u32 %v334, 16
      %v497 = vrot.slane %v495, 5
      %v498 = vsel %vm354, %v493, %v497
      %v499 = vshrl.u32 %v334, 16
      %v501 = vrot.slane %v499, 4
      %v502 = vor.u32 %v501, %v497
      %v503 = vrot.slane %v502, 4
      %v505 = vshll.u32 %v335, 16
      %v507 = vrot.slane %v505, 5
      %v508 = vsel %vm354, %v503, %v507
      %v509 = vshrl.u32 %v335, 16
      %v511 = vrot.slane %v509, 4
      %v512 = vor.u32 %v511, %v507
      %v513 = vrot.slane %v512, 4
      %v515 = vshll.u32 %v336, 16
      %v517 = vrot.slane %v515, 5
      %v518 = vsel %vm354, %v513, %v517
      %v519 = vshrl.u32 %v336, 16
      %v521 = vrot.slane %v519, 4
      %v522 = vor.u32 %v521, %v517
      %v523 = vrot.slane %v522, 4
      %v525 = vshll.u32 %v337, 16
      %v527 = vrot.slane %v525, 5
      %v528 = vsel %vm354, %v523, %v527
      %v529 = vshrl.u32 %v337, 16
      %v531 = vrot.slane %v529, 4
      %v532 = vor.u32 %v531, %v527
      %v533 = vrot.slane %v532, 4
      %v535 = vshll.u32 %v338, 16
      %v537 = vrot.slane %v535, 5
      %v538 = vsel %vm354, %v533, %v537
      %v539 = vshrl.u32 %v338, 16
      %v541 = vrot.slane %v539, 4
      %v542 = vor.u32 %v541, %v537
      %v543 = vrot.slane %v542, 4
      %v545 = vshll.u32 %v339, 16
      %v547 = vrot.slane %v545, 5
      %v548 = vsel %vm354, %v543, %v547
      %v549 = vshrl.u32 %v339, 16
      %v551 = vrot.slane %v549, 4
      %v552 = vor.u32 %v551, %v547
      %v553 = vrot.slane %v552, 4
      %v555 = vshll.u32 %v340, 16
      %v557 = vrot.slane %v555, 5
      %v558 = vsel %vm354, %v553, %v557
      %v559 = vshrl.u32 %v340, 16
      %v561 = vrot.slane %v559, 4
      %v562 = vor.u32 %v561, %v557
      %v563 = vrot.slane %v562, 4
      %v565 = vshll.u32 %v341, 16
      %v567 = vrot.slane %v565, 5
      %v568 = vsel %vm354, %v563, %v567
      %v569 = vshrl.u32 %v341, 16
      %v571 = vrot.slane %v569, 4
      %v572 = vor.u32 %v571, %v567
      %v573 = vrot.slane %v572, 4
      %v575 = vshll.u32 %v342, 16
      %v577 = vrot.slane %v575, 5
      %v578 = vsel %vm354, %v573, %v577
      %v579 = vshrl.u32 %v342, 16
      %v581 = vrot.slane %v579, 4
      %v582 = vor.u32 %v581, %v577
      %v583 = vrot.slane %v582, 4
      %v585 = vshll.u32 %v343, 16
      %v587 = vrot.slane %v585, 5
      %v588 = vsel %vm354, %v583, %v587
      %v589 = vshrl.u32 %v343, 16
      %v591 = vrot.slane %v589, 4
      %v592 = vor.u32 %v591, %v587
      %v593 = vrot.slane %v592, 4
      %v595 = vshll.u32 %v344, 16
      %v597 = vrot.slane %v595, 5
      %v598 = vsel %vm354, %v593, %v597
      %v599 = vshrl.u32 %v344, 16
      %v601 = vrot.slane %v599, 4
      %v602 = vor.u32 %v601, %v597
      %v603 = vrot.slane %v602, 4
      %v605 = vshll.u32 %v345, 16
      %v607 = vrot.slane %v605, 5
      %v608 = vsel %vm354, %v603, %v607
      %v609 = vshrl.u32 %v345, 16
      %v611 = vrot.slane %v609, 4
      %v612 = vor.u32 %v611, %v607
      %v613 = vrot.slane %v612, 4
      %v615 = vshll.u32 %v346, 16
      %v617 = vrot.slane %v615, 5
      %v618 = vsel %vm354, %v613, %v617
      %v619 = vshrl.u32 %v346, 16
      %v621 = vrot.slane %v619, 4
      %v622 = vor.u32 %v621, %v617
      %v623 = vrot.slane %v622, 4
      %v625 = vshll.u32 %v347, 16
      %v627 = vrot.slane %v625, 5
      %v628 = vsel %vm354, %v623, %v627
      %v629 = vshrl.u32 %v347, 16
      %v631 = vrot.slane %v629, 4
      %v632 = vor.u32 %v631, %v627
      %v633 = vrot.slane %v632, 4
      %v635 = vshll.u32 %v348, 16
      %v637 = vrot.slane %v635, 5
      %v638 = vsel %vm354, %v633, %v637
      %v639 = vshrl.u32 %v348, 16
      %v641 = vrot.slane %v639, 4
      %v642 = vor.u32 %v641, %v637
      %v643 = vrot.slane %v642, 4
      %v645 = vshll.u32 %v349, 16
      %v647 = vrot.slane %v645, 5
      %v648 = vsel %vm354, %v643, %v647
      %v649 = vshrl.u32 %v349, 16
      %v651 = vrot.slane %v649, 4
      %v652 = vor.u32 %v651, %v647
      %v653 = vrot.slane %v652, 4
      %v655 = vshll.u32 %v350, 16
      %v657 = vrot.slane %v655, 5
      %v658 = vsel %vm354, %v653, %v657
      %v659 = vshrl.u32 %v350, 16
      %v661 = vrot.slane %v659, 4
      %v662 = vor.u32 %v661, %v657
      %v663 = vrot.slane %v662, 4
      %v665 = vshll.u32 %v351, 16
      %v667 = vrot.slane %v665, 5
      %v668 = vsel %vm354, %v663, %v667
      %v669 = vshrl.u32 %v351, 16
      %v671 = vrot.slane %v669, 4
      %v672 = vor.u32 %v671, %v667
      %v673 = vrot.slane %v672, 4
      %674 = vrot.lane.b32.xlu0 %v368, 4
      %v675 = vpop.permute.xlu0 %674
      %676 = vrot.lane.b32.xlu0 %v378, 4
      %v677 = vpop.permute.xlu0 %676
      %678 = vrot.lane.b32.xlu0 %v388, 4
      %v679 = vpop.permute.xlu0 %678
      %680 = vrot.lane.b32.xlu0 %v398, 4
      %v681 = vpop.permute.xlu0 %680
      %682 = vrot.lane.b32.xlu0 %v408, 4
      %v683 = vpop.permute.xlu0 %682
      %684 = vrot.lane.b32.xlu0 %v418, 4
      %v685 = vpop.permute.xlu0 %684
      %686 = vrot.lane.b32.xlu0 %v428, 4
      %v687 = vpop.permute.xlu0 %686
      %688 = vrot.lane.b32.xlu0 %v438, 4
      %v689 = vpop.permute.xlu0 %688
      %690 = vrot.lane.b32.xlu0 %v448, 4
      %v691 = vpop.permute.xlu0 %690
      %692 = vrot.lane.b32.xlu0 %v458, 4
      %v693 = vpop.permute.xlu0 %692
      %694 = vrot.lane.b32.xlu0 %v468, 4
      %v695 = vpop.permute.xlu0 %694
      %696 = vrot.lane.b32.xlu0 %v478, 4
      %v697 = vpop.permute.xlu0 %696
      %698 = vrot.lane.b32.xlu0 %v488, 4
      %v699 = vpop.permute.xlu0 %698
      %700 = vrot.lane.b32.xlu0 %v498, 4
      %v701 = vpop.permute.xlu0 %700
      %702 = vrot.lane.b32.xlu0 %v508, 4
      %v703 = vpop.permute.xlu0 %702
      %704 = vrot.lane.b32.xlu0 %v518, 4
      %v705 = vpop.permute.xlu0 %704
      %706 = vrot.lane.b32.xlu0 %v528, 4
      %v707 = vpop.permute.xlu0 %706
      %708 = vrot.lane.b32.xlu0 %v538, 4
      %v709 = vpop.permute.xlu0 %708
      %710 = vrot.lane.b32.xlu0 %v548, 4
      %v711 = vpop.permute.xlu0 %710
      %712 = vrot.lane.b32.xlu0 %v558, 4
      %v713 = vpop.permute.xlu0 %712
      %714 = vrot.lane.b32.xlu0 %v568, 4
      %v715 = vpop.permute.xlu0 %714
      %716 = vrot.lane.b32.xlu0 %v578, 4
      %v717 = vpop.permute.xlu0 %716
      %718 = vrot.lane.b32.xlu0 %v588, 4
      %v719 = vpop.permute.xlu0 %718
      %720 = vrot.lane.b32.xlu0 %v598, 4
      %v721 = vpop.permute.xlu0 %720
      %722 = vrot.lane.b32.xlu0 %v608, 4
      %v723 = vpop.permute.xlu0 %722
      %724 = vrot.lane.b32.xlu0 %v618, 4
      %v725 = vpop.permute.xlu0 %724
      %726 = vrot.lane.b32.xlu0 %v628, 4
      %v727 = vpop.permute.xlu0 %726
      %728 = vrot.lane.b32.xlu0 %v638, 4
      %v729 = vpop.permute.xlu0 %728
      %730 = vrot.lane.b32.xlu0 %v648, 4
      %v731 = vpop.permute.xlu0 %730
      %732 = vrot.lane.b32.xlu0 %v658, 4
      %v733 = vpop.permute.xlu0 %732
      %734 = vrot.lane.b32.xlu0 %v668, 4
      %v735 = vpop.permute.xlu0 %734
      %736 = vrot.lane.b32.xlu0 %v673, 4
      %v737 = vpop.permute.xlu0 %736
      %vm770 = vcmask 60448
      %771 = vst.msk [vmem:[#allocation2] sm:$0xf] %vm770, %v675
      %772 = vst.msk [vmem:[#allocation2 + $0x4] sm:$0xf] %vm770, %v677
      %773 = vst.msk [vmem:[#allocation2 + $0x8] sm:$0xf] %vm770, %v679
      %774 = vst.msk [vmem:[#allocation2 + $0xc] sm:$0xf] %vm770, %v681
      %775 = vst.msk [vmem:[#allocation2 + $0x10] sm:$0xf] %vm770, %v683
      %776 = vst.msk [vmem:[#allocation2 + $0x14] sm:$0xf] %vm770, %v685
      %777 = vst.msk [vmem:[#allocation2 + $0x18] sm:$0xf] %vm770, %v687
      %778 = vst.msk [vmem:[#allocation2 + $0x1c] sm:$0xf] %vm770, %v689
      %779 = vst.msk [vmem:[#allocation2 + $0x20] sm:$0xf] %vm770, %v691
      %780 = vst.msk [vmem:[#allocation2 + $0x24] sm:$0xf] %vm770, %v693
      %781 = vst.msk [vmem:[#allocation2 + $0x28] sm:$0xf] %vm770, %v695
      %782 = vst.msk [vmem:[#allocation2 + $0x2c] sm:$0xf] %vm770, %v697
      %783 = vst.msk [vmem:[#allocation2 + $0x30] sm:$0xf] %vm770, %v699
      %784 = vst.msk [vmem:[#allocation2 + $0x34] sm:$0xf] %vm770, %v701
      %785 = vst.msk [vmem:[#allocation2 + $0x38] sm:$0xf] %vm770, %v703
      %786 = vst.msk [vmem:[#allocation2 + $0x3c] sm:$0xf] %vm770, %v705
      %787 = vst.msk [vmem:[#allocation2 + $0x40] sm:$0xf] %vm770, %v707
      %788 = vst.msk [vmem:[#allocation2 + $0x44] sm:$0xf] %vm770, %v709
      %789 = vst.msk [vmem:[#allocation2 + $0x48] sm:$0xf] %vm770, %v711
      %790 = vst.msk [vmem:[#allocation2 + $0x4c] sm:$0xf] %vm770, %v713
      %791 = vst.msk [vmem:[#allocation2 + $0x50] sm:$0xf] %vm770, %v715
      %792 = vst.msk [vmem:[#allocation2 + $0x54] sm:$0xf] %vm770, %v717
      %793 = vst.msk [vmem:[#allocation2 + $0x58] sm:$0xf] %vm770, %v719
      %794 = vst.msk [vmem:[#allocation2 + $0x5c] sm:$0xf] %vm770, %v721
      %795 = vst.msk [vmem:[#allocation2 + $0x60] sm:$0xf] %vm770, %v723
      %796 = vst.msk [vmem:[#allocation2 + $0x64] sm:$0xf] %vm770, %v725
      %797 = vst.msk [vmem:[#allocation2 + $0x68] sm:$0xf] %vm770, %v727
      %798 = vst.msk [vmem:[#allocation2 + $0x6c] sm:$0xf] %vm770, %v729
      %799 = vst.msk [vmem:[#allocation2 + $0x70] sm:$0xf] %vm770, %v731
      %800 = vst.msk [vmem:[#allocation2 + $0x74] sm:$0xf] %vm770, %v733
      %801 = vst.msk [vmem:[#allocation2 + $0x78] sm:$0xf] %vm770, %v735
      %vm802 = vcmask 60448
      %vm803 = vmand %vm802, %vm352
      %v804 = vld [vmem:[#allocation2 + $0x7c] sm:$0xf]
      %v805 = vsel %vm803, %v737, %v804
      %806 = vst [vmem:[#allocation2 + $0x7c] sm:$0xf] %v805
      %v807 = vld [vmem:[%s214] sm:$0x1]
      %v809 = vshll.u32 %v807, 16
      %v811 = vrot.slane %v809, 5
      %812 = vrot.lane.b32.xlu0 %v811, 4
      %v813 = vpop.permute.xlu0 %812
      %vm815 = vcmask 60451
      %vm816 = vsmask.f32 7950
      %vm817 = vmand %vm815, %vm816
      %v818 = vld [vmem:[#allocation2 + $0x7c] sm:$0x8]
      %v819 = vsel %vm817, %v813, %v818
      %820 = vst [vmem:[#allocation2 + $0x7c] sm:$0x8] %v819
      %v821 = vld [vmem:[%s208] sm:$0xe]
      %v822 = vld [vmem:[%s208 + $0x4] sm:$0xf]
      %v823 = vld [vmem:[%s208 + $0x8] sm:$0xf]
      %v824 = vld [vmem:[%s208 + $0xc] sm:$0xf]
      %v825 = vld [vmem:[%s208 + $0x10] sm:$0xf]
      %v826 = vld [vmem:[%s208 + $0x14] sm:$0xf]
      %v827 = vld [vmem:[%s208 + $0x18] sm:$0xf]
      %v828 = vld [vmem:[%s208 + $0x1c] sm:$0xf]
      %v829 = vld [vmem:[%s208 + $0x20] sm:$0xf]
      %v830 = vld [vmem:[%s208 + $0x24] sm:$0xf]
      %v831 = vld [vmem:[%s208 + $0x28] sm:$0xf]
      %v832 = vld [vmem:[%s208 + $0x2c] sm:$0xf]
      %v833 = vld [vmem:[%s208 + $0x30] sm:$0xf]
      %v834 = vld [vmem:[%s208 + $0x34] sm:$0xf]
      %v835 = vld [vmem:[%s208 + $0x38] sm:$0xf]
      %v836 = vld [vmem:[%s208 + $0x3c] sm:$0xf]
      %v837 = vld [vmem:[%s208 + $0x40] sm:$0xf]
      %v838 = vld [vmem:[%s208 + $0x44] sm:$0xf]
      %v839 = vld [vmem:[%s208 + $0x48] sm:$0xf]
      %v840 = vld [vmem:[%s208 + $0x4c] sm:$0xf]
      %v841 = vld [vmem:[%s208 + $0x50] sm:$0xf]
      %v842 = vld [vmem:[%s208 + $0x54] sm:$0xf]
      %v843 = vld [vmem:[%s208 + $0x58] sm:$0xf]
      %v844 = vld [vmem:[%s208 + $0x5c] sm:$0xf]
      %v845 = vld [vmem:[%s208 + $0x60] sm:$0xf]
      %v846 = vld [vmem:[%s208 + $0x64] sm:$0xf]
      %v847 = vld [vmem:[%s208 + $0x68] sm:$0xf]
      %v848 = vld [vmem:[%s208 + $0x6c] sm:$0xf]
      %v849 = vld [vmem:[%s208 + $0x70] sm:$0xf]
      %v850 = vld [vmem:[%s208 + $0x74] sm:$0xf]
      %v851 = vld [vmem:[%s208 + $0x78] sm:$0xf]
      %v852 = vld [vmem:[%s208 + $0x7c] sm:$0xf]
      %vm885 = vcmask 1042432
      %vm886 = vcmask 1046532
      %vm887 = vmor %vm885, %vm886
      %v888 = vrot.slane %v821, 5
      %v889 = vrot.slane %v888, 4
      %v890 = vrot.slane %v822, 5
      %v891 = vsel %vm887, %v889, %v890
      %v892 = vrot.slane %v890, 4
      %v893 = vrot.slane %v823, 5
      %v894 = vsel %vm887, %v892, %v893
      %v895 = vrot.slane %v893, 4
      %v896 = vrot.slane %v824, 5
      %v897 = vsel %vm887, %v895, %v896
      %v898 = vrot.slane %v896, 4
      %v899 = vrot.slane %v825, 5
      %v900 = vsel %vm887, %v898, %v899
      %v901 = vrot.slane %v899, 4
      %v902 = vrot.slane %v826, 5
      %v903 = vsel %vm887, %v901, %v902
      %v904 = vrot.slane %v902, 4
      %v905 = vrot.slane %v827, 5
      %v906 = vsel %vm887, %v904, %v905
      %v907 = vrot.slane %v905, 4
      %v908 = vrot.slane %v828, 5
      %v909 = vsel %vm887, %v907, %v908
      %v910 = vrot.slane %v908, 4
      %v911 = vrot.slane %v829, 5
      %v912 = vsel %vm887, %v910, %v911
      %v913 = vrot.slane %v911, 4
      %v914 = vrot.slane %v830, 5
      %v915 = vsel %vm887, %v913, %v914
      %v916 = vrot.slane %v914, 4
      %v917 = vrot.slane %v831, 5
      %v918 = vsel %vm887, %v916, %v917
      %v919 = vrot.slane %v917, 4
      %v920 = vrot.slane %v832, 5
      %v921 = vsel %vm887, %v919, %v920
      %v922 = vrot.slane %v920, 4
      %v923 = vrot.slane %v833, 5
      %v924 = vsel %vm887, %v922, %v923
      %v925 = vrot.slane %v923, 4
      %v926 = vrot.slane %v834, 5
      %v927 = vsel %vm887, %v925, %v926
      %v928 = vrot.slane %v926, 4
      %v929 = vrot.slane %v835, 5
      %v930 = vsel %vm887, %v928, %v929
      %v931 = vrot.slane %v929, 4
      %v932 = vrot.slane %v836, 5
      %v933 = vsel %vm887, %v931, %v932
      %v934 = vrot.slane %v932, 4
      %v935 = vrot.slane %v837, 5
      %v936 = vsel %vm887, %v934, %v935
      %v937 = vrot.slane %v935, 4
      %v938 = vrot.slane %v838, 5
      %v939 = vsel %vm887, %v937, %v938
      %v940 = vrot.slane %v938, 4
      %v941 = vrot.slane %v839, 5
      %v942 = vsel %vm887, %v940, %v941
      %v943 = vrot.slane %v941, 4
      %v944 = vrot.slane %v840, 5
      %v945 = vsel %vm887, %v943, %v944
      %v946 = vrot.slane %v944, 4
      %v947 = vrot.slane %v841, 5
      %v948 = vsel %vm887, %v946, %v947
      %v949 = vrot.slane %v947, 4
      %v950 = vrot.slane %v842, 5
      %v951 = vsel %vm887, %v949, %v950
      %v952 = vrot.slane %v950, 4
      %v953 = vrot.slane %v843, 5
      %v954 = vsel %vm887, %v952, %v953
      %v955 = vrot.slane %v953, 4
      %v956 = vrot.slane %v844, 5
      %v957 = vsel %vm887, %v955, %v956
      %v958 = vrot.slane %v956, 4
      %v959 = vrot.slane %v845, 5
      %v960 = vsel %vm887, %v958, %v959
      %v961 = vrot.slane %v959, 4
      %v962 = vrot.slane %v846, 5
      %v963 = vsel %vm887, %v961, %v962
      %v964 = vrot.slane %v962, 4
      %v965 = vrot.slane %v847, 5
      %v966 = vsel %vm887, %v964, %v965
      %v967 = vrot.slane %v965, 4
      %v968 = vrot.slane %v848, 5
      %v969 = vsel %vm887, %v967, %v968
      %v970 = vrot.slane %v968, 4
      %v971 = vrot.slane %v849, 5
      %v972 = vsel %vm887, %v970, %v971
      %v973 = vrot.slane %v971, 4
      %v974 = vrot.slane %v850, 5
      %v975 = vsel %vm887, %v973, %v974
      %v976 = vrot.slane %v974, 4
      %v977 = vrot.slane %v851, 5
      %v978 = vsel %vm887, %v976, %v977
      %v979 = vrot.slane %v977, 4
      %v980 = vrot.slane %v852, 5
      %v981 = vsel %vm887, %v979, %v980
      %v982 = vrot.slane %v980, 4
      %983 = vrot.lane.b32.xlu0 %v891, 8
      %v984 = vpop.permute.xlu0 %983
      %985 = vrot.lane.b32.xlu0 %v894, 8
      %v986 = vpop.permute.xlu0 %985
      %987 = vrot.lane.b32.xlu0 %v897, 8
      %v988 = vpop.permute.xlu0 %987
      %989 = vrot.lane.b32.xlu0 %v900, 8
      %v990 = vpop.permute.xlu0 %989
      %991 = vrot.lane.b32.xlu0 %v903, 8
      %v992 = vpop.permute.xlu0 %991
      %993 = vrot.lane.b32.xlu0 %v906, 8
      %v994 = vpop.permute.xlu0 %993
      %995 = vrot.lane.b32.xlu0 %v909, 8
      %v996 = vpop.permute.xlu0 %995
      %997 = vrot.lane.b32.xlu0 %v912, 8
      %v998 = vpop.permute.xlu0 %997
      %999 = vrot.lane.b32.xlu0 %v915, 8
      %v1000 = vpop.permute.xlu0 %999
      %1001 = vrot.lane.b32.xlu0 %v918, 8
      %v1002 = vpop.permute.xlu0 %1001
      %1003 = vrot.lane.b32.xlu0 %v921, 8
      %v1004 = vpop.permute.xlu0 %1003
      %1005 = vrot.lane.b32.xlu0 %v924, 8
      %v1006 = vpop.permute.xlu0 %1005
      %1007 = vrot.lane.b32.xlu0 %v927, 8
      %v1008 = vpop.permute.xlu0 %1007
      %1009 = vrot.lane.b32.xlu0 %v930, 8
      %v1010 = vpop.permute.xlu0 %1009
      %1011 = vrot.lane.b32.xlu0 %v933, 8
      %v1012 = vpop.permute.xlu0 %1011
      %1013 = vrot.lane.b32.xlu0 %v936, 8
      %v1014 = vpop.permute.xlu0 %1013
      %1015 = vrot.lane.b32.xlu0 %v939, 8
      %v1016 = vpop.permute.xlu0 %1015
      %1017 = vrot.lane.b32.xlu0 %v942, 8
      %v1018 = vpop.permute.xlu0 %1017
      %1019 = vrot.lane.b32.xlu0 %v945, 8
      %v1020 = vpop.permute.xlu0 %1019
      %1021 = vrot.lane.b32.xlu0 %v948, 8
      %v1022 = vpop.permute.xlu0 %1021
      %1023 = vrot.lane.b32.xlu0 %v951, 8
      %v1024 = vpop.permute.xlu0 %1023
      %1025 = vrot.lane.b32.xlu0 %v954, 8
      %v1026 = vpop.permute.xlu0 %1025
      %1027 = vrot.lane.b32.xlu0 %v957, 8
      %v1028 = vpop.permute.xlu0 %1027
      %1029 = vrot.lane.b32.xlu0 %v960, 8
      %v1030 = vpop.permute.xlu0 %1029
      %1031 = vrot.lane.b32.xlu0 %v963, 8
      %v1032 = vpop.permute.xlu0 %1031
      %1033 = vrot.lane.b32.xlu0 %v966, 8
      %v1034 = vpop.permute.xlu0 %1033
      %1035 = vrot.lane.b32.xlu0 %v969, 8
      %v1036 = vpop.permute.xlu0 %1035
      %1037 = vrot.lane.b32.xlu0 %v972, 8
      %v1038 = vpop.permute.xlu0 %1037
      %1039 = vrot.lane.b32.xlu0 %v975, 8
      %v1040 = vpop.permute.xlu0 %1039
      %1041 = vrot.lane.b32.xlu0 %v978, 8
      %v1042 = vpop.permute.xlu0 %1041
      %1043 = vrot.lane.b32.xlu0 %v981, 8
      %v1044 = vpop.permute.xlu0 %1043
      %1045 = vrot.lane.b32.xlu0 %v982, 8
      %v1046 = vpop.permute.xlu0 %1045
      %vm1079 = vcmask 93248
      %1080 = vst.msk [vmem:[#allocation2] sm:$0xf] %vm1079, %v984
      %1081 = vst.msk [vmem:[#allocation2 + $0x4] sm:$0xf] %vm1079, %v986
      %1082 = vst.msk [vmem:[#allocation2 + $0x8] sm:$0xf] %vm1079, %v988
      %1083 = vst.msk [vmem:[#allocation2 + $0xc] sm:$0xf] %vm1079, %v990
      %1084 = vst.msk [vmem:[#allocation2 + $0x10] sm:$0xf] %vm1079, %v992
      %1085 = vst.msk [vmem:[#allocation2 + $0x14] sm:$0xf] %vm1079, %v994
      %1086 = vst.msk [vmem:[#allocation2 + $0x18] sm:$0xf] %vm1079, %v996
      %1087 = vst.msk [vmem:[#allocation2 + $0x1c] sm:$0xf] %vm1079, %v998
      %1088 = vst.msk [vmem:[#allocation2 + $0x20] sm:$0xf] %vm1079, %v1000
      %1089 = vst.msk [vmem:[#allocation2 + $0x24] sm:$0xf] %vm1079, %v1002
      %1090 = vst.msk [vmem:[#allocation2 + $0x28] sm:$0xf] %vm1079, %v1004
      %1091 = vst.msk [vmem:[#allocation2 + $0x2c] sm:$0xf] %vm1079, %v1006
      %1092 = vst.msk [vmem:[#allocation2 + $0x30] sm:$0xf] %vm1079, %v1008
      %1093 = vst.msk [vmem:[#allocation2 + $0x34] sm:$0xf] %vm1079, %v1010
      %1094 = vst.msk [vmem:[#allocation2 + $0x38] sm:$0xf] %vm1079, %v1012
      %1095 = vst.msk [vmem:[#allocation2 + $0x3c] sm:$0xf] %vm1079, %v1014
      %1096 = vst.msk [vmem:[#allocation2 + $0x40] sm:$0xf] %vm1079, %v1016
      %1097 = vst.msk [vmem:[#allocation2 + $0x44] sm:$0xf] %vm1079, %v1018
      %1098 = vst.msk [vmem:[#allocation2 + $0x48] sm:$0xf] %vm1079, %v1020
      %1099 = vst.msk [vmem:[#allocation2 + $0x4c] sm:$0xf] %vm1079, %v1022
      %1100 = vst.msk [vmem:[#allocation2 + $0x50] sm:$0xf] %vm1079, %v1024
      %1101 = vst.msk [vmem:[#allocation2 + $0x54] sm:$0xf] %vm1079, %v1026
      %1102 = vst.msk [vmem:[#allocation2 + $0x58] sm:$0xf] %vm1079, %v1028
      %1103 = vst.msk [vmem:[#allocation2 + $0x5c] sm:$0xf] %vm1079, %v1030
      %1104 = vst.msk [vmem:[#allocation2 + $0x60] sm:$0xf] %vm1079, %v1032
      %1105 = vst.msk [vmem:[#allocation2 + $0x64] sm:$0xf] %vm1079, %v1034
      %1106 = vst.msk [vmem:[#allocation2 + $0x68] sm:$0xf] %vm1079, %v1036
      %1107 = vst.msk [vmem:[#allocation2 + $0x6c] sm:$0xf] %vm1079, %v1038
      %1108 = vst.msk [vmem:[#allocation2 + $0x70] sm:$0xf] %vm1079, %v1040
      %1109 = vst.msk [vmem:[#allocation2 + $0x74] sm:$0xf] %vm1079, %v1042
      %1110 = vst.msk [vmem:[#allocation2 + $0x78] sm:$0xf] %vm1079, %v1044
      %vm1111 = vcmask 92224
      %1112 = vst.msk [vmem:[#allocation2 + $0x7c] sm:$0x7] %vm1111, %v1046
      %v1113 = vld [vmem:[%s214] sm:$0x1]
      %v1115 = vrot.slane %v1113, 5
      %1116 = vrot.lane.b32.xlu0 %v1115, 8
      %v1117 = vpop.permute.xlu0 %1116
      %vm1119 = vcmask 93251
      %1120 = vst.msk [vmem:[#allocation2 + $0x7c] sm:$0x8] %vm1119, %v1117
      %v1121 = vld [vmem:[%s208 + $0x8] sm:$0xf]
      %v1122 = vld [vmem:[%s208 + $0xc] sm:$0xf]
      %v1123 = vld [vmem:[%s208 + $0x10] sm:$0xf]
      %v1124 = vld [vmem:[%s208 + $0x14] sm:$0xf]
      %v1125 = vld [vmem:[%s208 + $0x18] sm:$0xf]
      %v1126 = vld [vmem:[%s208 + $0x1c] sm:$0xf]
      %v1127 = vld [vmem:[%s208 + $0x20] sm:$0xf]
      %v1128 = vld [vmem:[%s208 + $0x24] sm:$0xf]
      %v1129 = vld [vmem:[%s208 + $0x28] sm:$0xf]
      %v1130 = vld [vmem:[%s208 + $0x2c] sm:$0xf]
      %v1131 = vld [vmem:[%s208 + $0x30] sm:$0xf]
      %v1132 = vld [vmem:[%s208 + $0x34] sm:$0xf]
      %v1133 = vld [vmem:[%s208 + $0x38] sm:$0xf]
      %v1134 = vld [vmem:[%s208 + $0x3c] sm:$0xf]
      %v1135 = vld [vmem:[%s208 + $0x40] sm:$0xf]
      %v1136 = vld [vmem:[%s208 + $0x44] sm:$0xf]
      %v1137 = vld [vmem:[%s208 + $0x48] sm:$0xf]
      %v1138 = vld [vmem:[%s208 + $0x4c] sm:$0xf]
      %v1139 = vld [vmem:[%s208 + $0x50] sm:$0xf]
      %v1140 = vld [vmem:[%s208 + $0x54] sm:$0xf]
      %v1141 = vld [vmem:[%s208 + $0x58] sm:$0xf]
      %v1142 = vld [vmem:[%s208 + $0x5c] sm:$0xf]
      %v1143 = vld [vmem:[%s208 + $0x60] sm:$0xf]
      %v1144 = vld [vmem:[%s208 + $0x64] sm:$0xf]
      %v1145 = vld [vmem:[%s208 + $0x68] sm:$0xf]
      %v1146 = vld [vmem:[%s208 + $0x6c] sm:$0xf]
      %v1147 = vld [vmem:[%s208 + $0x70] sm:$0xf]
      %v1148 = vld [vmem:[%s208 + $0x74] sm:$0xf]
      %v1149 = vld [vmem:[%s208 + $0x78] sm:$0xf]
      %v1150 = vld [vmem:[%s208 + $0x7c] sm:$0xf]
      %1181 = vrot.lane.b32.xlu0 %v1121, 12
      %v1182 = vpop.permute.xlu0 %1181
      %1183 = vrot.lane.b32.xlu0 %v1122, 12
      %v1184 = vpop.permute.xlu0 %1183
      %1185 = vrot.lane.b32.xlu0 %v1123, 12
      %v1186 = vpop.permute.xlu0 %1185
      %1187 = vrot.lane.b32.xlu0 %v1124, 12
      %v1188 = vpop.permute.xlu0 %1187
      %1189 = vrot.lane.b32.xlu0 %v1125, 12
      %v1190 = vpop.permute.xlu0 %1189
      %1191 = vrot.lane.b32.xlu0 %v1126, 12
      %v1192 = vpop.permute.xlu0 %1191
      %1193 = vrot.lane.b32.xlu0 %v1127, 12
      %v1194 = vpop.permute.xlu0 %1193
      %1195 = vrot.lane.b32.xlu0 %v1128, 12
      %v1196 = vpop.permute.xlu0 %1195
      %1197 = vrot.lane.b32.xlu0 %v1129, 12
      %v1198 = vpop.permute.xlu0 %1197
      %1199 = vrot.lane.b32.xlu0 %v1130, 12
      %v1200 = vpop.permute.xlu0 %1199
      %1201 = vrot.lane.b32.xlu0 %v1131, 12
      %v1202 = vpop.permute.xlu0 %1201
      %1203 = vrot.lane.b32.xlu0 %v1132, 12
      %v1204 = vpop.permute.xlu0 %1203
      %1205 = vrot.lane.b32.xlu0 %v1133, 12
      %v1206 = vpop.permute.xlu0 %1205
      %1207 = vrot.lane.b32.xlu0 %v1134, 12
      %v1208 = vpop.permute.xlu0 %1207
      %1209 = vrot.lane.b32.xlu0 %v1135, 12
      %v1210 = vpop.permute.xlu0 %1209
      %1211 = vrot.lane.b32.xlu0 %v1136, 12
      %v1212 = vpop.permute.xlu0 %1211
      %1213 = vrot.lane.b32.xlu0 %v1137, 12
      %v1214 = vpop.permute.xlu0 %1213
      %1215 = vrot.lane.b32.xlu0 %v1138, 12
      %v1216 = vpop.permute.xlu0 %1215
      %1217 = vrot.lane.b32.xlu0 %v1139, 12
      %v1218 = vpop.permute.xlu0 %1217
      %1219 = vrot.lane.b32.xlu0 %v1140, 12
      %v1220 = vpop.permute.xlu0 %1219
      %1221 = vrot.lane.b32.xlu0 %v1141, 12
      %v1222 = vpop.permute.xlu0 %1221
      %1223 = vrot.lane.b32.xlu0 %v1142, 12
      %v1224 = vpop.permute.xlu0 %1223
      %1225 = vrot.lane.b32.xlu0 %v1143, 12
      %v1226 = vpop.permute.xlu0 %1225
      %1227 = vrot.lane.b32.xlu0 %v1144, 12
      %v1228 = vpop.permute.xlu0 %1227
      %1229 = vrot.lane.b32.xlu0 %v1145, 12
      %v1230 = vpop.permute.xlu0 %1229
      %1231 = vrot.lane.b32.xlu0 %v1146, 12
      %v1232 = vpop.permute.xlu0 %1231
      %1233 = vrot.lane.b32.xlu0 %v1147, 12
      %v1234 = vpop.permute.xlu0 %1233
      %1235 = vrot.lane.b32.xlu0 %v1148, 12
      %v1236 = vpop.permute.xlu0 %1235
      %1237 = vrot.lane.b32.xlu0 %v1149, 12
      %v1238 = vpop.permute.xlu0 %1237
      %1239 = vrot.lane.b32.xlu0 %v1150, 12
      %v1240 = vpop.permute.xlu0 %1239
      %vm1271 = vcmask 126048
      %1272 = vst.msk [vmem:[#allocation2] sm:$0xf] %vm1271, %v1182
      %1273 = vst.msk [vmem:[#allocation2 + $0x4] sm:$0xf] %vm1271, %v1184
      %1274 = vst.msk [vmem:[#allocation2 + $0x8] sm:$0xf] %vm1271, %v1186
      %1275 = vst.msk [vmem:[#allocation2 + $0xc] sm:$0xf] %vm1271, %v1188
      %1276 = vst.msk [vmem:[#allocation2 + $0x10] sm:$0xf] %vm1271, %v1190
      %1277 = vst.msk [vmem:[#allocation2 + $0x14] sm:$0xf] %vm1271, %v1192
      %1278 = vst.msk [vmem:[#allocation2 + $0x18] sm:$0xf] %vm1271, %v1194
      %1279 = vst.msk [vmem:[#allocation2 + $0x1c] sm:$0xf] %vm1271, %v1196
      %1280 = vst.msk [vmem:[#allocation2 + $0x20] sm:$0xf] %vm1271, %v1198
      %1281 = vst.msk [vmem:[#allocation2 + $0x24] sm:$0xf] %vm1271, %v1200
      %1282 = vst.msk [vmem:[#allocation2 + $0x28] sm:$0xf] %vm1271, %v1202
      %1283 = vst.msk [vmem:[#allocation2 + $0x2c] sm:$0xf] %vm1271, %v1204
      %1284 = vst.msk [vmem:[#allocation2 + $0x30] sm:$0xf] %vm1271, %v1206
      %1285 = vst.msk [vmem:[#allocation2 + $0x34] sm:$0xf] %vm1271, %v1208
      %1286 = vst.msk [vmem:[#allocation2 + $0x38] sm:$0xf] %vm1271, %v1210
      %1287 = vst.msk [vmem:[#allocation2 + $0x3c] sm:$0xf] %vm1271, %v1212
      %1288 = vst.msk [vmem:[#allocation2 + $0x40] sm:$0xf] %vm1271, %v1214
      %1289 = vst.msk [vmem:[#allocation2 + $0x44] sm:$0xf] %vm1271, %v1216
      %1290 = vst.msk [vmem:[#allocation2 + $0x48] sm:$0xf] %vm1271, %v1218
      %1291 = vst.msk [vmem:[#allocation2 + $0x4c] sm:$0xf] %vm1271, %v1220
      %1292 = vst.msk [vmem:[#allocation2 + $0x50] sm:$0xf] %vm1271, %v1222
      %1293 = vst.msk [vmem:[#allocation2 + $0x54] sm:$0xf] %vm1271, %v1224
      %1294 = vst.msk [vmem:[#allocation2 + $0x58] sm:$0xf] %vm1271, %v1226
      %1295 = vst.msk [vmem:[#allocation2 + $0x5c] sm:$0xf] %vm1271, %v1228
      %1296 = vst.msk [vmem:[#allocation2 + $0x60] sm:$0xf] %vm1271, %v1230
      %1297 = vst.msk [vmem:[#allocation2 + $0x64] sm:$0xf] %vm1271, %v1232
      %1298 = vst.msk [vmem:[#allocation2 + $0x68] sm:$0xf] %vm1271, %v1234
      %1299 = vst.msk [vmem:[#allocation2 + $0x6c] sm:$0xf] %vm1271, %v1236
      %1300 = vst.msk [vmem:[#allocation2 + $0x70] sm:$0xf] %vm1271, %v1238
      %1301 = vst.msk [vmem:[#allocation2 + $0x74] sm:$0xf] %vm1271, %v1240
      %v1302 = vld [vmem:[%s214] sm:$0xf]
      %v1303 = vld [vmem:[%s214 + $0x4] sm:$0xf]
      %1306 = vrot.lane.b32.xlu0 %v1302, 12
      %v1307 = vpop.permute.xlu0 %1306
      %1308 = vrot.lane.b32.xlu0 %v1303, 12
      %v1309 = vpop.permute.xlu0 %1308
      %1312 = vst.msk [vmem:[#allocation2 + $0x78] sm:$0xf] %vm1271, %v1307
      %1313 = vst.msk [vmem:[#allocation2 + $0x7c] sm:$0xf] %vm1271, %v1309
      %v1314 = vld [vmem:[%s208 + $0x8] sm:$0xf]
      %v1315 = vld [vmem:[%s208 + $0xc] sm:$0xf]
      %v1316 = vld [vmem:[%s208 + $0x10] sm:$0xf]
      %v1317 = vld [vmem:[%s208 + $0x14] sm:$0xf]
      %v1318 = vld [vmem:[%s208 + $0x18] sm:$0xf]
      %v1319 = vld [vmem:[%s208 + $0x1c] sm:$0xf]
      %v1320 = vld [vmem:[%s208 + $0x20] sm:$0xf]
      %v1321 = vld [vmem:[%s208 + $0x24] sm:$0xf]
      %v1322 = vld [vmem:[%s208 + $0x28] sm:$0xf]
      %v1323 = vld [vmem:[%s208 + $0x2c] sm:$0xf]
      %v1324 = vld [vmem:[%s208 + $0x30] sm:$0xf]
      %v1325 = vld [vmem:[%s208 + $0x34] sm:$0xf]
      %v1326 = vld [vmem:[%s208 + $0x38] sm:$0xf]
      %v1327 = vld [vmem:[%s208 + $0x3c] sm:$0xf]
      %v1328 = vld [vmem:[%s208 + $0x40] sm:$0xf]
      %v1329 = vld [vmem:[%s208 + $0x44] sm:$0xf]
      %v1330 = vld [vmem:[%s208 + $0x48] sm:$0xf]
      %v1331 = vld [vmem:[%s208 + $0x4c] sm:$0xf]
      %v1332 = vld [vmem:[%s208 + $0x50] sm:$0xf]
      %v1333 = vld [vmem:[%s208 + $0x54] sm:$0xf]
      %v1334 = vld [vmem:[%s208 + $0x58] sm:$0xf]
      %v1335 = vld [vmem:[%s208 + $0x5c] sm:$0xf]
      %v1336 = vld [vmem:[%s208 + $0x60] sm:$0xf]
      %v1337 = vld [vmem:[%s208 + $0x64] sm:$0xf]
      %v1338 = vld [vmem:[%s208 + $0x68] sm:$0xf]
      %v1339 = vld [vmem:[%s208 + $0x6c] sm:$0xf]
      %v1340 = vld [vmem:[%s208 + $0x70] sm:$0xf]
      %v1341 = vld [vmem:[%s208 + $0x74] sm:$0xf]
      %v1342 = vld [vmem:[%s208 + $0x78] sm:$0xf]
      %v1343 = vld [vmem:[%s208 + $0x7c] sm:$0xf]
      %v1345 = vshrl.u32 %v1314, 16
      %v1347 = vrot.slane %v1345, 4
      %v1348 = vshll.u32 %v1314, 16
      %v1350 = vrot.slane %v1348, 5
      %v1351 = vor.u32 %v1347, %v1350
      %v1352 = vrot.slane %v1351, 4
      %v1354 = vshll.u32 %v1315, 16
      %v1356 = vrot.slane %v1354, 5
      %v1357 = vsel %vm354, %v1352, %v1356
      %v1358 = vshrl.u32 %v1315, 16
      %v1360 = vrot.slane %v1358, 4
      %v1361 = vor.u32 %v1360, %v1356
      %v1362 = vrot.slane %v1361, 4
      %v1364 = vshll.u32 %v1316, 16
      %v1366 = vrot.slane %v1364, 5
      %v1367 = vsel %vm354, %v1362, %v1366
      %v1368 = vshrl.u32 %v1316, 16
      %v1370 = vrot.slane %v1368, 4
      %v1371 = vor.u32 %v1370, %v1366
      %v1372 = vrot.slane %v1371, 4
      %v1374 = vshll.u32 %v1317, 16
      %v1376 = vrot.slane %v1374, 5
      %v1377 = vsel %vm354, %v1372, %v1376
      %v1378 = vshrl.u32 %v1317, 16
      %v1380 = vrot.slane %v1378, 4
      %v1381 = vor.u32 %v1380, %v1376
      %v1382 = vrot.slane %v1381, 4
      %v1384 = vshll.u32 %v1318, 16
      %v1386 = vrot.slane %v1384, 5
      %v1387 = vsel %vm354, %v1382, %v1386
      %v1388 = vshrl.u32 %v1318, 16
      %v1390 = vrot.slane %v1388, 4
      %v1391 = vor.u32 %v1390, %v1386
      %v1392 = vrot.slane %v1391, 4
      %v1394 = vshll.u32 %v1319, 16
      %v1396 = vrot.slane %v1394, 5
      %v1397 = vsel %vm354, %v1392, %v1396
      %v1398 = vshrl.u32 %v1319, 16
      %v1400 = vrot.slane %v1398, 4
      %v1401 = vor.u32 %v1400, %v1396
      %v1402 = vrot.slane %v1401, 4
      %v1404 = vshll.u32 %v1320, 16
      %v1406 = vrot.slane %v1404, 5
      %v1407 = vsel %vm354, %v1402, %v1406
      %v1408 = vshrl.u32 %v1320, 16
      %v1410 = vrot.slane %v1408, 4
      %v1411 = vor.u32 %v1410, %v1406
      %v1412 = vrot.slane %v1411, 4
      %v1414 = vshll.u32 %v1321, 16
      %v1416 = vrot.slane %v1414, 5
      %v1417 = vsel %vm354, %v1412, %v1416
      %v1418 = vshrl.u32 %v1321, 16
      %v1420 = vrot.slane %v1418, 4
      %v1421 = vor.u32 %v1420, %v1416
      %v1422 = vrot.slane %v1421, 4
      %v1424 = vshll.u32 %v1322, 16
      %v1426 = vrot.slane %v1424, 5
      %v1427 = vsel %vm354, %v1422, %v1426
      %v1428 = vshrl.u32 %v1322, 16
      %v1430 = vrot.slane %v1428, 4
      %v1431 = vor.u32 %v1430, %v1426
      %v1432 = vrot.slane %v1431, 4
      %v1434 = vshll.u32 %v1323, 16
      %v1436 = vrot.slane %v1434, 5
      %v1437 = vsel %vm354, %v1432, %v1436
      %v1438 = vshrl.u32 %v1323, 16
      %v1440 = vrot.slane %v1438, 4
      %v1441 = vor.u32 %v1440, %v1436
      %v1442 = vrot.slane %v1441, 4
      %v1444 = vshll.u32 %v1324, 16
      %v1446 = vrot.slane %v1444, 5
      %v1447 = vsel %vm354, %v1442, %v1446
      %v1448 = vshrl.u32 %v1324, 16
      %v1450 = vrot.slane %v1448, 4
      %v1451 = vor.u32 %v1450, %v1446
      %v1452 = vrot.slane %v1451, 4
      %v1454 = vshll.u32 %v1325, 16
      %v1456 = vrot.slane %v1454, 5
      %v1457 = vsel %vm354, %v1452, %v1456
      %v1458 = vshrl.u32 %v1325, 16
      %v1460 = vrot.slane %v1458, 4
      %v1461 = vor.u32 %v1460, %v1456
      %v1462 = vrot.slane %v1461, 4
      %v1464 = vshll.u32 %v1326, 16
      %v1466 = vrot.slane %v1464, 5
      %v1467 = vsel %vm354, %v1462, %v1466
      %v1468 = vshrl.u32 %v1326, 16
      %v1470 = vrot.slane %v1468, 4
      %v1471 = vor.u32 %v1470, %v1466
      %v1472 = vrot.slane %v1471, 4
      %v1474 = vshll.u32 %v1327, 16
      %v1476 = vrot.slane %v1474, 5
      %v1477 = vsel %vm354, %v1472, %v1476
      %v1478 = vshrl.u32 %v1327, 16
      %v1480 = vrot.slane %v1478, 4
      %v1481 = vor.u32 %v1480, %v1476
      %v1482 = vrot.slane %v1481, 4
      %v1484 = vshll.u32 %v1328, 16
      %v1486 = vrot.slane %v1484, 5
      %v1487 = vsel %vm354, %v1482, %v1486
      %v1488 = vshrl.u32 %v1328, 16
      %v1490 = vrot.slane %v1488, 4
      %v1491 = vor.u32 %v1490, %v1486
      %v1492 = vrot.slane %v1491, 4
      %v1494 = vshll.u32 %v1329, 16
      %v1496 = vrot.slane %v1494, 5
      %v1497 = vsel %vm354, %v1492, %v1496
      %v1498 = vshrl.u32 %v1329, 16
      %v1500 = vrot.slane %v1498, 4
      %v1501 = vor.u32 %v1500, %v1496
      %v1502 = vrot.slane %v1501, 4
      %v1504 = vshll.u32 %v1330, 16
      %v1506 = vrot.slane %v1504, 5
      %v1507 = vsel %vm354, %v1502, %v1506
      %v1508 = vshrl.u32 %v1330, 16
      %v1510 = vrot.slane %v1508, 4
      %v1511 = vor.u32 %v1510, %v1506
      %v1512 = vrot.slane %v1511, 4
      %v1514 = vshll.u32 %v1331, 16
      %v1516 = vrot.slane %v1514, 5
      %v1517 = vsel %vm354, %v1512, %v1516
      %v1518 = vshrl.u32 %v1331, 16
      %v1520 = vrot.slane %v1518, 4
      %v1521 = vor.u32 %v1520, %v1516
      %v1522 = vrot.slane %v1521, 4
      %v1524 = vshll.u32 %v1332, 16
      %v1526 = vrot.slane %v1524, 5
      %v1527 = vsel %vm354, %v1522, %v1526
      %v1528 = vshrl.u32 %v1332, 16
      %v1530 = vrot.slane %v1528, 4
      %v1531 = vor.u32 %v1530, %v1526
      %v1532 = vrot.slane %v1531, 4
      %v1534 = vshll.u32 %v1333, 16
      %v1536 = vrot.slane %v1534, 5
      %v1537 = vsel %vm354, %v1532, %v1536
      %v1538 = vshrl.u32 %v1333, 16
      %v1540 = vrot.slane %v1538, 4
      %v1541 = vor.u32 %v1540, %v1536
      %v1542 = vrot.slane %v1541, 4
      %v1544 = vshll.u32 %v1334, 16
      %v1546 = vrot.slane %v1544, 5
      %v1547 = vsel %vm354, %v1542, %v1546
      %v1548 = vshrl.u32 %v1334, 16
      %v1550 = vrot.slane %v1548, 4
      %v1551 = vor.u32 %v1550, %v1546
      %v1552 = vrot.slane %v1551, 4
      %v1554 = vshll.u32 %v1335, 16
      %v1556 = vrot.slane %v1554, 5
      %v1557 = vsel %vm354, %v1552, %v1556
      %v1558 = vshrl.u32 %v1335, 16
      %v1560 = vrot.slane %v1558, 4
      %v1561 = vor.u32 %v1560, %v1556
      %v1562 = vrot.slane %v1561, 4
      %v1564 = vshll.u32 %v1336, 16
      %v1566 = vrot.slane %v1564, 5
      %v1567 = vsel %vm354, %v1562, %v1566
      %v1568 = vshrl.u32 %v1336, 16
      %v1570 = vrot.slane %v1568, 4
      %v1571 = vor.u32 %v1570, %v1566
      %v1572 = vrot.slane %v1571, 4
      %v1574 = vshll.u32 %v1337, 16
      %v1576 = vrot.slane %v1574, 5
      %v1577 = vsel %vm354, %v1572, %v1576
      %v1578 = vshrl.u32 %v1337, 16
      %v1580 = vrot.slane %v1578, 4
      %v1581 = vor.u32 %v1580, %v1576
      %v1582 = vrot.slane %v1581, 4
      %v1584 = vshll.u32 %v1338, 16
      %v1586 = vrot.slane %v1584, 5
      %v1587 = vsel %vm354, %v1582, %v1586
      %v1588 = vshrl.u32 %v1338, 16
      %v1590 = vrot.slane %v1588, 4
      %v1591 = vor.u32 %v1590, %v1586
      %v1592 = vrot.slane %v1591, 4
      %v1594 = vshll.u32 %v1339, 16
      %v1596 = vrot.slane %v1594, 5
      %v1597 = vsel %vm354, %v1592, %v1596
      %v1598 = vshrl.u32 %v1339, 16
      %v1600 = vrot.slane %v1598, 4
      %v1601 = vor.u32 %v1600, %v1596
      %v1602 = vrot.slane %v1601, 4
      %v1604 = vshll.u32 %v1340, 16
      %v1606 = vrot.slane %v1604, 5
      %v1607 = vsel %vm354, %v1602, %v1606
      %v1608 = vshrl.u32 %v1340, 16
      %v1610 = vrot.slane %v1608, 4
      %v1611 = vor.u32 %v1610, %v1606
      %v1612 = vrot.slane %v1611, 4
      %v1614 = vshll.u32 %v1341, 16
      %v1616 = vrot.slane %v1614, 5
      %v1617 = vsel %vm354, %v1612, %v1616
      %v1618 = vshrl.u32 %v1341, 16
      %v1620 = vrot.slane %v1618, 4
      %v1621 = vor.u32 %v1620, %v1616
      %v1622 = vrot.slane %v1621, 4
      %v1624 = vshll.u32 %v1342, 16
      %v1626 = vrot.slane %v1624, 5
      %v1627 = vsel %vm354, %v1622, %v1626
      %v1628 = vshrl.u32 %v1342, 16
      %v1630 = vrot.slane %v1628, 4
      %v1631 = vor.u32 %v1630, %v1626
      %v1632 = vrot.slane %v1631, 4
      %v1634 = vshll.u32 %v1343, 16
      %v1636 = vrot.slane %v1634, 5
      %v1637 = vsel %vm354, %v1632, %v1636
      %v1638 = vshrl.u32 %v1343, 16
      %v1640 = vrot.slane %v1638, 4
      %v1641 = vor.u32 %v1640, %v1636
      %v1642 = vrot.slane %v1641, 4
      %1643 = vrot.lane.b32.xlu0 %v1357, 16
      %v1644 = vpop.permute.xlu0 %1643
      %1645 = vrot.lane.b32.xlu0 %v1367, 16
      %v1646 = vpop.permute.xlu0 %1645
      %1647 = vrot.lane.b32.xlu0 %v1377, 16
      %v1648 = vpop.permute.xlu0 %1647
      %1649 = vrot.lane.b32.xlu0 %v1387, 16
      %v1650 = vpop.permute.xlu0 %1649
      %1651 = vrot.lane.b32.xlu0 %v1397, 16
      %v1652 = vpop.permute.xlu0 %1651
      %1653 = vrot.lane.b32.xlu0 %v1407, 16
      %v1654 = vpop.permute.xlu0 %1653
      %1655 = vrot.lane.b32.xlu0 %v1417, 16
      %v1656 = vpop.permute.xlu0 %1655
      %1657 = vrot.lane.b32.xlu0 %v1427, 16
      %v1658 = vpop.permute.xlu0 %1657
      %1659 = vrot.lane.b32.xlu0 %v1437, 16
      %v1660 = vpop.permute.xlu0 %1659
      %1661 = vrot.lane.b32.xlu0 %v1447, 16
      %v1662 = vpop.permute.xlu0 %1661
      %1663 = vrot.lane.b32.xlu0 %v1457, 16
      %v1664 = vpop.permute.xlu0 %1663
      %1665 = vrot.lane.b32.xlu0 %v1467, 16
      %v1666 = vpop.permute.xlu0 %1665
      %1667 = vrot.lane.b32.xlu0 %v1477, 16
      %v1668 = vpop.permute.xlu0 %1667
      %1669 = vrot.lane.b32.xlu0 %v1487, 16
      %v1670 = vpop.permute.xlu0 %1669
      %1671 = vrot.lane.b32.xlu0 %v1497, 16
      %v1672 = vpop.permute.xlu0 %1671
      %1673 = vrot.lane.b32.xlu0 %v1507, 16
      %v1674 = vpop.permute.xlu0 %1673
      %1675 = vrot.lane.b32.xlu0 %v1517, 16
      %v1676 = vpop.permute.xlu0 %1675
      %1677 = vrot.lane.b32.xlu0 %v1527, 16
      %v1678 = vpop.permute.xlu0 %1677
      %1679 = vrot.lane.b32.xlu0 %v1537, 16
      %v1680 = vpop.permute.xlu0 %1679
      %1681 = vrot.lane.b32.xlu0 %v1547, 16
      %v1682 = vpop.permute.xlu0 %1681
      %1683 = vrot.lane.b32.xlu0 %v1557, 16
      %v1684 = vpop.permute.xlu0 %1683
      %1685 = vrot.lane.b32.xlu0 %v1567, 16
      %v1686 = vpop.permute.xlu0 %1685
      %1687 = vrot.lane.b32.xlu0 %v1577, 16
      %v1688 = vpop.permute.xlu0 %1687
      %1689 = vrot.lane.b32.xlu0 %v1587, 16
      %v1690 = vpop.permute.xlu0 %1689
      %1691 = vrot.lane.b32.xlu0 %v1597, 16
      %v1692 = vpop.permute.xlu0 %1691
      %1693 = vrot.lane.b32.xlu0 %v1607, 16
      %v1694 = vpop.permute.xlu0 %1693
      %1695 = vrot.lane.b32.xlu0 %v1617, 16
      %v1696 = vpop.permute.xlu0 %1695
      %1697 = vrot.lane.b32.xlu0 %v1627, 16
      %v1698 = vpop.permute.xlu0 %1697
      %1699 = vrot.lane.b32.xlu0 %v1637, 16
      %v1700 = vpop.permute.xlu0 %1699
      %1701 = vrot.lane.b32.xlu0 %v1642, 16
      %v1702 = vpop.permute.xlu0 %1701
      %vm1733 = vcmask 158848
      %1734 = vst.msk [vmem:[#allocation2] sm:$0xf] %vm1733, %v1644
      %1735 = vst.msk [vmem:[#allocation2 + $0x4] sm:$0xf] %vm1733, %v1646
      %1736 = vst.msk [vmem:[#allocation2 + $0x8] sm:$0xf] %vm1733, %v1648
      %1737 = vst.msk [vmem:[#allocation2 + $0xc] sm:$0xf] %vm1733, %v1650
      %1738 = vst.msk [vmem:[#allocation2 + $0x10] sm:$0xf] %vm1733, %v1652
      %1739 = vst.msk [vmem:[#allocation2 + $0x14] sm:$0xf] %vm1733, %v1654
      %1740 = vst.msk [vmem:[#allocation2 + $0x18] sm:$0xf] %vm1733, %v1656
      %1741 = vst.msk [vmem:[#allocation2 + $0x1c] sm:$0xf] %vm1733, %v1658
      %1742 = vst.msk [vmem:[#allocation2 + $0x20] sm:$0xf] %vm1733, %v1660
      %1743 = vst.msk [vmem:[#allocation2 + $0x24] sm:$0xf] %vm1733, %v1662
      %1744 = vst.msk [vmem:[#allocation2 + $0x28] sm:$0xf] %vm1733, %v1664
      %1745 = vst.msk [vmem:[#allocation2 + $0x2c] sm:$0xf] %vm1733, %v1666
      %1746 = vst.msk [vmem:[#allocation2 + $0x30] sm:$0xf] %vm1733, %v1668
      %1747 = vst.msk [vmem:[#allocation2 + $0x34] sm:$0xf] %vm1733, %v1670
      %1748 = vst.msk [vmem:[#allocation2 + $0x38] sm:$0xf] %vm1733, %v1672
      %1749 = vst.msk [vmem:[#allocation2 + $0x3c] sm:$0xf] %vm1733, %v1674
      %1750 = vst.msk [vmem:[#allocation2 + $0x40] sm:$0xf] %vm1733, %v1676
      %1751 = vst.msk [vmem:[#allocation2 + $0x44] sm:$0xf] %vm1733, %v1678
      %1752 = vst.msk [vmem:[#allocation2 + $0x48] sm:$0xf] %vm1733, %v1680
      %1753 = vst.msk [vmem:[#allocation2 + $0x4c] sm:$0xf] %vm1733, %v1682
      %1754 = vst.msk [vmem:[#allocation2 + $0x50] sm:$0xf] %vm1733, %v1684
      %1755 = vst.msk [vmem:[#allocation2 + $0x54] sm:$0xf] %vm1733, %v1686
      %1756 = vst.msk [vmem:[#allocation2 + $0x58] sm:$0xf] %vm1733, %v1688
      %1757 = vst.msk [vmem:[#allocation2 + $0x5c] sm:$0xf] %vm1733, %v1690
      %1758 = vst.msk [vmem:[#allocation2 + $0x60] sm:$0xf] %vm1733, %v1692
      %1759 = vst.msk [vmem:[#allocation2 + $0x64] sm:$0xf] %vm1733, %v1694
      %1760 = vst.msk [vmem:[#allocation2 + $0x68] sm:$0xf] %vm1733, %v1696
      %1761 = vst.msk [vmem:[#allocation2 + $0x6c] sm:$0xf] %vm1733, %v1698
      %1762 = vst.msk [vmem:[#allocation2 + $0x70] sm:$0xf] %vm1733, %v1700
      %vm1763 = vcmask 158848
      %vm1764 = vmand %vm1763, %vm352
      %v1765 = vld [vmem:[#allocation2 + $0x74] sm:$0xf]
      %v1766 = vsel %vm1764, %v1702, %v1765
      %1767 = vst [vmem:[#allocation2 + $0x74] sm:$0xf] %v1766
      %v1768 = vld [vmem:[%s214] sm:$0xf]
      %v1769 = vld [vmem:[%s214 + $0x4] sm:$0xf]
      %v1770 = vld [vmem:[%s214 + $0x8] sm:$0x1]
      %v1772 = vshll.u32 %v1768, 16
      %v1774 = vrot.slane %v1772, 5
      %v1775 = vshrl.u32 %v1768, 16
      %v1777 = vrot.slane %v1775, 4
      %v1778 = vor.u32 %v1777, %v1774
      %v1779 = vrot.slane %v1778, 4
      %v1781 = vshll.u32 %v1769, 16
      %v1783 = vrot.slane %v1781, 5
      %v1784 = vsel %vm354, %v1779, %v1783
      %v1785 = vshrl.u32 %v1769, 16
      %v1787 = vrot.slane %v1785, 4
      %v1788 = vor.u32 %v1787, %v1783
      %v1789 = vrot.slane %v1788, 4
      %v1791 = vshll.u32 %v1770, 16
      %v1793 = vrot.slane %v1791, 5
      %v1794 = vsel %vm354, %v1789, %v1793
      %1795 = vrot.lane.b32.xlu0 %v1774, 16
      %v1796 = vpop.permute.xlu0 %1795
      %1797 = vrot.lane.b32.xlu0 %v1784, 16
      %v1798 = vpop.permute.xlu0 %1797
      %1799 = vrot.lane.b32.xlu0 %v1794, 16
      %v1800 = vpop.permute.xlu0 %1799
      %vm1804 = vcmask 158851
      %vm1805 = vmand %vm1804, %vm816
      %v1806 = vld [vmem:[#allocation2 + $0x74] sm:$0x8]
      %v1807 = vsel %vm1805, %v1796, %v1806
      %1808 = vst [vmem:[#allocation2 + $0x74] sm:$0x8] %v1807
      %1809 = vst.msk [vmem:[#allocation2 + $0x78] sm:$0xf] %vm1733, %v1798
      %1810 = vst.msk [vmem:[#allocation2 + $0x7c] sm:$0xf] %vm1733, %v1800
      %v1811 = vld [vmem:[%s208 + $0x8] sm:$0xe]
      %v1812 = vld [vmem:[%s208 + $0xc] sm:$0xf]
      %v1813 = vld [vmem:[%s208 + $0x10] sm:$0xf]
      %v1814 = vld [vmem:[%s208 + $0x14] sm:$0xf]
      %v1815 = vld [vmem:[%s208 + $0x18] sm:$0xf]
      %v1816 = vld [vmem:[%s208 + $0x1c] sm:$0xf]
      %v1817 = vld [vmem:[%s208 + $0x20] sm:$0xf]
      %v1818 = vld [vmem:[%s208 + $0x24] sm:$0xf]
      %v1819 = vld [vmem:[%s208 + $0x28] sm:$0xf]
      %v1820 = vld [vmem:[%s208 + $0x2c] sm:$0xf]
      %v1821 = vld [vmem:[%s208 + $0x30] sm:$0xf]
      %v1822 = vld [vmem:[%s208 + $0x34] sm:$0xf]
      %v1823 = vld [vmem:[%s208 + $0x38] sm:$0xf]
      %v1824 = vld [vmem:[%s208 + $0x3c] sm:$0xf]
      %v1825 = vld [vmem:[%s208 + $0x40] sm:$0xf]
      %v1826 = vld [vmem:[%s208 + $0x44] sm:$0xf]
      %v1827 = vld [vmem:[%s208 + $0x48] sm:$0xf]
      %v1828 = vld [vmem:[%s208 + $0x4c] sm:$0xf]
      %v1829 = vld [vmem:[%s208 + $0x50] sm:$0xf]
      %v1830 = vld [vmem:[%s208 + $0x54] sm:$0xf]
      %v1831 = vld [vmem:[%s208 + $0x58] sm:$0xf]
      %v1832 = vld [vmem:[%s208 + $0x5c] sm:$0xf]
      %v1833 = vld [vmem:[%s208 + $0x60] sm:$0xf]
      %v1834 = vld [vmem:[%s208 + $0x64] sm:$0xf]
      %v1835 = vld [vmem:[%s208 + $0x68] sm:$0xf]
      %v1836 = vld [vmem:[%s208 + $0x6c] sm:$0xf]
      %v1837 = vld [vmem:[%s208 + $0x70] sm:$0xf]
      %v1838 = vld [vmem:[%s208 + $0x74] sm:$0xf]
      %v1839 = vld [vmem:[%s208 + $0x78] sm:$0xf]
      %v1840 = vld [vmem:[%s208 + $0x7c] sm:$0xf]
      %v1871 = vrot.slane %v1811, 5
      %v1872 = vrot.slane %v1871, 4
      %v1873 = vrot.slane %v1812, 5
      %v1874 = vsel %vm887, %v1872, %v1873
      %v1875 = vrot.slane %v1873, 4
      %v1876 = vrot.slane %v1813, 5
      %v1877 = vsel %vm887, %v1875, %v1876
      %v1878 = vrot.slane %v1876, 4
      %v1879 = vrot.slane %v1814, 5
      %v1880 = vsel %vm887, %v1878, %v1879
      %v1881 = vrot.slane %v1879, 4
      %v1882 = vrot.slane %v1815, 5
      %v1883 = vsel %vm887, %v1881, %v1882
      %v1884 = vrot.slane %v1882, 4
      %v1885 = vrot.slane %v1816, 5
      %v1886 = vsel %vm887, %v1884, %v1885
      %v1887 = vrot.slane %v1885, 4
      %v1888 = vrot.slane %v1817, 5
      %v1889 = vsel %vm887, %v1887, %v1888
      %v1890 = vrot.slane %v1888, 4
      %v1891 = vrot.slane %v1818, 5
      %v1892 = vsel %vm887, %v1890, %v1891
      %v1893 = vrot.slane %v1891, 4
      %v1894 = vrot.slane %v1819, 5
      %v1895 = vsel %vm887, %v1893, %v1894
      %v1896 = vrot.slane %v1894, 4
      %v1897 = vrot.slane %v1820, 5
      %v1898 = vsel %vm887, %v1896, %v1897
      %v1899 = vrot.slane %v1897, 4
      %v1900 = vrot.slane %v1821, 5
      %v1901 = vsel %vm887, %v1899, %v1900
      %v1902 = vrot.slane %v1900, 4
      %v1903 = vrot.slane %v1822, 5
      %v1904 = vsel %vm887, %v1902, %v1903
      %v1905 = vrot.slane %v1903, 4
      %v1906 = vrot.slane %v1823, 5
      %v1907 = vsel %vm887, %v1905, %v1906
      %v1908 = vrot.slane %v1906, 4
      %v1909 = vrot.slane %v1824, 5
      %v1910 = vsel %vm887, %v1908, %v1909
      %v1911 = vrot.slane %v1909, 4
      %v1912 = vrot.slane %v1825, 5
      %v1913 = vsel %vm887, %v1911, %v1912
      %v1914 = vrot.slane %v1912, 4
      %v1915 = vrot.slane %v1826, 5
      %v1916 = vsel %vm887, %v1914, %v1915
      %v1917 = vrot.slane %v1915, 4
      %v1918 = vrot.slane %v1827, 5
      %v1919 = vsel %vm887, %v1917, %v1918
      %v1920 = vrot.slane %v1918, 4
      %v1921 = vrot.slane %v1828, 5
      %v1922 = vsel %vm887, %v1920, %v1921
      %v1923 = vrot.slane %v1921, 4
      %v1924 = vrot.slane %v1829, 5
      %v1925 = vsel %vm887, %v1923, %v1924
      %v1926 = vrot.slane %v1924, 4
      %v1927 = vrot.slane %v1830, 5
      %v1928 = vsel %vm887, %v1926, %v1927
      %v1929 = vrot.slane %v1927, 4
      %v1930 = vrot.slane %v1831, 5
      %v1931 = vsel %vm887, %v1929, %v1930
      %v1932 = vrot.slane %v1930, 4
      %v1933 = vrot.slane %v1832, 5
      %v1934 = vsel %vm887, %v1932, %v1933
      %v1935 = vrot.slane %v1933, 4
      %v1936 = vrot.slane %v1833, 5
      %v1937 = vsel %vm887, %v1935, %v1936
      %v1938 = vrot.slane %v1936, 4
      %v1939 = vrot.slane %v1834, 5
      %v1940 = vsel %vm887, %v1938, %v1939
      %v1941 = vrot.slane %v1939, 4
      %v1942 = vrot.slane %v1835, 5
      %v1943 = vsel %vm887, %v1941, %v1942
      %v1944 = vrot.slane %v1942, 4
      %v1945 = vrot.slane %v1836, 5
      %v1946 = vsel %vm887, %v1944, %v1945
      %v1947 = vrot.slane %v1945, 4
      %v1948 = vrot.slane %v1837, 5
      %v1949 = vsel %vm887, %v1947, %v1948
      %v1950 = vrot.slane %v1948, 4
      %v1951 = vrot.slane %v1838, 5
      %v1952 = vsel %vm887, %v1950, %v1951
      %v1953 = vrot.slane %v1951, 4
      %v1954 = vrot.slane %v1839, 5
      %v1955 = vsel %vm887, %v1953, %v1954
      %v1956 = vrot.slane %v1954, 4
      %v1957 = vrot.slane %v1840, 5
      %v1958 = vsel %vm887, %v1956, %v1957
      %v1959 = vrot.slane %v1957, 4
      %1960 = vrot.lane.b32.xlu0 %v1874, 20
      %v1961 = vpop.permute.xlu0 %1960
      %1962 = vrot.lane.b32.xlu0 %v1877, 20
      %v1963 = vpop.permute.xlu0 %1962
      %1964 = vrot.lane.b32.xlu0 %v1880, 20
      %v1965 = vpop.permute.xlu0 %1964
      %1966 = vrot.lane.b32.xlu0 %v1883, 20
      %v1967 = vpop.permute.xlu0 %1966
      %1968 = vrot.lane.b32.xlu0 %v1886, 20
      %v1969 = vpop.permute.xlu0 %1968
      %1970 = vrot.lane.b32.xlu0 %v1889, 20
      %v1971 = vpop.permute.xlu0 %1970
      %1972 = vrot.lane.b32.xlu0 %v1892, 20
      %v1973 = vpop.permute.xlu0 %1972
      %1974 = vrot.lane.b32.xlu0 %v1895, 20
      %v1975 = vpop.permute.xlu0 %1974
      %1976 = vrot.lane.b32.xlu0 %v1898, 20
      %v1977 = vpop.permute.xlu0 %1976
      %1978 = vrot.lane.b32.xlu0 %v1901, 20
      %v1979 = vpop.permute.xlu0 %1978
      %1980 = vrot.lane.b32.xlu0 %v1904, 20
      %v1981 = vpop.permute.xlu0 %1980
      %1982 = vrot.lane.b32.xlu0 %v1907, 20
      %v1983 = vpop.permute.xlu0 %1982
      %1984 = vrot.lane.b32.xlu0 %v1910, 20
      %v1985 = vpop.permute.xlu0 %1984
      %1986 = vrot.lane.b32.xlu0 %v1913, 20
      %v1987 = vpop.permute.xlu0 %1986
      %1988 = vrot.lane.b32.xlu0 %v1916, 20
      %v1989 = vpop.permute.xlu0 %1988
      %1990 = vrot.lane.b32.xlu0 %v1919, 20
      %v1991 = vpop.permute.xlu0 %1990
      %1992 = vrot.lane.b32.xlu0 %v1922, 20
      %v1993 = vpop.permute.xlu0 %1992
      %1994 = vrot.lane.b32.xlu0 %v1925, 20
      %v1995 = vpop.permute.xlu0 %1994
      %1996 = vrot.lane.b32.xlu0 %v1928, 20
      %v1997 = vpop.permute.xlu0 %1996
      %1998 = vrot.lane.b32.xlu0 %v1931, 20
      %v1999 = vpop.permute.xlu0 %1998
      %2000 = vrot.lane.b32.xlu0 %v1934, 20
      %v2001 = vpop.permute.xlu0 %2000
      %2002 = vrot.lane.b32.xlu0 %v1937, 20
      %v2003 = vpop.permute.xlu0 %2002
      %2004 = vrot.lane.b32.xlu0 %v1940, 20
      %v2005 = vpop.permute.xlu0 %2004
      %2006 = vrot.lane.b32.xlu0 %v1943, 20
      %v2007 = vpop.permute.xlu0 %2006
      %2008 = vrot.lane.b32.xlu0 %v1946, 20
      %v2009 = vpop.permute.xlu0 %2008
      %2010 = vrot.lane.b32.xlu0 %v1949, 20
      %v2011 = vpop.permute.xlu0 %2010
      %2012 = vrot.lane.b32.xlu0 %v1952, 20
      %v2013 = vpop.permute.xlu0 %2012
      %2014 = vrot.lane.b32.xlu0 %v1955, 20
      %v2015 = vpop.permute.xlu0 %2014
      %2016 = vrot.lane.b32.xlu0 %v1958, 20
      %v2017 = vpop.permute.xlu0 %2016
      %2018 = vrot.lane.b32.xlu0 %v1959, 20
      %v2019 = vpop.permute.xlu0 %2018
      %vm2050 = vcmask 191648
      %2051 = vst.msk [vmem:[#allocation2] sm:$0xf] %vm2050, %v1961
      %2052 = vst.msk [vmem:[#allocation2 + $0x4] sm:$0xf] %vm2050, %v1963
      %2053 = vst.msk [vmem:[#allocation2 + $0x8] sm:$0xf] %vm2050, %v1965
      %2054 = vst.msk [vmem:[#allocation2 + $0xc] sm:$0xf] %vm2050, %v1967
      %2055 = vst.msk [vmem:[#allocation2 + $0x10] sm:$0xf] %vm2050, %v1969
      %2056 = vst.msk [vmem:[#allocation2 + $0x14] sm:$0xf] %vm2050, %v1971
      %2057 = vst.msk [vmem:[#allocation2 + $0x18] sm:$0xf] %vm2050, %v1973
      %2058 = vst.msk [vmem:[#allocation2 + $0x1c] sm:$0xf] %vm2050, %v1975
      %2059 = vst.msk [vmem:[#allocation2 + $0x20] sm:$0xf] %vm2050, %v1977
      %2060 = vst.msk [vmem:[#allocation2 + $0x24] sm:$0xf] %vm2050, %v1979
      %2061 = vst.msk [vmem:[#allocation2 + $0x28] sm:$0xf] %vm2050, %v1981
      %2062 = vst.msk [vmem:[#allocation2 + $0x2c] sm:$0xf] %vm2050, %v1983
      %2063 = vst.msk [vmem:[#allocation2 + $0x30] sm:$0xf] %vm2050, %v1985
      %2064 = vst.msk [vmem:[#allocation2 + $0x34] sm:$0xf] %vm2050, %v1987
      %2065 = vst.msk [vmem:[#allocation2 + $0x38] sm:$0xf] %vm2050, %v1989
      %2066 = vst.msk [vmem:[#allocation2 + $0x3c] sm:$0xf] %vm2050, %v1991
      %2067 = vst.msk [vmem:[#allocation2 + $0x40] sm:$0xf] %vm2050, %v1993
      %2068 = vst.msk [vmem:[#allocation2 + $0x44] sm:$0xf] %vm2050, %v1995
      %2069 = vst.msk [vmem:[#allocation2 + $0x48] sm:$0xf] %vm2050, %v1997
      %2070 = vst.msk [vmem:[#allocation2 + $0x4c] sm:$0xf] %vm2050, %v1999
      %2071 = vst.msk [vmem:[#allocation2 + $0x50] sm:$0xf] %vm2050, %v2001
      %2072 = vst.msk [vmem:[#allocation2 + $0x54] sm:$0xf] %vm2050, %v2003
      %2073 = vst.msk [vmem:[#allocation2 + $0x58] sm:$0xf] %vm2050, %v2005
      %2074 = vst.msk [vmem:[#allocation2 + $0x5c] sm:$0xf] %vm2050, %v2007
      %2075 = vst.msk [vmem:[#allocation2 + $0x60] sm:$0xf] %vm2050, %v2009
      %2076 = vst.msk [vmem:[#allocation2 + $0x64] sm:$0xf] %vm2050, %v2011
      %2077 = vst.msk [vmem:[#allocation2 + $0x68] sm:$0xf] %vm2050, %v2013
      %2078 = vst.msk [vmem:[#allocation2 + $0x6c] sm:$0xf] %vm2050, %v2015
      %2079 = vst.msk [vmem:[#allocation2 + $0x70] sm:$0xf] %vm2050, %v2017
      %vm2080 = vcmask 190624
      %2081 = vst.msk [vmem:[#allocation2 + $0x74] sm:$0x7] %vm2080, %v2019
      %v2082 = vld [vmem:[%s214] sm:$0xf]
      %v2083 = vld [vmem:[%s214 + $0x4] sm:$0xf]
      %v2084 = vld [vmem:[%s214 + $0x8] sm:$0x1]
      %v2088 = vrot.slane %v2082, 5
      %v2089 = vrot.slane %v2088, 4
      %v2090 = vrot.slane %v2083, 5
      %v2091 = vsel %vm887, %v2089, %v2090
      %v2092 = vrot.slane %v2090, 4
      %v2093 = vrot.slane %v2084, 5
      %v2094 = vsel %vm887, %v2092, %v2093
      %2095 = vrot.lane.b32.xlu0 %v2088, 20
      %v2096 = vpop.permute.xlu0 %2095
      %2097 = vrot.lane.b32.xlu0 %v2091, 20
      %v2098 = vpop.permute.xlu0 %2097
      %2099 = vrot.lane.b32.xlu0 %v2094, 20
      %v2100 = vpop.permute.xlu0 %2099
      %vm2104 = vcmask 191651
      %2105 = vst.msk [vmem:[#allocation2 + $0x74] sm:$0x8] %vm2104, %v2096
      %2106 = vst.msk [vmem:[#allocation2 + $0x78] sm:$0xf] %vm2050, %v2098
      %2107 = vst.msk [vmem:[#allocation2 + $0x7c] sm:$0xf] %vm2050, %v2100
      %v2108 = vld [vmem:[%s208 + $0x10] sm:$0xf]
      %v2109 = vld [vmem:[%s208 + $0x14] sm:$0xf]
      %v2110 = vld [vmem:[%s208 + $0x18] sm:$0xf]
      %v2111 = vld [vmem:[%s208 + $0x1c] sm:$0xf]
      %v2112 = vld [vmem:[%s208 + $0x20] sm:$0xf]
      %v2113 = vld [vmem:[%s208 + $0x24] sm:$0xf]
      %v2114 = vld [vmem:[%s208 + $0x28] sm:$0xf]
      %v2115 = vld [vmem:[%s208 + $0x2c] sm:$0xf]
      %v2116 = vld [vmem:[%s208 + $0x30] sm:$0xf]
      %v2117 = vld [vmem:[%s208 + $0x34] sm:$0xf]
      %v2118 = vld [vmem:[%s208 + $0x38] sm:$0xf]
      %v2119 = vld [vmem:[%s208 + $0x3c] sm:$0xf]
      %v2120 = vld [vmem:[%s208 + $0x40] sm:$0xf]
      %v2121 = vld [vmem:[%s208 + $0x44] sm:$0xf]
      %v2122 = vld [vmem:[%s208 + $0x48] sm:$0xf]
      %v2123 = vld [vmem:[%s208 + $0x4c] sm:$0xf]
      %v2124 = vld [vmem:[%s208 + $0x50] sm:$0xf]
      %v2125 = vld [vmem:[%s208 + $0x54] sm:$0xf]
      %v2126 = vld [vmem:[%s208 + $0x58] sm:$0xf]
      %v2127 = vld [vmem:[%s208 + $0x5c] sm:$0xf]
      %v2128 = vld [vmem:[%s208 + $0x60] sm:$0xf]
      %v2129 = vld [vmem:[%s208 + $0x64] sm:$0xf]
      %v2130 = vld [vmem:[%s208 + $0x68] sm:$0xf]
      %v2131 = vld [vmem:[%s208 + $0x6c] sm:$0xf]
      %v2132 = vld [vmem:[%s208 + $0x70] sm:$0xf]
      %v2133 = vld [vmem:[%s208 + $0x74] sm:$0xf]
      %v2134 = vld [vmem:[%s208 + $0x78] sm:$0xf]
      %v2135 = vld [vmem:[%s208 + $0x7c] sm:$0xf]
      %2164 = vrot.lane.b32.xlu0 %v2108, 24
      %v2165 = vpop.permute.xlu0 %2164
      %2166 = vrot.lane.b32.xlu0 %v2109, 24
      %v2167 = vpop.permute.xlu0 %2166
      %2168 = vrot.lane.b32.xlu0 %v2110, 24
      %v2169 = vpop.permute.xlu0 %2168
      %2170 = vrot.lane.b32.xlu0 %v2111, 24
      %v2171 = vpop.permute.xlu0 %2170
      %2172 = vrot.lane.b32.xlu0 %v2112, 24
      %v2173 = vpop.permute.xlu0 %2172
      %2174 = vrot.lane.b32.xlu0 %v2113, 24
      %v2175 = vpop.permute.xlu0 %2174
      %2176 = vrot.lane.b32.xlu0 %v2114, 24
      %v2177 = vpop.permute.xlu0 %2176
      %2178 = vrot.lane.b32.xlu0 %v2115, 24
      %v2179 = vpop.permute.xlu0 %2178
      %2180 = vrot.lane.b32.xlu0 %v2116, 24
      %v2181 = vpop.permute.xlu0 %2180
      %2182 = vrot.lane.b32.xlu0 %v2117, 24
      %v2183 = vpop.permute.xlu0 %2182
      %2184 = vrot.lane.b32.xlu0 %v2118, 24
      %v2185 = vpop.permute.xlu0 %2184
      %2186 = vrot.lane.b32.xlu0 %v2119, 24
      %v2187 = vpop.permute.xlu0 %2186
      %2188 = vrot.lane.b32.xlu0 %v2120, 24
      %v2189 = vpop.permute.xlu0 %2188
      %2190 = vrot.lane.b32.xlu0 %v2121, 24
      %v2191 = vpop.permute.xlu0 %2190
      %2192 = vrot.lane.b32.xlu0 %v2122, 24
      %v2193 = vpop.permute.xlu0 %2192
      %2194 = vrot.lane.b32.xlu0 %v2123, 24
      %v2195 = vpop.permute.xlu0 %2194
      %2196 = vrot.lane.b32.xlu0 %v2124, 24
      %v2197 = vpop.permute.xlu0 %2196
      %2198 = vrot.lane.b32.xlu0 %v2125, 24
      %v2199 = vpop.permute.xlu0 %2198
      %2200 = vrot.lane.b32.xlu0 %v2126, 24
      %v2201 = vpop.permute.xlu0 %2200
      %2202 = vrot.lane.b32.xlu0 %v2127, 24
      %v2203 = vpop.permute.xlu0 %2202
      %2204 = vrot.lane.b32.xlu0 %v2128, 24
      %v2205 = vpop.permute.xlu0 %2204
      %2206 = vrot.lane.b32.xlu0 %v2129, 24
      %v2207 = vpop.permute.xlu0 %2206
      %2208 = vrot.lane.b32.xlu0 %v2130, 24
      %v2209 = vpop.permute.xlu0 %2208
      %2210 = vrot.lane.b32.xlu0 %v2131, 24
      %v2211 = vpop.permute.xlu0 %2210
      %2212 = vrot.lane.b32.xlu0 %v2132, 24
      %v2213 = vpop.permute.xlu0 %2212
      %2214 = vrot.lane.b32.xlu0 %v2133, 24
      %v2215 = vpop.permute.xlu0 %2214
      %2216 = vrot.lane.b32.xlu0 %v2134, 24
      %v2217 = vpop.permute.xlu0 %2216
      %2218 = vrot.lane.b32.xlu0 %v2135, 24
      %v2219 = vpop.permute.xlu0 %2218
      %vm2248 = vcmask 224448
      %2249 = vst.msk [vmem:[#allocation2] sm:$0xf] %vm2248, %v2165
      %2250 = vst.msk [vmem:[#allocation2 + $0x4] sm:$0xf] %vm2248, %v2167
      %2251 = vst.msk [vmem:[#allocation2 + $0x8] sm:$0xf] %vm2248, %v2169
      %2252 = vst.msk [vmem:[#allocation2 + $0xc] sm:$0xf] %vm2248, %v2171
      %2253 = vst.msk [vmem:[#allocation2 + $0x10] sm:$0xf] %vm2248, %v2173
      %2254 = vst.msk [vmem:[#allocation2 + $0x14] sm:$0xf] %vm2248, %v2175
      %2255 = vst.msk [vmem:[#allocation2 + $0x18] sm:$0xf] %vm2248, %v2177
      %2256 = vst.msk [vmem:[#allocation2 + $0x1c] sm:$0xf] %vm2248, %v2179
      %2257 = vst.msk [vmem:[#allocation2 + $0x20] sm:$0xf] %vm2248, %v2181
      %2258 = vst.msk [vmem:[#allocation2 + $0x24] sm:$0xf] %vm2248, %v2183
      %2259 = vst.msk [vmem:[#allocation2 + $0x28] sm:$0xf] %vm2248, %v2185
      %2260 = vst.msk [vmem:[#allocation2 + $0x2c] sm:$0xf] %vm2248, %v2187
      %2261 = vst.msk [vmem:[#allocation2 + $0x30] sm:$0xf] %vm2248, %v2189
      %2262 = vst.msk [vmem:[#allocation2 + $0x34] sm:$0xf] %vm2248, %v2191
      %2263 = vst.msk [vmem:[#allocation2 + $0x38] sm:$0xf] %vm2248, %v2193
      %2264 = vst.msk [vmem:[#allocation2 + $0x3c] sm:$0xf] %vm2248, %v2195
      %2265 = vst.msk [vmem:[#allocation2 + $0x40] sm:$0xf] %vm2248, %v2197
      %2266 = vst.msk [vmem:[#allocation2 + $0x44] sm:$0xf] %vm2248, %v2199
      %2267 = vst.msk [vmem:[#allocation2 + $0x48] sm:$0xf] %vm2248, %v2201
      %2268 = vst.msk [vmem:[#allocation2 + $0x4c] sm:$0xf] %vm2248, %v2203
      %2269 = vst.msk [vmem:[#allocation2 + $0x50] sm:$0xf] %vm2248, %v2205
      %2270 = vst.msk [vmem:[#allocation2 + $0x54] sm:$0xf] %vm2248, %v2207
      %2271 = vst.msk [vmem:[#allocation2 + $0x58] sm:$0xf] %vm2248, %v2209
      %2272 = vst.msk [vmem:[#allocation2 + $0x5c] sm:$0xf] %vm2248, %v2211
      %2273 = vst.msk [vmem:[#allocation2 + $0x60] sm:$0xf] %vm2248, %v2213
      %2274 = vst.msk [vmem:[#allocation2 + $0x64] sm:$0xf] %vm2248, %v2215
      %2275 = vst.msk [vmem:[#allocation2 + $0x68] sm:$0xf] %vm2248, %v2217
      %2276 = vst.msk [vmem:[#allocation2 + $0x6c] sm:$0xf] %vm2248, %v2219
      %v2277 = vld [vmem:[%s214] sm:$0xf]
      %v2278 = vld [vmem:[%s214 + $0x4] sm:$0xf]
      %v2279 = vld [vmem:[%s214 + $0x8] sm:$0xf]
      %v2280 = vld [vmem:[%s214 + $0xc] sm:$0xf]
      %2285 = vrot.lane.b32.xlu0 %v2277, 24
      %v2286 = vpop.permute.xlu0 %2285
      %2287 = vrot.lane.b32.xlu0 %v2278, 24
      %v2288 = vpop.permute.xlu0 %2287
      %2289 = vrot.lane.b32.xlu0 %v2279, 24
      %v2290 = vpop.permute.xlu0 %2289
      %2291 = vrot.lane.b32.xlu0 %v2280, 24
      %v2292 = vpop.permute.xlu0 %2291
      %2297 = vst.msk [vmem:[#allocation2 + $0x70] sm:$0xf] %vm2248, %v2286
      %2298 = vst.msk [vmem:[#allocation2 + $0x74] sm:$0xf] %vm2248, %v2288
      %2299 = vst.msk [vmem:[#allocation2 + $0x78] sm:$0xf] %vm2248, %v2290
      %2300 = vst.msk [vmem:[#allocation2 + $0x7c] sm:$0xf] %vm2248, %v2292
      %v2301 = vld [vmem:[%s208 + $0x10] sm:$0xf]
      %v2302 = vld [vmem:[%s208 + $0x14] sm:$0xf]
      %v2303 = vld [vmem:[%s208 + $0x18] sm:$0xf]
      %v2304 = vld [vmem:[%s208 + $0x1c] sm:$0xf]
      %v2305 = vld [vmem:[%s208 + $0x20] sm:$0xf]
      %v2306 = vld [vmem:[%s208 + $0x24] sm:$0xf]
      %v2307 = vld [vmem:[%s208 + $0x28] sm:$0xf]
      %v2308 = vld [vmem:[%s208 + $0x2c] sm:$0xf]
      %v2309 = vld [vmem:[%s208 + $0x30] sm:$0xf]
      %v2310 = vld [vmem:[%s208 + $0x34] sm:$0xf]
      %v2311 = vld [vmem:[%s208 + $0x38] sm:$0xf]
      %v2312 = vld [vmem:[%s208 + $0x3c] sm:$0xf]
      %v2313 = vld [vmem:[%s208 + $0x40] sm:$0xf]
      %v2314 = vld [vmem:[%s208 + $0x44] sm:$0xf]
      %v2315 = vld [vmem:[%s208 + $0x48] sm:$0xf]
      %v2316 = vld [vmem:[%s208 + $0x4c] sm:$0xf]
      %v2317 = vld [vmem:[%s208 + $0x50] sm:$0xf]
      %v2318 = vld [vmem:[%s208 + $0x54] sm:$0xf]
      %v2319 = vld [vmem:[%s208 + $0x58] sm:$0xf]
      %v2320 = vld [vmem:[%s208 + $0x5c] sm:$0xf]
      %v2321 = vld [vmem:[%s208 + $0x60] sm:$0xf]
      %v2322 = vld [vmem:[%s208 + $0x64] sm:$0xf]
      %v2323 = vld [vmem:[%s208 + $0x68] sm:$0xf]
      %v2324 = vld [vmem:[%s208 + $0x6c] sm:$0xf]
      %v2325 = vld [vmem:[%s208 + $0x70] sm:$0xf]
      %v2326 = vld [vmem:[%s208 + $0x74] sm:$0xf]
      %v2327 = vld [vmem:[%s208 + $0x78] sm:$0xf]
      %v2328 = vld [vmem:[%s208 + $0x7c] sm:$0xf]
      %v2330 = vshrl.u32 %v2301, 16
      %v2332 = vrot.slane %v2330, 4
      %v2333 = vshll.u32 %v2301, 16
      %v2335 = vrot.slane %v2333, 5
      %v2336 = vor.u32 %v2332, %v2335
      %v2337 = vrot.slane %v2336, 4
      %v2339 = vshll.u32 %v2302, 16
      %v2341 = vrot.slane %v2339, 5
      %v2342 = vsel %vm354, %v2337, %v2341
      %v2343 = vshrl.u32 %v2302, 16
      %v2345 = vrot.slane %v2343, 4
      %v2346 = vor.u32 %v2345, %v2341
      %v2347 = vrot.slane %v2346, 4
      %v2349 = vshll.u32 %v2303, 16
      %v2351 = vrot.slane %v2349, 5
      %v2352 = vsel %vm354, %v2347, %v2351
      %v2353 = vshrl.u32 %v2303, 16
      %v2355 = vrot.slane %v2353, 4
      %v2356 = vor.u32 %v2355, %v2351
      %v2357 = vrot.slane %v2356, 4
      %v2359 = vshll.u32 %v2304, 16
      %v2361 = vrot.slane %v2359, 5
      %v2362 = vsel %vm354, %v2357, %v2361
      %v2363 = vshrl.u32 %v2304, 16
      %v2365 = vrot.slane %v2363, 4
      %v2366 = vor.u32 %v2365, %v2361
      %v2367 = vrot.slane %v2366, 4
      %v2369 = vshll.u32 %v2305, 16
      %v2371 = vrot.slane %v2369, 5
      %v2372 = vsel %vm354, %v2367, %v2371
      %v2373 = vshrl.u32 %v2305, 16
      %v2375 = vrot.slane %v2373, 4
      %v2376 = vor.u32 %v2375, %v2371
      %v2377 = vrot.slane %v2376, 4
      %v2379 = vshll.u32 %v2306, 16
      %v2381 = vrot.slane %v2379, 5
      %v2382 = vsel %vm354, %v2377, %v2381
      %v2383 = vshrl.u32 %v2306, 16
      %v2385 = vrot.slane %v2383, 4
      %v2386 = vor.u32 %v2385, %v2381
      %v2387 = vrot.slane %v2386, 4
      %v2389 = vshll.u32 %v2307, 16
      %v2391 = vrot.slane %v2389, 5
      %v2392 = vsel %vm354, %v2387, %v2391
      %v2393 = vshrl.u32 %v2307, 16
      %v2395 = vrot.slane %v2393, 4
      %v2396 = vor.u32 %v2395, %v2391
      %v2397 = vrot.slane %v2396, 4
      %v2399 = vshll.u32 %v2308, 16
      %v2401 = vrot.slane %v2399, 5
      %v2402 = vsel %vm354, %v2397, %v2401
      %v2403 = vshrl.u32 %v2308, 16
      %v2405 = vrot.slane %v2403, 4
      %v2406 = vor.u32 %v2405, %v2401
      %v2407 = vrot.slane %v2406, 4
      %v2409 = vshll.u32 %v2309, 16
      %v2411 = vrot.slane %v2409, 5
      %v2412 = vsel %vm354, %v2407, %v2411
      %v2413 = vshrl.u32 %v2309, 16
      %v2415 = vrot.slane %v2413, 4
      %v2416 = vor.u32 %v2415, %v2411
      %v2417 = vrot.slane %v2416, 4
      %v2419 = vshll.u32 %v2310, 16
      %v2421 = vrot.slane %v2419, 5
      %v2422 = vsel %vm354, %v2417, %v2421
      %v2423 = vshrl.u32 %v2310, 16
      %v2425 = vrot.slane %v2423, 4
      %v2426 = vor.u32 %v2425, %v2421
      %v2427 = vrot.slane %v2426, 4
      %v2429 = vshll.u32 %v2311, 16
      %v2431 = vrot.slane %v2429, 5
      %v2432 = vsel %vm354, %v2427, %v2431
      %v2433 = vshrl.u32 %v2311, 16
      %v2435 = vrot.slane %v2433, 4
      %v2436 = vor.u32 %v2435, %v2431
      %v2437 = vrot.slane %v2436, 4
      %v2439 = vshll.u32 %v2312, 16
      %v2441 = vrot.slane %v2439, 5
      %v2442 = vsel %vm354, %v2437, %v2441
      %v2443 = vshrl.u32 %v2312, 16
      %v2445 = vrot.slane %v2443, 4
      %v2446 = vor.u32 %v2445, %v2441
      %v2447 = vrot.slane %v2446, 4
      %v2449 = vshll.u32 %v2313, 16
      %v2451 = vrot.slane %v2449, 5
      %v2452 = vsel %vm354, %v2447, %v2451
      %v2453 = vshrl.u32 %v2313, 16
      %v2455 = vrot.slane %v2453, 4
      %v2456 = vor.u32 %v2455, %v2451
      %v2457 = vrot.slane %v2456, 4
      %v2459 = vshll.u32 %v2314, 16
      %v2461 = vrot.slane %v2459, 5
      %v2462 = vsel %vm354, %v2457, %v2461
      %v2463 = vshrl.u32 %v2314, 16
      %v2465 = vrot.slane %v2463, 4
      %v2466 = vor.u32 %v2465, %v2461
      %v2467 = vrot.slane %v2466, 4
      %v2469 = vshll.u32 %v2315, 16
      %v2471 = vrot.slane %v2469, 5
      %v2472 = vsel %vm354, %v2467, %v2471
      %v2473 = vshrl.u32 %v2315, 16
      %v2475 = vrot.slane %v2473, 4
      %v2476 = vor.u32 %v2475, %v2471
      %v2477 = vrot.slane %v2476, 4
      %v2479 = vshll.u32 %v2316, 16
      %v2481 = vrot.slane %v2479, 5
      %v2482 = vsel %vm354, %v2477, %v2481
      %v2483 = vshrl.u32 %v2316, 16
      %v2485 = vrot.slane %v2483, 4
      %v2486 = vor.u32 %v2485, %v2481
      %v2487 = vrot.slane %v2486, 4
      %v2489 = vshll.u32 %v2317, 16
      %v2491 = vrot.slane %v2489, 5
      %v2492 = vsel %vm354, %v2487, %v2491
      %v2493 = vshrl.u32 %v2317, 16
      %v2495 = vrot.slane %v2493, 4
      %v2496 = vor.u32 %v2495, %v2491
      %v2497 = vrot.slane %v2496, 4
      %v2499 = vshll.u32 %v2318, 16
      %v2501 = vrot.slane %v2499, 5
      %v2502 = vsel %vm354, %v2497, %v2501
      %v2503 = vshrl.u32 %v2318, 16
      %v2505 = vrot.slane %v2503, 4
      %v2506 = vor.u32 %v2505, %v2501
      %v2507 = vrot.slane %v2506, 4
      %v2509 = vshll.u32 %v2319, 16
      %v2511 = vrot.slane %v2509, 5
      %v2512 = vsel %vm354, %v2507, %v2511
      %v2513 = vshrl.u32 %v2319, 16
      %v2515 = vrot.slane %v2513, 4
      %v2516 = vor.u32 %v2515, %v2511
      %v2517 = vrot.slane %v2516, 4
      %v2519 = vshll.u32 %v2320, 16
      %v2521 = vrot.slane %v2519, 5
      %v2522 = vsel %vm354, %v2517, %v2521
      %v2523 = vshrl.u32 %v2320, 16
      %v2525 = vrot.slane %v2523, 4
      %v2526 = vor.u32 %v2525, %v2521
      %v2527 = vrot.slane %v2526, 4
      %v2529 = vshll.u32 %v2321, 16
      %v2531 = vrot.slane %v2529, 5
      %v2532 = vsel %vm354, %v2527, %v2531
      %v2533 = vshrl.u32 %v2321, 16
      %v2535 = vrot.slane %v2533, 4
      %v2536 = vor.u32 %v2535, %v2531
      %v2537 = vrot.slane %v2536, 4
      %v2539 = vshll.u32 %v2322, 16
      %v2541 = vrot.slane %v2539, 5
      %v2542 = vsel %vm354, %v2537, %v2541
      %v2543 = vshrl.u32 %v2322, 16
      %v2545 = vrot.slane %v2543, 4
      %v2546 = vor.u32 %v2545, %v2541
      %v2547 = vrot.slane %v2546, 4
      %v2549 = vshll.u32 %v2323, 16
      %v2551 = vrot.slane %v2549, 5
      %v2552 = vsel %vm354, %v2547, %v2551
      %v2553 = vshrl.u32 %v2323, 16
      %v2555 = vrot.slane %v2553, 4
      %v2556 = vor.u32 %v2555, %v2551
      %v2557 = vrot.slane %v2556, 4
      %v2559 = vshll.u32 %v2324, 16
      %v2561 = vrot.slane %v2559, 5
      %v2562 = vsel %vm354, %v2557, %v2561
      %v2563 = vshrl.u32 %v2324, 16
      %v2565 = vrot.slane %v2563, 4
      %v2566 = vor.u32 %v2565, %v2561
      %v2567 = vrot.slane %v2566, 4
      %v2569 = vshll.u32 %v2325, 16
      %v2571 = vrot.slane %v2569, 5
      %v2572 = vsel %vm354, %v2567, %v2571
      %v2573 = vshrl.u32 %v2325, 16
      %v2575 = vrot.slane %v2573, 4
      %v2576 = vor.u32 %v2575, %v2571
      %v2577 = vrot.slane %v2576, 4
      %v2579 = vshll.u32 %v2326, 16
      %v2581 = vrot.slane %v2579, 5
      %v2582 = vsel %vm354, %v2577, %v2581
      %v2583 = vshrl.u32 %v2326, 16
      %v2585 = vrot.slane %v2583, 4
      %v2586 = vor.u32 %v2585, %v2581
      %v2587 = vrot.slane %v2586, 4
      %v2589 = vshll.u32 %v2327, 16
      %v2591 = vrot.slane %v2589, 5
      %v2592 = vsel %vm354, %v2587, %v2591
      %v2593 = vshrl.u32 %v2327, 16
      %v2595 = vrot.slane %v2593, 4
      %v2596 = vor.u32 %v2595, %v2591
      %v2597 = vrot.slane %v2596, 4
      %v2599 = vshll.u32 %v2328, 16
      %v2601 = vrot.slane %v2599, 5
      %v2602 = vsel %vm354, %v2597, %v2601
      %v2603 = vshrl.u32 %v2328, 16
      %v2605 = vrot.slane %v2603, 4
      %v2606 = vor.u32 %v2605, %v2601
      %v2607 = vrot.slane %v2606, 4
      %2608 = vrot.lane.b32.xlu0 %v2342, 28
      %v2609 = vpop.permute.xlu0 %2608
      %2610 = vrot.lane.b32.xlu0 %v2352, 28
      %v2611 = vpop.permute.xlu0 %2610
      %2612 = vrot.lane.b32.xlu0 %v2362, 28
      %v2613 = vpop.permute.xlu0 %2612
      %2614 = vrot.lane.b32.xlu0 %v2372, 28
      %v2615 = vpop.permute.xlu0 %2614
      %2616 = vrot.lane.b32.xlu0 %v2382, 28
      %v2617 = vpop.permute.xlu0 %2616
      %2618 = vrot.lane.b32.xlu0 %v2392, 28
      %v2619 = vpop.permute.xlu0 %2618
      %2620 = vrot.lane.b32.xlu0 %v2402, 28
      %v2621 = vpop.permute.xlu0 %2620
      %2622 = vrot.lane.b32.xlu0 %v2412, 28
      %v2623 = vpop.permute.xlu0 %2622
      %2624 = vrot.lane.b32.xlu0 %v2422, 28
      %v2625 = vpop.permute.xlu0 %2624
      %2626 = vrot.lane.b32.xlu0 %v2432, 28
      %v2627 = vpop.permute.xlu0 %2626
      %2628 = vrot.lane.b32.xlu0 %v2442, 28
      %v2629 = vpop.permute.xlu0 %2628
      %2630 = vrot.lane.b32.xlu0 %v2452, 28
      %v2631 = vpop.permute.xlu0 %2630
      %2632 = vrot.lane.b32.xlu0 %v2462, 28
      %v2633 = vpop.permute.xlu0 %2632
      %2634 = vrot.lane.b32.xlu0 %v2472, 28
      %v2635 = vpop.permute.xlu0 %2634
      %2636 = vrot.lane.b32.xlu0 %v2482, 28
      %v2637 = vpop.permute.xlu0 %2636
      %2638 = vrot.lane.b32.xlu0 %v2492, 28
      %v2639 = vpop.permute.xlu0 %2638
      %2640 = vrot.lane.b32.xlu0 %v2502, 28
      %v2641 = vpop.permute.xlu0 %2640
      %2642 = vrot.lane.b32.xlu0 %v2512, 28
      %v2643 = vpop.permute.xlu0 %2642
      %2644 = vrot.lane.b32.xlu0 %v2522, 28
      %v2645 = vpop.permute.xlu0 %2644
      %2646 = vrot.lane.b32.xlu0 %v2532, 28
      %v2647 = vpop.permute.xlu0 %2646
      %2648 = vrot.lane.b32.xlu0 %v2542, 28
      %v2649 = vpop.permute.xlu0 %2648
      %2650 = vrot.lane.b32.xlu0 %v2552, 28
      %v2651 = vpop.permute.xlu0 %2650
      %2652 = vrot.lane.b32.xlu0 %v2562, 28
      %v2653 = vpop.permute.xlu0 %2652
      %2654 = vrot.lane.b32.xlu0 %v2572, 28
      %v2655 = vpop.permute.xlu0 %2654
      %2656 = vrot.lane.b32.xlu0 %v2582, 28
      %v2657 = vpop.permute.xlu0 %2656
      %2658 = vrot.lane.b32.xlu0 %v2592, 28
      %v2659 = vpop.permute.xlu0 %2658
      %2660 = vrot.lane.b32.xlu0 %v2602, 28
      %v2661 = vpop.permute.xlu0 %2660
      %2662 = vrot.lane.b32.xlu0 %v2607, 28
      %v2663 = vpop.permute.xlu0 %2662
      %vm2692 = vcmask 257248
      %2693 = vst.msk [vmem:[#allocation2] sm:$0xf] %vm2692, %v2609
      %2694 = vst.msk [vmem:[#allocation2 + $0x4] sm:$0xf] %vm2692, %v2611
      %2695 = vst.msk [vmem:[#allocation2 + $0x8] sm:$0xf] %vm2692, %v2613
      %2696 = vst.msk [vmem:[#allocation2 + $0xc] sm:$0xf] %vm2692, %v2615
      %2697 = vst.msk [vmem:[#allocation2 + $0x10] sm:$0xf] %vm2692, %v2617
      %2698 = vst.msk [vmem:[#allocation2 + $0x14] sm:$0xf] %vm2692, %v2619
      %2699 = vst.msk [vmem:[#allocation2 + $0x18] sm:$0xf] %vm2692, %v2621
      %2700 = vst.msk [vmem:[#allocation2 + $0x1c] sm:$0xf] %vm2692, %v2623
      %2701 = vst.msk [vmem:[#allocation2 + $0x20] sm:$0xf] %vm2692, %v2625
      %2702 = vst.msk [vmem:[#allocation2 + $0x24] sm:$0xf] %vm2692, %v2627
      %2703 = vst.msk [vmem:[#allocation2 + $0x28] sm:$0xf] %vm2692, %v2629
      %2704 = vst.msk [vmem:[#allocation2 + $0x2c] sm:$0xf] %vm2692, %v2631
      %2705 = vst.msk [vmem:[#allocation2 + $0x30] sm:$0xf] %vm2692, %v2633
      %2706 = vst.msk [vmem:[#allocation2 + $0x34] sm:$0xf] %vm2692, %v2635
      %2707 = vst.msk [vmem:[#allocation2 + $0x38] sm:$0xf] %vm2692, %v2637
      %2708 = vst.msk [vmem:[#allocation2 + $0x3c] sm:$0xf] %vm2692, %v2639
      %2709 = vst.msk [vmem:[#allocation2 + $0x40] sm:$0xf] %vm2692, %v2641
      %2710 = vst.msk [vmem:[#allocation2 + $0x44] sm:$0xf] %vm2692, %v2643
      %2711 = vst.msk [vmem:[#allocation2 + $0x48] sm:$0xf] %vm2692, %v2645
      %2712 = vst.msk [vmem:[#allocation2 + $0x4c] sm:$0xf] %vm2692, %v2647
      %2713 = vst.msk [vmem:[#allocation2 + $0x50] sm:$0xf] %vm2692, %v2649
      %2714 = vst.msk [vmem:[#allocation2 + $0x54] sm:$0xf] %vm2692, %v2651
      %2715 = vst.msk [vmem:[#allocation2 + $0x58] sm:$0xf] %vm2692, %v2653
      %2716 = vst.msk [vmem:[#allocation2 + $0x5c] sm:$0xf] %vm2692, %v2655
      %2717 = vst.msk [vmem:[#allocation2 + $0x60] sm:$0xf] %vm2692, %v2657
      %2718 = vst.msk [vmem:[#allocation2 + $0x64] sm:$0xf] %vm2692, %v2659
      %2719 = vst.msk [vmem:[#allocation2 + $0x68] sm:$0xf] %vm2692, %v2661
      %vm2720 = vcmask 257248
      %vm2721 = vmand %vm2720, %vm352
      %v2722 = vld [vmem:[#allocation2 + $0x6c] sm:$0xf]
      %v2723 = vsel %vm2721, %v2663, %v2722
      %2724 = vst [vmem:[#allocation2 + $0x6c] sm:$0xf] %v2723
      %v2725 = vld [vmem:[%s214] sm:$0xf]
      %v2726 = vld [vmem:[%s214 + $0x4] sm:$0xf]
      %v2727 = vld [vmem:[%s214 + $0x8] sm:$0xf]
      %v2728 = vld [vmem:[%s214 + $0xc] sm:$0xf]
      %v2729 = vld [vmem:[%s214 + $0x10] sm:$0x1]
      %v2731 = vshll.u32 %v2725, 16
      %v2733 = vrot.slane %v2731, 5
      %v2734 = vshrl.u32 %v2725, 16
      %v2736 = vrot.slane %v2734, 4
      %v2737 = vor.u32 %v2736, %v2733
      %v2738 = vrot.slane %v2737, 4
      %v2740 = vshll.u32 %v2726, 16
      %v2742 = vrot.slane %v2740, 5
      %v2743 = vsel %vm354, %v2738, %v2742
      %v2744 = vshrl.u32 %v2726, 16
      %v2746 = vrot.slane %v2744, 4
      %v2747 = vor.u32 %v2746, %v2742
      %v2748 = vrot.slane %v2747, 4
      %v2750 = vshll.u32 %v2727, 16
      %v2752 = vrot.slane %v2750, 5
      %v2753 = vsel %vm354, %v2748, %v2752
      %v2754 = vshrl.u32 %v2727, 16
      %v2756 = vrot.slane %v2754, 4
      %v2757 = vor.u32 %v2756, %v2752
      %v2758 = vrot.slane %v2757, 4
      %v2760 = vshll.u32 %v2728, 16
      %v2762 = vrot.slane %v2760, 5
      %v2763 = vsel %vm354, %v2758, %v2762
      %v2764 = vshrl.u32 %v2728, 16
      %v2766 = vrot.slane %v2764, 4
      %v2767 = vor.u32 %v2766, %v2762
      %v2768 = vrot.slane %v2767, 4
      %v2770 = vshll.u32 %v2729, 16
      %v2772 = vrot.slane %v2770, 5
      %v2773 = vsel %vm354, %v2768, %v2772
      %2774 = vrot.lane.b32.xlu0 %v2733, 28
      %v2775 = vpop.permute.xlu0 %2774
      %2776 = vrot.lane.b32.xlu0 %v2743, 28
      %v2777 = vpop.permute.xlu0 %2776
      %2778 = vrot.lane.b32.xlu0 %v2753, 28
      %v2779 = vpop.permute.xlu0 %2778
      %2780 = vrot.lane.b32.xlu0 %v2763, 28
      %v2781 = vpop.permute.xlu0 %2780
      %2782 = vrot.lane.b32.xlu0 %v2773, 28
      %v2783 = vpop.permute.xlu0 %2782
      %vm2789 = vcmask 257251
      %vm2790 = vmand %vm2789, %vm816
      %v2791 = vld [vmem:[#allocation2 + $0x6c] sm:$0x8]
      %v2792 = vsel %vm2790, %v2775, %v2791
      %2793 = vst [vmem:[#allocation2 + $0x6c] sm:$0x8] %v2792
      %2794 = vst.msk [vmem:[#allocation2 + $0x70] sm:$0xf] %vm2692, %v2777
      %2795 = vst.msk [vmem:[#allocation2 + $0x74] sm:$0xf] %vm2692, %v2779
      %2796 = vst.msk [vmem:[#allocation2 + $0x78] sm:$0xf] %vm2692, %v2781
      %2797 = vst.msk [vmem:[#allocation2 + $0x7c] sm:$0xf] %vm2692, %v2783
      %v2798 = vld [vmem:[%s208 + $0x10] sm:$0xe]
      %v2799 = vld [vmem:[%s208 + $0x14] sm:$0xf]
      %v2800 = vld [vmem:[%s208 + $0x18] sm:$0xf]
      %v2801 = vld [vmem:[%s208 + $0x1c] sm:$0xf]
      %v2802 = vld [vmem:[%s208 + $0x20] sm:$0xf]
      %v2803 = vld [vmem:[%s208 + $0x24] sm:$0xf]
      %v2804 = vld [vmem:[%s208 + $0x28] sm:$0xf]
      %v2805 = vld [vmem:[%s208 + $0x2c] sm:$0xf]
      %v2806 = vld [vmem:[%s208 + $0x30] sm:$0xf]
      %v2807 = vld [vmem:[%s208 + $0x34] sm:$0xf]
      %v2808 = vld [vmem:[%s208 + $0x38] sm:$0xf]
      %v2809 = vld [vmem:[%s208 + $0x3c] sm:$0xf]
      %v2810 = vld [vmem:[%s208 + $0x40] sm:$0xf]
      %v2811 = vld [vmem:[%s208 + $0x44] sm:$0xf]
      %v2812 = vld [vmem:[%s208 + $0x48] sm:$0xf]
      %v2813 = vld [vmem:[%s208 + $0x4c] sm:$0xf]
      %v2814 = vld [vmem:[%s208 + $0x50] sm:$0xf]
      %v2815 = vld [vmem:[%s208 + $0x54] sm:$0xf]
      %v2816 = vld [vmem:[%s208 + $0x58] sm:$0xf]
      %v2817 = vld [vmem:[%s208 + $0x5c] sm:$0xf]
      %v2818 = vld [vmem:[%s208 + $0x60] sm:$0xf]
      %v2819 = vld [vmem:[%s208 + $0x64] sm:$0xf]
      %v2820 = vld [vmem:[%s208 + $0x68] sm:$0xf]
      %v2821 = vld [vmem:[%s208 + $0x6c] sm:$0xf]
      %v2822 = vld [vmem:[%s208 + $0x70] sm:$0xf]
      %v2823 = vld [vmem:[%s208 + $0x74] sm:$0xf]
      %v2824 = vld [vmem:[%s208 + $0x78] sm:$0xf]
      %v2825 = vld [vmem:[%s208 + $0x7c] sm:$0xf]
      %v2854 = vrot.slane %v2798, 5
      %v2855 = vrot.slane %v2854, 4
      %v2856 = vrot.slane %v2799, 5
      %v2857 = vsel %vm887, %v2855, %v2856
      %v2858 = vrot.slane %v2856, 4
      %v2859 = vrot.slane %v2800, 5
      %v2860 = vsel %vm887, %v2858, %v2859
      %v2861 = vrot.slane %v2859, 4
      %v2862 = vrot.slane %v2801, 5
      %v2863 = vsel %vm887, %v2861, %v2862
      %v2864 = vrot.slane %v2862, 4
      %v2865 = vrot.slane %v2802, 5
      %v2866 = vsel %vm887, %v2864, %v2865
      %v2867 = vrot.slane %v2865, 4
      %v2868 = vrot.slane %v2803, 5
      %v2869 = vsel %vm887, %v2867, %v2868
      %v2870 = vrot.slane %v2868, 4
      %v2871 = vrot.slane %v2804, 5
      %v2872 = vsel %vm887, %v2870, %v2871
      %v2873 = vrot.slane %v2871, 4
      %v2874 = vrot.slane %v2805, 5
      %v2875 = vsel %vm887, %v2873, %v2874
      %v2876 = vrot.slane %v2874, 4
      %v2877 = vrot.slane %v2806, 5
      %v2878 = vsel %vm887, %v2876, %v2877
      %v2879 = vrot.slane %v2877, 4
      %v2880 = vrot.slane %v2807, 5
      %v2881 = vsel %vm887, %v2879, %v2880
      %v2882 = vrot.slane %v2880, 4
      %v2883 = vrot.slane %v2808, 5
      %v2884 = vsel %vm887, %v2882, %v2883
      %v2885 = vrot.slane %v2883, 4
      %v2886 = vrot.slane %v2809, 5
      %v2887 = vsel %vm887, %v2885, %v2886
      %v2888 = vrot.slane %v2886, 4
      %v2889 = vrot.slane %v2810, 5
      %v2890 = vsel %vm887, %v2888, %v2889
      %v2891 = vrot.slane %v2889, 4
      %v2892 = vrot.slane %v2811, 5
      %v2893 = vsel %vm887, %v2891, %v2892
      %v2894 = vrot.slane %v2892, 4
      %v2895 = vrot.slane %v2812, 5
      %v2896 = vsel %vm887, %v2894, %v2895
      %v2897 = vrot.slane %v2895, 4
      %v2898 = vrot.slane %v2813, 5
      %v2899 = vsel %vm887, %v2897, %v2898
      %v2900 = vrot.slane %v2898, 4
      %v2901 = vrot.slane %v2814, 5
      %v2902 = vsel %vm887, %v2900, %v2901
      %v2903 = vrot.slane %v2901, 4
      %v2904 = vrot.slane %v2815, 5
      %v2905 = vsel %vm887, %v2903, %v2904
      %v2906 = vrot.slane %v2904, 4
      %v2907 = vrot.slane %v2816, 5
      %v2908 = vsel %vm887, %v2906, %v2907
      %v2909 = vrot.slane %v2907, 4
      %v2910 = vrot.slane %v2817, 5
      %v2911 = vsel %vm887, %v2909, %v2910
      %v2912 = vrot.slane %v2910, 4
      %v2913 = vrot.slane %v2818, 5
      %v2914 = vsel %vm887, %v2912, %v2913
      %v2915 = vrot.slane %v2913, 4
      %v2916 = vrot.slane %v2819, 5
      %v2917 = vsel %vm887, %v2915, %v2916
      %v2918 = vrot.slane %v2916, 4
      %v2919 = vrot.slane %v2820, 5
      %v2920 = vsel %vm887, %v2918, %v2919
      %v2921 = vrot.slane %v2919, 4
      %v2922 = vrot.slane %v2821, 5
      %v2923 = vsel %vm887, %v2921, %v2922
      %v2924 = vrot.slane %v2922, 4
      %v2925 = vrot.slane %v2822, 5
      %v2926 = vsel %vm887, %v2924, %v2925
      %v2927 = vrot.slane %v2925, 4
      %v2928 = vrot.slane %v2823, 5
      %v2929 = vsel %vm887, %v2927, %v2928
      %v2930 = vrot.slane %v2928, 4
      %v2931 = vrot.slane %v2824, 5
      %v2932 = vsel %vm887, %v2930, %v2931
      %v2933 = vrot.slane %v2931, 4
      %v2934 = vrot.slane %v2825, 5
      %v2935 = vsel %vm887, %v2933, %v2934
      %v2936 = vrot.slane %v2934, 4
      %2937 = vrot.lane.b32.xlu0 %v2857, 32
      %v2938 = vpop.permute.xlu0 %2937
      %2939 = vrot.lane.b32.xlu0 %v2860, 32
      %v2940 = vpop.permute.xlu0 %2939
      %2941 = vrot.lane.b32.xlu0 %v2863, 32
      %v2942 = vpop.permute.xlu0 %2941
      %2943 = vrot.lane.b32.xlu0 %v2866, 32
      %v2944 = vpop.permute.xlu0 %2943
      %2945 = vrot.lane.b32.xlu0 %v2869, 32
      %v2946 = vpop.permute.xlu0 %2945
      %2947 = vrot.lane.b32.xlu0 %v2872, 32
      %v2948 = vpop.permute.xlu0 %2947
      %2949 = vrot.lane.b32.xlu0 %v2875, 32
      %v2950 = vpop.permute.xlu0 %2949
      %2951 = vrot.lane.b32.xlu0 %v2878, 32
      %v2952 = vpop.permute.xlu0 %2951
      %2953 = vrot.lane.b32.xlu0 %v2881, 32
      %v2954 = vpop.permute.xlu0 %2953
      %2955 = vrot.lane.b32.xlu0 %v2884, 32
      %v2956 = vpop.permute.xlu0 %2955
      %2957 = vrot.lane.b32.xlu0 %v2887, 32
      %v2958 = vpop.permute.xlu0 %2957
      %2959 = vrot.lane.b32.xlu0 %v2890, 32
      %v2960 = vpop.permute.xlu0 %2959
      %2961 = vrot.lane.b32.xlu0 %v2893, 32
      %v2962 = vpop.permute.xlu0 %2961
      %2963 = vrot.lane.b32.xlu0 %v2896, 32
      %v2964 = vpop.permute.xlu0 %2963
      %2965 = vrot.lane.b32.xlu0 %v2899, 32
      %v2966 = vpop.permute.xlu0 %2965
      %2967 = vrot.lane.b32.xlu0 %v2902, 32
      %v2968 = vpop.permute.xlu0 %2967
      %2969 = vrot.lane.b32.xlu0 %v2905, 32
      %v2970 = vpop.permute.xlu0 %2969
      %2971 = vrot.lane.b32.xlu0 %v2908, 32
      %v2972 = vpop.permute.xlu0 %2971
      %2973 = vrot.lane.b32.xlu0 %v2911, 32
      %v2974 = vpop.permute.xlu0 %2973
      %2975 = vrot.lane.b32.xlu0 %v2914, 32
      %v2976 = vpop.permute.xlu0 %2975
      %2977 = vrot.lane.b32.xlu0 %v2917, 32
      %v2978 = vpop.permute.xlu0 %2977
      %2979 = vrot.lane.b32.xlu0 %v2920, 32
      %v2980 = vpop.permute.xlu0 %2979
      %2981 = vrot.lane.b32.xlu0 %v2923, 32
      %v2982 = vpop.permute.xlu0 %2981
      %2983 = vrot.lane.b32.xlu0 %v2926, 32
      %v2984 = vpop.permute.xlu0 %2983
      %2985 = vrot.lane.b32.xlu0 %v2929, 32
      %v2986 = vpop.permute.xlu0 %2985
      %2987 = vrot.lane.b32.xlu0 %v2932, 32
      %v2988 = vpop.permute.xlu0 %2987
      %2989 = vrot.lane.b32.xlu0 %v2935, 32
      %v2990 = vpop.permute.xlu0 %2989
      %2991 = vrot.lane.b32.xlu0 %v2936, 32
      %v2992 = vpop.permute.xlu0 %2991
      %vm3021 = vcmask 290048
      %3022 = vst.msk [vmem:[#allocation2] sm:$0xf] %vm3021, %v2938
      %3023 = vst.msk [vmem:[#allocation2 + $0x4] sm:$0xf] %vm3021, %v2940
      %3024 = vst.msk [vmem:[#allocation2 + $0x8] sm:$0xf] %vm3021, %v2942
      %3025 = vst.msk [vmem:[#allocation2 + $0xc] sm:$0xf] %vm3021, %v2944
      %3026 = vst.msk [vmem:[#allocation2 + $0x10] sm:$0xf] %vm3021, %v2946
      %3027 = vst.msk [vmem:[#allocation2 + $0x14] sm:$0xf] %vm3021, %v2948
      %3028 = vst.msk [vmem:[#allocation2 + $0x18] sm:$0xf] %vm3021, %v2950
      %3029 = vst.msk [vmem:[#allocation2 + $0x1c] sm:$0xf] %vm3021, %v2952
      %3030 = vst.msk [vmem:[#allocation2 + $0x20] sm:$0xf] %vm3021, %v2954
      %3031 = vst.msk [vmem:[#allocation2 + $0x24] sm:$0xf] %vm3021, %v2956
      %3032 = vst.msk [vmem:[#allocation2 + $0x28] sm:$0xf] %vm3021, %v2958
      %3033 = vst.msk [vmem:[#allocation2 + $0x2c] sm:$0xf] %vm3021, %v2960
      %3034 = vst.msk [vmem:[#allocation2 + $0x30] sm:$0xf] %vm3021, %v2962
      %3035 = vst.msk [vmem:[#allocation2 + $0x34] sm:$0xf] %vm3021, %v2964
      %3036 = vst.msk [vmem:[#allocation2 + $0x38] sm:$0xf] %vm3021, %v2966
      %3037 = vst.msk [vmem:[#allocation2 + $0x3c] sm:$0xf] %vm3021, %v2968
      %3038 = vst.msk [vmem:[#allocation2 + $0x40] sm:$0xf] %vm3021, %v2970
      %3039 = vst.msk [vmem:[#allocation2 + $0x44] sm:$0xf] %vm3021, %v2972
      %3040 = vst.msk [vmem:[#allocation2 + $0x48] sm:$0xf] %vm3021, %v2974
      %3041 = vst.msk [vmem:[#allocation2 + $0x4c] sm:$0xf] %vm3021, %v2976
      %3042 = vst.msk [vmem:[#allocation2 + $0x50] sm:$0xf] %vm3021, %v2978
      %3043 = vst.msk [vmem:[#allocation2 + $0x54] sm:$0xf] %vm3021, %v2980
      %3044 = vst.msk [vmem:[#allocation2 + $0x58] sm:$0xf] %vm3021, %v2982
      %3045 = vst.msk [vmem:[#allocation2 + $0x5c] sm:$0xf] %vm3021, %v2984
      %3046 = vst.msk [vmem:[#allocation2 + $0x60] sm:$0xf] %vm3021, %v2986
      %3047 = vst.msk [vmem:[#allocation2 + $0x64] sm:$0xf] %vm3021, %v2988
      %3048 = vst.msk [vmem:[#allocation2 + $0x68] sm:$0xf] %vm3021, %v2990
      %vm3049 = vcmask 289024
      %3050 = vst.msk [vmem:[#allocation2 + $0x6c] sm:$0x7] %vm3049, %v2992
      %v3051 = vld [vmem:[%s214] sm:$0xf]
      %v3052 = vld [vmem:[%s214 + $0x4] sm:$0xf]
      %v3053 = vld [vmem:[%s214 + $0x8] sm:$0xf]
      %v3054 = vld [vmem:[%s214 + $0xc] sm:$0xf]
      %v3055 = vld [vmem:[%s214 + $0x10] sm:$0x1]
      %v3061 = vrot.slane %v3051, 5
      %v3062 = vrot.slane %v3061, 4
      %v3063 = vrot.slane %v3052, 5
      %v3064 = vsel %vm887, %v3062, %v3063
      %v3065 = vrot.slane %v3063, 4
      %v3066 = vrot.slane %v3053, 5
      %v3067 = vsel %vm887, %v3065, %v3066
      %v3068 = vrot.slane %v3066, 4
      %v3069 = vrot.slane %v3054, 5
      %v3070 = vsel %vm887, %v3068, %v3069
      %v3071 = vrot.slane %v3069, 4
      %v3072 = vrot.slane %v3055, 5
      %v3073 = vsel %vm887, %v3071, %v3072
      %3074 = vrot.lane.b32.xlu0 %v3061, 32
      %v3075 = vpop.permute.xlu0 %3074
      %3076 = vrot.lane.b32.xlu0 %v3064, 32
      %v3077 = vpop.permute.xlu0 %3076
      %3078 = vrot.lane.b32.xlu0 %v3067, 32
      %v3079 = vpop.permute.xlu0 %3078
      %3080 = vrot.lane.b32.xlu0 %v3070, 32
      %v3081 = vpop.permute.xlu0 %3080
      %3082 = vrot.lane.b32.xlu0 %v3073, 32
      %v3083 = vpop.permute.xlu0 %3082
      %vm3089 = vcmask 290051
      %3090 = vst.msk [vmem:[#allocation2 + $0x6c] sm:$0x8] %vm3089, %v3075
      %3091 = vst.msk [vmem:[#allocation2 + $0x70] sm:$0xf] %vm3021, %v3077
      %3092 = vst.msk [vmem:[#allocation2 + $0x74] sm:$0xf] %vm3021, %v3079
      %3093 = vst.msk [vmem:[#allocation2 + $0x78] sm:$0xf] %vm3021, %v3081
      %3094 = vst.msk [vmem:[#allocation2 + $0x7c] sm:$0xf] %vm3021, %v3083
      %v3095 = vld [vmem:[#allocation2] sm:$0xf]
      %v3096 = vld [vmem:[#allocation2 + $0x4] sm:$0xf]
      %v3097 = vld [vmem:[#allocation2 + $0x8] sm:$0xf]
      %v3098 = vld [vmem:[#allocation2 + $0xc] sm:$0xf]
      %v3099 = vld [vmem:[#allocation2 + $0x10] sm:$0xf]
      %v3100 = vld [vmem:[#allocation2 + $0x14] sm:$0xf]
      %v3101 = vld [vmem:[#allocation2 + $0x18] sm:$0xf]
      %v3102 = vld [vmem:[#allocation2 + $0x1c] sm:$0xf]
      %v3103 = vld [vmem:[#allocation2 + $0x20] sm:$0xf]
      %v3104 = vld [vmem:[#allocation2 + $0x24] sm:$0xf]
      %v3105 = vld [vmem:[#allocation2 + $0x28] sm:$0xf]
      %v3106 = vld [vmem:[#allocation2 + $0x2c] sm:$0xf]
      %v3107 = vld [vmem:[#allocation2 + $0x30] sm:$0xf]
      %v3108 = vld [vmem:[#allocation2 + $0x34] sm:$0xf]
      %v3109 = vld [vmem:[#allocation2 + $0x38] sm:$0xf]
      %v3110 = vld [vmem:[#allocation2 + $0x3c] sm:$0xf]
      %v3111 = vld [vmem:[#allocation2 + $0x40] sm:$0xf]
      %v3112 = vld [vmem:[#allocation2 + $0x44] sm:$0xf]
      %v3113 = vld [vmem:[#allocation2 + $0x48] sm:$0xf]
      %v3114 = vld [vmem:[#allocation2 + $0x4c] sm:$0xf]
      %v3115 = vld [vmem:[#allocation2 + $0x50] sm:$0xf]
      %v3116 = vld [vmem:[#allocation2 + $0x54] sm:$0xf]
      %v3117 = vld [vmem:[#allocation2 + $0x58] sm:$0xf]
      %v3118 = vld [vmem:[#allocation2 + $0x5c] sm:$0xf]
      %v3119 = vld [vmem:[#allocation2 + $0x60] sm:$0xf]
      %v3120 = vld [vmem:[#allocation2 + $0x64] sm:$0xf]
      %v3121 = vld [vmem:[#allocation2 + $0x68] sm:$0xf]
      %v3122 = vld [vmem:[#allocation2 + $0x6c] sm:$0xf]
      %v3123 = vld [vmem:[#allocation2 + $0x70] sm:$0xf]
      %v3124 = vld [vmem:[#allocation2 + $0x74] sm:$0xf]
      %v3125 = vld [vmem:[#allocation2 + $0x78] sm:$0xf]
      %v3126 = vld [vmem:[#allocation2 + $0x7c] sm:$0xf]
      %v3127 = vld [vmem:[%s2] sm:$0xf]
      %v3128 = vld [vmem:[%s2 + $0x4] sm:$0xf]
      %v3129 = vld [vmem:[%s2 + $0x8] sm:$0xf]
      %v3130 = vld [vmem:[%s2 + $0xc] sm:$0xf]
      %v3131 = vld [vmem:[%s2 + $0x10] sm:$0xf]
      %v3132 = vld [vmem:[%s2 + $0x14] sm:$0xf]
      %v3133 = vld [vmem:[%s2 + $0x18] sm:$0xf]
      %v3134 = vld [vmem:[%s2 + $0x1c] sm:$0xf]
      %v3135 = vld [vmem:[%s2 + $0x20] sm:$0xf]
      %v3136 = vld [vmem:[%s2 + $0x24] sm:$0xf]
      %v3137 = vld [vmem:[%s2 + $0x28] sm:$0xf]
      %v3138 = vld [vmem:[%s2 + $0x2c] sm:$0xf]
      %v3139 = vld [vmem:[%s2 + $0x30] sm:$0xf]
      %v3140 = vld [vmem:[%s2 + $0x34] sm:$0xf]
      %v3141 = vld [vmem:[%s2 + $0x38] sm:$0xf]
      %v3142 = vld [vmem:[%s2 + $0x3c] sm:$0xf]
      %v3143 = vld [vmem:[%s3] sm:$0x1]
      %v3145 = vlaneseq
      %v3146 = vshrl.u32 %v3145, 7
      %v3147 = vsub.s32 0, %v3146
      %v3148 = vrot.slane %v3143, %v3147
      %v3182 = vunpack.c.l.b16 %v3095
      %v3183 = vunpack.c.l.b16 %v3096
      %v3184 = vunpack.c.l.b16 %v3097
      %v3185 = vunpack.c.l.b16 %v3098
      %v3186 = vunpack.c.l.b16 %v3099
      %v3187 = vunpack.c.l.b16 %v3100
      %v3188 = vunpack.c.l.b16 %v3101
      %v3189 = vunpack.c.l.b16 %v3102
      %v3190 = vunpack.c.l.b16 %v3103
      %v3191 = vunpack.c.l.b16 %v3104
      %v3192 = vunpack.c.l.b16 %v3105
      %v3193 = vunpack.c.l.b16 %v3106
      %v3194 = vunpack.c.l.b16 %v3107
      %v3195 = vunpack.c.l.b16 %v3108
      %v3196 = vunpack.c.l.b16 %v3109
      %v3197 = vunpack.c.l.b16 %v3110
      %v3198 = vunpack.c.l.b16 %v3111
      %v3199 = vunpack.c.l.b16 %v3112
      %v3200 = vunpack.c.l.b16 %v3113
      %v3201 = vunpack.c.l.b16 %v3114
      %v3202 = vunpack.c.l.b16 %v3115
      %v3203 = vunpack.c.l.b16 %v3116
      %v3204 = vunpack.c.l.b16 %v3117
      %v3205 = vunpack.c.l.b16 %v3118
      %v3206 = vunpack.c.l.b16 %v3119
      %v3207 = vunpack.c.l.b16 %v3120
      %v3208 = vunpack.c.l.b16 %v3121
      %v3209 = vunpack.c.l.b16 %v3122
      %v3210 = vunpack.c.l.b16 %v3123
      %v3211 = vunpack.c.l.b16 %v3124
      %v3212 = vunpack.c.l.b16 %v3125
      %v3213 = vunpack.c.l.b16 %v3126
      %v3214 = vpack.c.b16 %v3183, %v3182
      %v3215 = vpack.c.b16 %v3185, %v3184
      %v3216 = vpack.c.b16 %v3187, %v3186
      %v3217 = vpack.c.b16 %v3189, %v3188
      %v3218 = vpack.c.b16 %v3191, %v3190
      %v3219 = vpack.c.b16 %v3193, %v3192
      %v3220 = vpack.c.b16 %v3195, %v3194
      %v3221 = vpack.c.b16 %v3197, %v3196
      %v3222 = vpack.c.b16 %v3199, %v3198
      %v3223 = vpack.c.b16 %v3201, %v3200
      %v3224 = vpack.c.b16 %v3203, %v3202
      %v3225 = vpack.c.b16 %v3205, %v3204
      %v3226 = vpack.c.b16 %v3207, %v3206
      %v3227 = vpack.c.b16 %v3209, %v3208
      %v3228 = vpack.c.b16 %v3211, %v3210
      %v3229 = vpack.c.b16 %v3213, %v3212
      %v3262 = vunpack.c.l.b16 %v3127
      %v3263 = vunpack.c.l.b16 %v3128
      %v3264 = vunpack.c.l.b16 %v3129
      %v3265 = vunpack.c.l.b16 %v3130
      %v3266 = vunpack.c.l.b16 %v3131
      %v3267 = vunpack.c.l.b16 %v3132
      %v3268 = vunpack.c.l.b16 %v3133
      %v3269 = vunpack.c.l.b16 %v3134
      %v3270 = vunpack.c.l.b16 %v3135
      %v3271 = vunpack.c.l.b16 %v3136
      %v3272 = vunpack.c.l.b16 %v3137
      %v3273 = vunpack.c.l.b16 %v3138
      %v3274 = vunpack.c.l.b16 %v3139
      %v3275 = vunpack.c.l.b16 %v3140
      %v3276 = vunpack.c.l.b16 %v3141
      %v3277 = vunpack.c.l.b16 %v3142
      %v3278 = vpack.c.b16 %v3263, %v3262
      %v3279 = vpack.c.b16 %v3265, %v3264
      %v3280 = vpack.c.b16 %v3267, %v3266
      %v3281 = vpack.c.b16 %v3269, %v3268
      %v3282 = vpack.c.b16 %v3271, %v3270
      %v3283 = vpack.c.b16 %v3273, %v3272
      %v3284 = vpack.c.b16 %v3275, %v3274
      %v3285 = vpack.c.b16 %v3277, %v3276
      %3294 = vmatprep.subr.bf16.mxu0 0
      %3295 = vmatpush1.bf16.msra.mxu0 %v3285
      %3296 = vmatprep.subr.bf16.mxu0 0
      %3297 = vmatpush1.bf16.msra.mxu0 %v3284
      %3298 = vmatprep.subr.bf16.mxu0 0
      %3299 = vmatpush1.bf16.msra.mxu0 %v3283
      %3300 = vmatprep.subr.bf16.mxu0 0
      %3301 = vmatpush1.bf16.msra.mxu0 %v3282
      %3302 = vmatprep.subr.bf16.mxu0 0
      %3303 = vmatpush1.bf16.msra.mxu0 %v3281
      %3304 = vmatprep.subr.bf16.mxu0 0
      %3305 = vmatpush1.bf16.msra.mxu0 %v3280
      %3306 = vmatprep.subr.bf16.mxu0 0
      %3307 = vmatpush1.bf16.msra.mxu0 %v3279
      %3308 = vmatprep.subr.bf16.mxu0 0
      %3309 = vmatpush1.bf16.msra.mxu0 %v3278
      %3310 = vmatprep.subr.bf16.mxu0 0
      %3311 = vmatpush2.bf16.msra.mxu0 0
      %3312 = vmatprep.subr.bf16.mxu0 0
      %3313 = vmatpush2.bf16.msra.mxu0 0
      %3314 = vmatprep.subr.bf16.mxu0 0
      %3315 = vmatpush2.bf16.msra.mxu0 0
      %3316 = vmatprep.subr.bf16.mxu0 0
      %3317 = vmatpush2.bf16.msra.mxu0 0
      %3318 = vmatprep.subr.bf16.mxu0 0
      %3319 = vmatpush2.bf16.msra.mxu0 0
      %3320 = vmatprep.subr.bf16.mxu0 0
      %3321 = vmatpush2.bf16.msra.mxu0 0
      %3322 = vmatprep.subr.bf16.mxu0 0
      %3323 = vmatpush2.bf16.msra.mxu0 0
      %3324 = vmatprep.subr.bf16.mxu0 0
      %3325 = vmatpush2.bf16.msra.mxu0 0
      %3326 = vmatprep.mubr.bf16.mxu0 0
      %3327 = vmatmul.mubr.bf16.gmra.mxu0 %v3214
      %v3328 = vpop.f32.mrf.mxu0
      %v3329 = vadd.f32 %v3148, %v3328
      %v3330 = vpop.f32.mrf.mxu0
      %v3331 = vpop.f32.mrf.mxu0
      %v3332 = vadd.f32 %v3148, %v3331
      %v3333 = vpop.f32.mrf.mxu0
      %3334 = vmatprep.mubr.bf16.mxu0 0
      %3335 = vmatmul.mubr.bf16.gmra.mxu0 %v3215
      %v3336 = vpop.f32.mrf.mxu0
      %v3337 = vadd.f32 %v3148, %v3336
      %v3338 = vpop.f32.mrf.mxu0
      %v3339 = vpop.f32.mrf.mxu0
      %v3340 = vadd.f32 %v3148, %v3339
      %v3341 = vpop.f32.mrf.mxu0
      %3342 = vmatprep.mubr.bf16.mxu0 0
      %3343 = vmatmul.mubr.bf16.gmra.mxu0 %v3216
      %v3344 = vpop.f32.mrf.mxu0
      %v3345 = vadd.f32 %v3148, %v3344
      %v3346 = vpop.f32.mrf.mxu0
      %v3347 = vpop.f32.mrf.mxu0
      %v3348 = vadd.f32 %v3148, %v3347
      %v3349 = vpop.f32.mrf.mxu0
      %3350 = vmatprep.mubr.bf16.mxu0 0
      %3351 = vmatmul.mubr.bf16.gmra.mxu0 %v3217
      %v3352 = vpop.f32.mrf.mxu0
      %v3353 = vadd.f32 %v3148, %v3352
      %v3354 = vpop.f32.mrf.mxu0
      %v3355 = vpop.f32.mrf.mxu0
      %v3356 = vadd.f32 %v3148, %v3355
      %v3357 = vpop.f32.mrf.mxu0
      %3358 = vmatprep.mubr.bf16.mxu0 0
      %3359 = vmatmul.mubr.bf16.gmra.mxu0 %v3218
      %v3360 = vpop.f32.mrf.mxu0
      %v3361 = vadd.f32 %v3148, %v3360
      %v3362 = vpop.f32.mrf.mxu0
      %v3363 = vpop.f32.mrf.mxu0
      %v3364 = vadd.f32 %v3148, %v3363
      %v3365 = vpop.f32.mrf.mxu0
      %3366 = vmatprep.mubr.bf16.mxu0 0
      %3367 = vmatmul.mubr.bf16.gmra.mxu0 %v3219
      %v3368 = vpop.f32.mrf.mxu0
      %v3369 = vadd.f32 %v3148, %v3368
      %v3370 = vpop.f32.mrf.mxu0
      %v3371 = vpop.f32.mrf.mxu0
      %v3372 = vadd.f32 %v3148, %v3371
      %v3373 = vpop.f32.mrf.mxu0
      %3374 = vmatprep.mubr.bf16.mxu0 0
      %3375 = vmatmul.mubr.bf16.gmra.mxu0 %v3220
      %v3376 = vpop.f32.mrf.mxu0
      %v3377 = vadd.f32 %v3148, %v3376
      %v3378 = vpop.f32.mrf.mxu0
      %v3379 = vpop.f32.mrf.mxu0
      %v3380 = vadd.f32 %v3148, %v3379
      %v3381 = vpop.f32.mrf.mxu0
      %3382 = vmatprep.mubr.bf16.mxu0 0
      %3383 = vmatmul.mubr.bf16.gmra.mxu0 %v3221
      %v3384 = vpop.f32.mrf.mxu0
      %v3385 = vadd.f32 %v3148, %v3384
      %v3386 = vpop.f32.mrf.mxu0
      %v3387 = vpop.f32.mrf.mxu0
      %v3388 = vadd.f32 %v3148, %v3387
      %v3389 = vpop.f32.mrf.mxu0
      %3390 = vmatprep.mubr.bf16.mxu0 0
      %3391 = vmatmul.mubr.bf16.gmra.mxu0 %v3222
      %v3392 = vpop.f32.mrf.mxu0
      %v3393 = vadd.f32 %v3148, %v3392
      %v3394 = vpop.f32.mrf.mxu0
      %v3395 = vpop.f32.mrf.mxu0
      %v3396 = vadd.f32 %v3148, %v3395
      %v3397 = vpop.f32.mrf.mxu0
      %3398 = vmatprep.mubr.bf16.mxu0 0
      %3399 = vmatmul.mubr.bf16.gmra.mxu0 %v3223
      %v3400 = vpop.f32.mrf.mxu0
      %v3401 = vadd.f32 %v3148, %v3400
      %v3402 = vpop.f32.mrf.mxu0
      %v3403 = vpop.f32.mrf.mxu0
      %v3404 = vadd.f32 %v3148, %v3403
      %v3405 = vpop.f32.mrf.mxu0
      %3406 = vmatprep.mubr.bf16.mxu0 0
      %3407 = vmatmul.mubr.bf16.gmra.mxu0 %v3224
      %v3408 = vpop.f32.mrf.mxu0
      %v3409 = vadd.f32 %v3148, %v3408
      %v3410 = vpop.f32.mrf.mxu0
      %v3411 = vpop.f32.mrf.mxu0
      %v3412 = vadd.f32 %v3148, %v3411
      %v3413 = vpop.f32.mrf.mxu0
      %3414 = vmatprep.mubr.bf16.mxu0 0
      %3415 = vmatmul.mubr.bf16.gmra.mxu0 %v3225
      %v3416 = vpop.f32.mrf.mxu0
      %v3417 = vadd.f32 %v3148, %v3416
      %v3418 = vpop.f32.mrf.mxu0
      %v3419 = vpop.f32.mrf.mxu0
      %v3420 = vadd.f32 %v3148, %v3419
      %v3421 = vpop.f32.mrf.mxu0
      %3422 = vmatprep.mubr.bf16.mxu0 0
      %3423 = vmatmul.mubr.bf16.gmra.mxu0 %v3226
      %v3424 = vpop.f32.mrf.mxu0
      %v3425 = vadd.f32 %v3148, %v3424
      %v3426 = vpop.f32.mrf.mxu0
      %v3427 = vpop.f32.mrf.mxu0
      %v3428 = vadd.f32 %v3148, %v3427
      %v3429 = vpop.f32.mrf.mxu0
      %3430 = vmatprep.mubr.bf16.mxu0 0
      %3431 = vmatmul.mubr.bf16.gmra.mxu0 %v3227
      %v3432 = vpop.f32.mrf.mxu0
      %v3433 = vadd.f32 %v3148, %v3432
      %v3434 = vpop.f32.mrf.mxu0
      %v3435 = vpop.f32.mrf.mxu0
      %v3436 = vadd.f32 %v3148, %v3435
      %v3437 = vpop.f32.mrf.mxu0
      %3438 = vmatprep.mubr.bf16.mxu0 0
      %3439 = vmatmul.mubr.bf16.gmra.mxu0 %v3228
      %v3440 = vpop.f32.mrf.mxu0
      %v3441 = vadd.f32 %v3148, %v3440
      %v3442 = vpop.f32.mrf.mxu0
      %v3443 = vpop.f32.mrf.mxu0
      %v3444 = vadd.f32 %v3148, %v3443
      %v3445 = vpop.f32.mrf.mxu0
      %3446 = vmatprep.mubr.bf16.mxu0 0
      %3447 = vmatmul.mubr.bf16.gmra.mxu0 %v3229
      %v3448 = vpop.f32.mrf.mxu0
      %v3449 = vadd.f32 %v3148, %v3448
      %v3450 = vpop.f32.mrf.mxu0
      %v3451 = vpop.f32.mrf.mxu0
      %v3452 = vadd.f32 %v3148, %v3451
      %v3453 = vpop.f32.mrf.mxu0
      %3454 = vdwg.mxu0
      %3455 = vst [vmem:[%s219] sm:$0xff] %v3329
      %3456 = vst [vmem:[%s219 + $0x8] sm:$0xff] %v3332
      %3457 = vst [vmem:[%s219 + $0x10] sm:$0xff] %v3337
      %3458 = vst [vmem:[%s219 + $0x18] sm:$0xff] %v3340
      %3459 = vst [vmem:[%s219 + $0x20] sm:$0xff] %v3345
      %3460 = vst [vmem:[%s219 + $0x28] sm:$0xff] %v3348
      %3461 = vst [vmem:[%s219 + $0x30] sm:$0xff] %v3353
      %3462 = vst [vmem:[%s219 + $0x38] sm:$0xff] %v3356
      %3463 = vst [vmem:[%s219 + $0x40] sm:$0xff] %v3361
      %3464 = vst [vmem:[%s219 + $0x48] sm:$0xff] %v3364
      %3465 = vst [vmem:[%s219 + $0x50] sm:$0xff] %v3369
      %3466 = vst [vmem:[%s219 + $0x58] sm:$0xff] %v3372
      %3467 = vst [vmem:[%s219 + $0x60] sm:$0xff] %v3377
      %3468 = vst [vmem:[%s219 + $0x68] sm:$0xff] %v3380
      %3469 = vst [vmem:[%s219 + $0x70] sm:$0xff] %v3385
      %3470 = vst [vmem:[%s219 + $0x78] sm:$0xff] %v3388
      %3471 = vst [vmem:[%s219 + $0x80] sm:$0xff] %v3393
      %3472 = vst [vmem:[%s219 + $0x88] sm:$0xff] %v3396
      %3473 = vst [vmem:[%s219 + $0x90] sm:$0xff] %v3401
      %3474 = vst [vmem:[%s219 + $0x98] sm:$0xff] %v3404
      %3475 = vst [vmem:[%s219 + $0xa0] sm:$0xff] %v3409
      %3476 = vst [vmem:[%s219 + $0xa8] sm:$0xff] %v3412
      %3477 = vst [vmem:[%s219 + $0xb0] sm:$0xff] %v3417
      %3478 = vst [vmem:[%s219 + $0xb8] sm:$0xff] %v3420
      %3479 = vst [vmem:[%s219 + $0xc0] sm:$0xff] %v3425
      %3480 = vst [vmem:[%s219 + $0xc8] sm:$0xff] %v3428
      %3481 = vst [vmem:[%s219 + $0xd0] sm:$0xff] %v3433
      %3482 = vst [vmem:[%s219 + $0xd8] sm:$0xff] %v3436
      %3483 = vst [vmem:[%s219 + $0xe0] sm:$0xff] %v3441
      %3484 = vst [vmem:[%s219 + $0xe8] sm:$0xff] %v3444
      %3485 = vst [vmem:[%s219 + $0xf0] sm:$0xff] %v3449
      %3486 = vst [vmem:[%s219 + $0xf8] sm:$0xff] %v3452
      %s3487 = smul.u32 32, %s15
      %p3488 = scmp.lt.s32.totalorder %s3487, 63
      %s3489 = scalar_select %p3488, %s3487, 63
      %s3490 = smul.addr %s3489, 8
      %s3491 = scalar_lea.vmem %s4, %s3490
      // Predicated region
      $region37: #{conv_lora_forward.1} parent=35 // pred_check
        %p3492 = pneg %p127
      $region38: #{conv_lora_forward.1} parent=35 // pred_check_branch
        %3494 = sbr.rel (%p3492) target = $region40
      $region39: #{conv_lora_forward.1} parent=35 // pred_region
        %s3495 = smul.u32 32, %s15
      $region40: #{conv_lora_forward.1} parent=35 // pred_fallthru
        _
    $region36: #{conv_lora_forward.1} parent=5 // pred_fallthru
      _
    %p3496 = scmp.le.s32.totalorder 2, %s10
    // Predicated region
    $region41: #{conv_lora_forward.1} parent=5 // pred_check
      %p3497 = pneg %p3496
    $region42: #{conv_lora_forward.1} parent=5 // pred_check_branch
      %3499 = sbr.rel (%p3497) target = $region44
    $region43: #{conv_lora_forward.1} parent=5 // pred_region
      %s3500 = ssub.s32 %s10, 2
      // Predicated region
      $region45: #{conv_lora_forward.1} parent=43 // pred_check
        %p3501 = pneg %p133
      $region46: #{conv_lora_forward.1} parent=43 // pred_check_branch
        %3503 = sbr.rel (%p3501) target = $region48
      $region47: #{conv_lora_forward.1} parent=43 // pred_region
        %s3504 = smul.u32 32, %s16
        %p3505 = scmp.lt.s32.totalorder %s3504, 63
        %s3506 = scalar_select %p3505, %s3504, 63
        %s3507 = smul.addr %s3506, 8
        %s3508 = scalar_lea.vmem %s4, %s3507
      $region48: #{conv_lora_forward.1} parent=43 // pred_fallthru
        _
    $region44: #{conv_lora_forward.1} parent=5 // pred_fallthru
      _
  $region6: #{conv_lora_forward.1} parent=0 // loop_footer
    %s14 = sadd.s32 1, %s10
  $region7: #{conv_lora_forward.1} parent=0 // loop_footer_branch
    %9 = sbr.rel target = $region3
  $region8: #{conv_lora_forward.1} parent=0 // loop_exit
    _

</llo_original>
